<compile_context>
chip_gen: v5e
topology: v5e:2x2
jax: 0.10.0
libtpu: 0.0.40
codegen_flags: <defaults>
</compile_context>

<pallas_src>
import jax
import jax.numpy as jnp
from jax.experimental import pallas as pl
from jax.experimental.pallas import tpu as pltpu

EPS = 1e-5


def bn_add_kernel(x_ref, y_ref, w_ref, b_ref, o_ref):
    # x_ref, y_ref, o_ref: (N, TC, HW); w_ref, b_ref: (1, TC, 1)
    x = x_ref[...].astype(jnp.float32)
    n, _, hw = x.shape
    inv_r = 1.0 / (n * hw)  # true N*H*W divisor (training-mode biased stats)

    # single pass over x: sum and sum-of-squares, reduced along the lane (H*W) axis
    s1 = jnp.sum(x, axis=-1, keepdims=True)        # (N, TC, 1)
    s2 = jnp.sum(x * x, axis=-1, keepdims=True)    # (N, TC, 1)
    if n > 1:  # static: reduce over batch if present
        s1 = jnp.sum(s1, axis=0, keepdims=True)    # (1, TC, 1)
        s2 = jnp.sum(s2, axis=0, keepdims=True)

    mean = s1 * inv_r
    var = s2 * inv_r - mean * mean                 # biased variance
    inv = jax.lax.rsqrt(var + EPS)

    # fold BN into a single scale/shift: bn = x*scale + shift
    scale = inv * w_ref[...]                       # (1, TC, 1)
    shift = b_ref[...] - mean * scale              # (1, TC, 1)

    o_ref[...] = (y_ref[...].astype(jnp.float32) + x * scale + shift).astype(o_ref.dtype)


def batchnorm_add(x319, x318, weight, bias, *, tile_c=1024):
    """x319: BN input, x318: residual. Both NCHW float32."""
    n, c, h, w = x319.shape
    hw = h * w
    if c % tile_c != 0:
        tile_c = c  # fall back to a single full-channel block
    assert c % tile_c == 0

    # Free reshapes only (NCHW is contiguous as (N, C, H*W)); no transposes.
    x3d = x319.reshape(n, c, hw)
    y3d = x318.reshape(n, c, hw)
    w3d = weight.astype(jnp.float32).reshape(1, c, 1)
    b3d = bias.astype(jnp.float32).reshape(1, c, 1)

    grid = (c // tile_c,)
    out3d = pl.pallas_call(
        bn_add_kernel,
        out_shape=jax.ShapeDtypeStruct((n, c, hw), x319.dtype),
        grid_spec=pltpu.PrefetchScalarGridSpec(
            num_scalar_prefetch=0,
            grid=grid,
            in_specs=[
                pl.BlockSpec((n, tile_c, hw), lambda j: (0, j, 0)),
                pl.BlockSpec((n, tile_c, hw), lambda j: (0, j, 0)),
                pl.BlockSpec((1, tile_c, 1), lambda j: (0, j, 0)),
                pl.BlockSpec((1, tile_c, 1), lambda j: (0, j, 0)),
            ],
            out_specs=pl.BlockSpec((n, tile_c, hw), lambda j: (0, j, 0)),
        ),
        compiler_params=pltpu.CompilerParams(
            dimension_semantics=("parallel",),
        ),
    )(x3d, y3d, w3d, b3d)

    return out3d.reshape(n, c, h, w)


def reference(x319, x318, weight, bias):
    mean = jnp.mean(x319, axis=(0, 2, 3), keepdims=True)
    var = jnp.var(x319, axis=(0, 2, 3), keepdims=True)
    bn = (x319 - mean) * jax.lax.rsqrt(var + EPS)
    bn = bn * weight.reshape(1, -1, 1, 1) + bias.reshape(1, -1, 1, 1)
    return x318 + bn


if __name__ == "__main__":
    N, C, H, W = 1, 2048, 7, 7  # shapes implied by the module
    key = jax.random.PRNGKey(0)
    k1, k2 = jax.random.split(key)
    x319 = jax.random.normal(k1, (N, C, H, W), dtype=jnp.float32)
    x318 = jax.random.normal(k2, (N, C, H, W), dtype=jnp.float32)

    # PyTorch BatchNorm2d default init: weight = 1, bias = 0 (deterministic)
    weight = jnp.ones((C,), dtype=jnp.float32)
    bias = jnp.zeros((C,), dtype=jnp.float32)

    out = batchnorm_add(x319, x318, weight, bias)
    out = jax.block_until_ready(out)

    ref = reference(x319, x318, weight, bias)
    assert out.shape == (N, C, H, W)
    assert jnp.allclose(out, ref, atol=1e-4, rtol=1e-4)
    print("KERNEL_OK")
</pallas_src>

<mosaic_0001>
module attributes {stable_mosaic.version = 11 : i64} {
  func.func @bn_add_kernel(%arg0: i32, %arg1: memref<1x1024x49xf32, #tpu.memory_space<vmem>>, %arg2: memref<1x1024x49xf32, #tpu.memory_space<vmem>>, %arg3: memref<1x1024x1xf32, #tpu.memory_space<vmem>>, %arg4: memref<1x1024x1xf32, #tpu.memory_space<vmem>>, %arg5: memref<1x1024x49xf32, #tpu.memory_space<vmem>>) attributes {dimension_semantics = [#tpu.dimension_semantics<parallel>], iteration_bounds = array<i64: 2>, scalar_prefetch = 0 : i64, scratch_operands = 0 : i64, tpu.core_type = #tpu.core_type<tc>, window_params = [{transform_indices = @transform_0, window_bounds = array<i64: 1, 1024, 49>}, {transform_indices = @transform_1, window_bounds = array<i64: 1, 1024, 49>}, {transform_indices = @transform_2, window_bounds = array<i64: 1, 1024, 1>}, {transform_indices = @transform_3, window_bounds = array<i64: 1, 1024, 1>}, {transform_indices = @transform_4, window_bounds = array<i64: 1, 1024, 49>}]} {
    %c0 = arith.constant 0 : index
    %c0_0 = arith.constant 0 : index
    %c0_1 = arith.constant 0 : index
    %0 = vector.load %arg1[%c0, %c0_0, %c0_1] : memref<1x1024x49xf32, #tpu.memory_space<vmem>>, vector<1x1024x49xf32>
    %cst = arith.constant dense<0.000000e+00> : vector<1x1024xf32>
    %1 = vector.multi_reduction <add>, %0, %cst [2] : vector<1x1024x49xf32> to vector<1x1024xf32>
    %2 = vector.shape_cast %1 : vector<1x1024xf32> to vector<1x1024x1xf32>
    %3 = arith.mulf %0, %0 : vector<1x1024x49xf32>
    %cst_2 = arith.constant dense<0.000000e+00> : vector<1x1024xf32>
    %4 = vector.multi_reduction <add>, %3, %cst_2 [2] : vector<1x1024x49xf32> to vector<1x1024xf32>
    %5 = vector.shape_cast %4 : vector<1x1024xf32> to vector<1x1024x1xf32>
    %cst_3 = arith.constant 0.0204081628 : f32
    %6 = vector.broadcast %cst_3 : f32 to vector<1x1024x1xf32>
    %7 = arith.mulf %2, %6 : vector<1x1024x1xf32>
    %cst_4 = arith.constant 0.0204081628 : f32
    %8 = vector.broadcast %cst_4 : f32 to vector<1x1024x1xf32>
    %9 = arith.mulf %5, %8 : vector<1x1024x1xf32>
    %10 = arith.mulf %7, %7 : vector<1x1024x1xf32>
    %11 = arith.subf %9, %10 : vector<1x1024x1xf32>
    %cst_5 = arith.constant 9.99999974E-6 : f32
    %12 = vector.broadcast %cst_5 : f32 to vector<1x1024x1xf32>
    %13 = arith.addf %11, %12 : vector<1x1024x1xf32>
    %14 = math.rsqrt %13 : vector<1x1024x1xf32>
    %c0_6 = arith.constant 0 : index
    %c0_7 = arith.constant 0 : index
    %c0_8 = arith.constant 0 : index
    %15 = vector.load %arg3[%c0_6, %c0_7, %c0_8] : memref<1x1024x1xf32, #tpu.memory_space<vmem>>, vector<1x1024x1xf32>
    %16 = arith.mulf %14, %15 : vector<1x1024x1xf32>
    %c0_9 = arith.constant 0 : index
    %c0_10 = arith.constant 0 : index
    %c0_11 = arith.constant 0 : index
    %17 = vector.load %arg4[%c0_9, %c0_10, %c0_11] : memref<1x1024x1xf32, #tpu.memory_space<vmem>>, vector<1x1024x1xf32>
    %18 = arith.mulf %7, %16 : vector<1x1024x1xf32>
    %19 = arith.subf %17, %18 : vector<1x1024x1xf32>
    %c0_12 = arith.constant 0 : index
    %c0_13 = arith.constant 0 : index
    %c0_14 = arith.constant 0 : index
    %20 = vector.load %arg2[%c0_12, %c0_13, %c0_14] : memref<1x1024x49xf32, #tpu.memory_space<vmem>>, vector<1x1024x49xf32>
    %21 = vector.broadcast %16 : vector<1x1024x1xf32> to vector<1x1024x49xf32>
    %22 = arith.mulf %0, %21 : vector<1x1024x49xf32>
    %23 = arith.addf %20, %22 : vector<1x1024x49xf32>
    %24 = vector.broadcast %19 : vector<1x1024x1xf32> to vector<1x1024x49xf32>
    %25 = arith.addf %23, %24 : vector<1x1024x49xf32>
    %c0_15 = arith.constant 0 : index
    %c0_16 = arith.constant 0 : index
    %c0_17 = arith.constant 0 : index
    %26 = vector.load %arg5[%c0_15, %c0_16, %c0_17] : memref<1x1024x49xf32, #tpu.memory_space<vmem>>, vector<1x1024x49xf32>
    tpu.vector_store %arg5[%c0_15, %c0_16, %c0_17], %25 {strides = array<i32>} : memref<1x1024x49xf32, #tpu.memory_space<vmem>>, vector<1x1024x49xf32>,
    return
  }
  func.func @transform_0(%arg0: i32) -> (i32, i32, i32) {
    %c0_i32 = arith.constant 0 : i32
    %c0_i32_0 = arith.constant 0 : i32
    %c0_i32_1 = arith.constant 0 : i32
    return %c0_i32, %arg0, %c0_i32_0 : i32, i32, i32
  }
  func.func @transform_1(%arg0: i32) -> (i32, i32, i32) {
    %c0_i32 = arith.constant 0 : i32
    %c0_i32_0 = arith.constant 0 : i32
    %c0_i32_1 = arith.constant 0 : i32
    return %c0_i32, %arg0, %c0_i32_0 : i32, i32, i32
  }
  func.func @transform_2(%arg0: i32) -> (i32, i32, i32) {
    %c0_i32 = arith.constant 0 : i32
    %c0_i32_0 = arith.constant 0 : i32
    %c0_i32_1 = arith.constant 0 : i32
    return %c0_i32, %arg0, %c0_i32_0 : i32, i32, i32
  }
  func.func @transform_3(%arg0: i32) -> (i32, i32, i32) {
    %c0_i32 = arith.constant 0 : i32
    %c0_i32_0 = arith.constant 0 : i32
    %c0_i32_1 = arith.constant 0 : i32
    return %c0_i32, %arg0, %c0_i32_0 : i32, i32, i32
  }
  func.func @transform_4(%arg0: i32) -> (i32, i32, i32) {
    %c0_i32 = arith.constant 0 : i32
    %c0_i32_0 = arith.constant 0 : i32
    %c0_i32_1 = arith.constant 0 : i32
    return %c0_i32, %arg0, %c0_i32_0 : i32, i32, i32
  }
}

</mosaic_0001>

<llo_original>
// kernel: tpu_custom_call.1
$region0: #{tpu_custom_call.1}
  #allocation0 [shape = 'u32[]', space=smem, size = 0x4, offset = 0x4, fixed_abs, tag = 'smem constant byte address 0x4 - core index']
  #allocation1 [shape = 'u32[72,128]{1,0:T(1,128)}', space=vmem, size = 0x9000, scoped, tag = 'internal scratch']
  %s0 = inlined_call_operand.vmem [shape: f32[1,2048,49], index: 0, kind: input, shape index: {}]
  %s1 = inlined_call_operand.vmem [shape: f32[1,2048,49], index: 1, kind: input, shape index: {}]
  %s2 = inlined_call_operand.vmem [shape: f32[1,2048,1], index: 2, kind: input, shape index: {}]
  %s3 = inlined_call_operand.vmem [shape: f32[1,2048,1], index: 3, kind: input, shape index: {}]
  %s4 = inlined_call_operand.vmem [shape: f32[1,2048,49], index: 4, kind: output, shape index: {}]
  %s5 = sld [smem:[#allocation0]]
  $region49: #{tpu_custom_call.1} parent=0
    _
  %s7 = ssub.s32 1, %s5
  %s8 = scalar_select 0, %s7, %s5
  loop: start=0, step=1, limit=4
  $region2: #{tpu_custom_call.1} parent=0 // loop_pre_header
    _
  $region3: #{tpu_custom_call.1} parent=0 // loop_header
    %s10 = sphi 0, %s14
    %p11 = scmp.ge.s32.totalorder %s10, 4
    %s20 = sphi 0, %s22
    %s23 = sphi 0, %s20
    %s24 = sphi 0, %s23
    %s40 = sphi 0, %s24
    %s46 = sphi 0, %s48
    %s49 = sphi 0, %s46
    %s50 = sphi 0, %s49
    %s66 = sphi 0, %s50
    %s72 = sphi 0, %s74
    %s75 = sphi 0, %s72
    %s76 = sphi 0, %s75
    %s92 = sphi 0, %s76
    %s98 = sphi 0, %s100
    %s101 = sphi 0, %s98
    %s102 = sphi 0, %s101
    %s118 = sphi 0, %s102
    %s124 = sphi 0, %s126
    %s127 = sphi 0, %s124
    %s128 = sphi 0, %s127
    %s144 = sphi 0, %s128
  $region4: #{tpu_custom_call.1} parent=0 // loop_header_branch
    %13 = sbr.rel (%p11) target = $region8
  $region5: #{tpu_custom_call.1} parent=0 // loop_body
    %s15 = ssub.s32 %s10, 1
    %s16 = ssub.s32 %s10, 2
    %s17 = sadd.s32 %s10, 1
    %s18 = ssub.s32 %s10, %s17
    %p19 = scmp.eq.s32.totalorder %s18, 0
    %s21 = sadd.s32 %s20, 1
    %s22 = scalar_select %p19, %s20, %s21
    %p25 = pneg %p19
    %p26 = scmp.eq.s32.totalorder %s10, 1
    %p27 = por %p25, %p26
    %p28 = scmp.ne.s32.totalorder %s20, %s23
    %p29 = scmp.eq.s32.totalorder %s10, 0
    %p30 = por %p28, %p29
    %p31 = scmp.ne.s32.totalorder %s20, %s23
    %p32 = scmp.eq.s32.totalorder %s15, 1
    %p33 = por %p31, %p32
    %p34 = scmp.ne.s32.totalorder %s23, %s24
    %p35 = scmp.eq.s32.totalorder %s15, 0
    %p36 = por %p34, %p35
    %p37 = scmp.ne.s32.totalorder %s23, %s24
    %p38 = scmp.eq.s32.totalorder %s16, 1
    %p39 = por %p37, %p38
    %p41 = scmp.ne.s32.totalorder %s24, %s40
    %p42 = scmp.eq.s32.totalorder %s16, 0
    %p43 = por %p41, %p42
    %s44 = ssub.s32 %s10, %s17
    %p45 = scmp.eq.s32.totalorder %s44, 0
    %s47 = sadd.s32 %s46, 1
    %s48 = scalar_select %p45, %s46, %s47
    %p51 = pneg %p45
    %p52 = scmp.eq.s32.totalorder %s10, 1
    %p53 = por %p51, %p52
    %p54 = scmp.ne.s32.totalorder %s46, %s49
    %p55 = scmp.eq.s32.totalorder %s10, 0
    %p56 = por %p54, %p55
    %p57 = scmp.ne.s32.totalorder %s46, %s49
    %p58 = scmp.eq.s32.totalorder %s15, 1
    %p59 = por %p57, %p58
    %p60 = scmp.ne.s32.totalorder %s49, %s50
    %p61 = scmp.eq.s32.totalorder %s15, 0
    %p62 = por %p60, %p61
    %p63 = scmp.ne.s32.totalorder %s49, %s50
    %p64 = scmp.eq.s32.totalorder %s16, 1
    %p65 = por %p63, %p64
    %p67 = scmp.ne.s32.totalorder %s50, %s66
    %p68 = scmp.eq.s32.totalorder %s16, 0
    %p69 = por %p67, %p68
    %s70 = ssub.s32 %s10, %s17
    %p71 = scmp.eq.s32.totalorder %s70, 0
    %s73 = sadd.s32 %s72, 1
    %s74 = scalar_select %p71, %s72, %s73
    %p77 = pneg %p71
    %p78 = scmp.eq.s32.totalorder %s10, 1
    %p79 = por %p77, %p78
    %p80 = scmp.ne.s32.totalorder %s72, %s75
    %p81 = scmp.eq.s32.totalorder %s10, 0
    %p82 = por %p80, %p81
    %p83 = scmp.ne.s32.totalorder %s72, %s75
    %p84 = scmp.eq.s32.totalorder %s15, 1
    %p85 = por %p83, %p84
    %p86 = scmp.ne.s32.totalorder %s75, %s76
    %p87 = scmp.eq.s32.totalorder %s15, 0
    %p88 = por %p86, %p87
    %p89 = scmp.ne.s32.totalorder %s75, %s76
    %p90 = scmp.eq.s32.totalorder %s16, 1
    %p91 = por %p89, %p90
    %p93 = scmp.ne.s32.totalorder %s76, %s92
    %p94 = scmp.eq.s32.totalorder %s16, 0
    %p95 = por %p93, %p94
    %s96 = ssub.s32 %s10, %s17
    %p97 = scmp.eq.s32.totalorder %s96, 0
    %s99 = sadd.s32 %s98, 1
    %s100 = scalar_select %p97, %s98, %s99
    %p103 = pneg %p97
    %p104 = scmp.eq.s32.totalorder %s10, 1
    %p105 = por %p103, %p104
    %p106 = scmp.ne.s32.totalorder %s98, %s101
    %p107 = scmp.eq.s32.totalorder %s10, 0
    %p108 = por %p106, %p107
    %p109 = scmp.ne.s32.totalorder %s98, %s101
    %p110 = scmp.eq.s32.totalorder %s15, 1
    %p111 = por %p109, %p110
    %p112 = scmp.ne.s32.totalorder %s101, %s102
    %p113 = scmp.eq.s32.totalorder %s15, 0
    %p114 = por %p112, %p113
    %p115 = scmp.ne.s32.totalorder %s101, %s102
    %p116 = scmp.eq.s32.totalorder %s16, 1
    %p117 = por %p115, %p116
    %p119 = scmp.ne.s32.totalorder %s102, %s118
    %p120 = scmp.eq.s32.totalorder %s16, 0
    %p121 = por %p119, %p120
    %s122 = ssub.s32 %s10, %s17
    %p123 = scmp.eq.s32.totalorder %s122, 0
    %s125 = sadd.s32 %s124, 1
    %s126 = scalar_select %p123, %s124, %s125
    %p129 = pneg %p123
    %p130 = scmp.eq.s32.totalorder %s10, 1
    %p131 = por %p129, %p130
    %p132 = scmp.ne.s32.totalorder %s124, %s127
    %p133 = scmp.eq.s32.totalorder %s10, 0
    %p134 = por %p132, %p133
    %p135 = scmp.ne.s32.totalorder %s124, %s127
    %p136 = scmp.eq.s32.totalorder %s15, 1
    %p137 = por %p135, %p136
    %p138 = scmp.ne.s32.totalorder %s127, %s128
    %p139 = scmp.eq.s32.totalorder %s15, 0
    %p140 = por %p138, %p139
    %p141 = scmp.ne.s32.totalorder %s127, %s128
    %p142 = scmp.eq.s32.totalorder %s16, 1
    %p143 = por %p141, %p142
    %p145 = scmp.ne.s32.totalorder %s128, %s144
    %p146 = scmp.eq.s32.totalorder %s16, 0
    %p147 = por %p145, %p146
    %p148 = scmp.le.s32.totalorder 1, %s10
    %p149 = scmp.lt.s32.totalorder %s10, 3
    %p150 = pnand %p148, %p149
    %p151 = pneg %p150
    // Predicated region
    $region9: #{tpu_custom_call.1} parent=5 // pred_check
      _
    $region10: #{tpu_custom_call.1} parent=5 // pred_check_branch
      %153 = sbr.rel (%p150) target = $region12
    $region11: #{tpu_custom_call.1} parent=5 // pred_region
      %s154 = ssub.s32 %s10, 1
    $region12: #{tpu_custom_call.1} parent=5 // pred_fallthru
      _
    %p155 = scmp.lt.s32.totalorder %s10, 2
    // Predicated region
    $region13: #{tpu_custom_call.1} parent=5 // pred_check
      %p156 = pneg %p155
    $region14: #{tpu_custom_call.1} parent=5 // pred_check_branch
      %158 = sbr.rel (%p156) target = $region16
    $region15: #{tpu_custom_call.1} parent=5 // pred_region
      // Predicated region
      $region17: #{tpu_custom_call.1} parent=15 // pred_check
        %p159 = pneg %p30
      $region18: #{tpu_custom_call.1} parent=15 // pred_check_branch
        %161 = sbr.rel (%p159) target = $region20
      $region19: #{tpu_custom_call.1} parent=15 // pred_region
        %s162 = smul.u32 128, %s10
        %p163 = scmp.lt.s32.totalorder %s162, 255
        %s164 = scalar_select %p163, %s162, 255
        %s165 = smul.addr %s164, 8
        %s166 = scalar_lea.vmem %s0, %s165
        %s167 = smul.u32 128, %s10
      $region20: #{tpu_custom_call.1} parent=15 // pred_fallthru
        _
      // Predicated region
      $region21: #{tpu_custom_call.1} parent=15 // pred_check
        %p168 = pneg %p56
      $region22: #{tpu_custom_call.1} parent=15 // pred_check_branch
        %170 = sbr.rel (%p168) target = $region24
      $region23: #{tpu_custom_call.1} parent=15 // pred_region
        %s171 = smul.u32 128, %s10
        %p172 = scmp.lt.s32.totalorder %s171, 255
        %s173 = scalar_select %p172, %s171, 255
        %s174 = smul.addr %s173, 8
        %s175 = scalar_lea.vmem %s1, %s174
        %s176 = smul.u32 128, %s10
      $region24: #{tpu_custom_call.1} parent=15 // pred_fallthru
        _
      // Predicated region
      $region25: #{tpu_custom_call.1} parent=15 // pred_check
        %p177 = pneg %p82
      $region26: #{tpu_custom_call.1} parent=15 // pred_check_branch
        %179 = sbr.rel (%p177) target = $region28
      $region27: #{tpu_custom_call.1} parent=15 // pred_region
        %s180 = smul.u32 128, %s10
        %p181 = scmp.lt.s32.totalorder %s180, 255
        %s182 = scalar_select %p181, %s180, 255
        %s183 = smul.addr %s182, 8
        %s184 = scalar_lea.vmem %s2, %s183
        %s185 = smul.u32 128, %s10
      $region28: #{tpu_custom_call.1} parent=15 // pred_fallthru
        _
      // Predicated region
      $region29: #{tpu_custom_call.1} parent=15 // pred_check
        %p186 = pneg %p108
      $region30: #{tpu_custom_call.1} parent=15 // pred_check_branch
        %188 = sbr.rel (%p186) target = $region32
      $region31: #{tpu_custom_call.1} parent=15 // pred_region
        %s189 = smul.u32 128, %s10
        %p190 = scmp.lt.s32.totalorder %s189, 255
        %s191 = scalar_select %p190, %s189, 255
        %s192 = smul.addr %s191, 8
        %s193 = scalar_lea.vmem %s3, %s192
        %s194 = smul.u32 128, %s10
      $region32: #{tpu_custom_call.1} parent=15 // pred_fallthru
        _
    $region16: #{tpu_custom_call.1} parent=5 // pred_fallthru
      _
    %p195 = scmp.le.s32.totalorder 1, %s10
    %p196 = scmp.lt.s32.totalorder %s10, 3
    %p197 = pnand %p195, %p196
    %p198 = pneg %p197
    // Predicated region
    $region33: #{tpu_custom_call.1} parent=5 // pred_check
      _
    $region34: #{tpu_custom_call.1} parent=5 // pred_check_branch
      %200 = sbr.rel (%p197) target = $region36
    $region35: #{tpu_custom_call.1} parent=5 // pred_region
      %s201 = ssub.s32 %s10, 1
      %s202 = smul.u32 128, %s15
      %p203 = scmp.lt.s32.totalorder %s202, 255
      %s204 = scalar_select %p203, %s202, 255
      %s205 = smul.addr %s204, 8
      %s206 = scalar_lea.vmem %s0, %s205
      %p207 = pneg %p36
      %p208 = pneg %p33
      %s209 = smul.u32 128, %s15
      %p210 = scmp.lt.s32.totalorder %s209, 255
      %s211 = scalar_select %p210, %s209, 255
      %s212 = smul.addr %s211, 8
      %s213 = scalar_lea.vmem %s1, %s212
      %p214 = pneg %p62
      %p215 = pneg %p59
      %s216 = smul.u32 128, %s15
      %p217 = scmp.lt.s32.totalorder %s216, 255
      %s218 = scalar_select %p217, %s216, 255
      %s219 = smul.addr %s218, 8
      %s220 = scalar_lea.vmem %s2, %s219
      %p221 = pneg %p88
      %p222 = pneg %p85
      %s223 = smul.u32 128, %s15
      %p224 = scmp.lt.s32.totalorder %s223, 255
      %s225 = scalar_select %p224, %s223, 255
      %s226 = smul.addr %s225, 8
      %s227 = scalar_lea.vmem %s3, %s226
      %p228 = pneg %p114
      %p229 = pneg %p111
      %p230 = pneg %p140
      %p231 = pneg %p137
      %s232 = smul.u32 128, %s15
      %p233 = scmp.lt.s32.totalorder %s232, 255
      %s234 = scalar_select %p233, %s232, 255
      %s235 = smul.addr %s234, 8
      %s236 = scalar_lea.vmem %s4, %s235
      %s237 = smul.u32 128, %s15
      %p238 = scmp.lt.s32.totalorder %s237, 255
      %s239 = scalar_select %p238, %s237, 255
      %s240 = smul.addr %s239, 8
      %s241 = scalar_lea.vmem %s0, %s240
      %s242 = smul.u32 128, %s15
      %s243 = smul.u32 128, %s15
      %p244 = scmp.lt.s32.totalorder %s243, 255
      %s245 = scalar_select %p244, %s243, 255
      %s246 = smul.addr %s245, 8
      %s247 = scalar_lea.vmem %s1, %s246
      %s248 = smul.u32 128, %s15
      %s249 = smul.u32 128, %s15
      %p250 = scmp.lt.s32.totalorder %s249, 255
      %s251 = scalar_select %p250, %s249, 255
      %s252 = smul.addr %s251, 8
      %s253 = scalar_lea.vmem %s2, %s252
      %s254 = smul.u32 128, %s15
      %s255 = smul.u32 128, %s15
      %p256 = scmp.lt.s32.totalorder %s255, 255
      %s257 = scalar_select %p256, %s255, 255
      %s258 = smul.addr %s257, 8
      %s259 = scalar_lea.vmem %s3, %s258
      %s260 = smul.u32 128, %s15
      %s261 = smul.u32 128, %s15
      %p262 = scmp.lt.s32.totalorder %s261, 255
      %s263 = scalar_select %p262, %s261, 255
      %s264 = smul.addr %s263, 8
      %s265 = scalar_lea.vmem %s4, %s264
      %s266 = smul.u32 128, %s15
      %v267 = vld [vmem:[%s241] sm:$0xff]
      %v268 = vld [vmem:[%s241 + $0x8] sm:$0xff]
      %v269 = vld [vmem:[%s241 + $0x10] sm:$0xff]
      %v270 = vld [vmem:[%s241 + $0x18] sm:$0xff]
      %v271 = vld [vmem:[%s241 + $0x20] sm:$0xff]
      %v272 = vld [vmem:[%s241 + $0x28] sm:$0xff]
      %v273 = vld [vmem:[%s241 + $0x30] sm:$0xff]
      %v274 = vld [vmem:[%s241 + $0x38] sm:$0xff]
      %v275 = vld [vmem:[%s241 + $0x40] sm:$0xff]
      %v276 = vld [vmem:[%s241 + $0x48] sm:$0xff]
      %v277 = vld [vmem:[%s241 + $0x50] sm:$0xff]
      %v278 = vld [vmem:[%s241 + $0x58] sm:$0xff]
      %v279 = vld [vmem:[%s241 + $0x60] sm:$0xff]
      %v280 = vld [vmem:[%s241 + $0x68] sm:$0xff]
      %v281 = vld [vmem:[%s241 + $0x70] sm:$0xff]
      %v282 = vld [vmem:[%s241 + $0x78] sm:$0xff]
      %v283 = vld [vmem:[%s241 + $0x80] sm:$0xff]
      %v284 = vld [vmem:[%s241 + $0x88] sm:$0xff]
      %v285 = vld [vmem:[%s241 + $0x90] sm:$0xff]
      %v286 = vld [vmem:[%s241 + $0x98] sm:$0xff]
      %v287 = vld [vmem:[%s241 + $0xa0] sm:$0xff]
      %v288 = vld [vmem:[%s241 + $0xa8] sm:$0xff]
      %v289 = vld [vmem:[%s241 + $0xb0] sm:$0xff]
      %v290 = vld [vmem:[%s241 + $0xb8] sm:$0xff]
      %v291 = vld [vmem:[%s241 + $0xc0] sm:$0xff]
      %v292 = vld [vmem:[%s241 + $0xc8] sm:$0xff]
      %v293 = vld [vmem:[%s241 + $0xd0] sm:$0xff]
      %v294 = vld [vmem:[%s241 + $0xd8] sm:$0xff]
      %v295 = vld [vmem:[%s241 + $0xe0] sm:$0xff]
      %v296 = vld [vmem:[%s241 + $0xe8] sm:$0xff]
      %v297 = vld [vmem:[%s241 + $0xf0] sm:$0xff]
      %v298 = vld [vmem:[%s241 + $0xf8] sm:$0xff]
      %v299 = vld [vmem:[%s241 + $0x100] sm:$0xff]
      %v300 = vld [vmem:[%s241 + $0x108] sm:$0xff]
      %v301 = vld [vmem:[%s241 + $0x110] sm:$0xff]
      %v302 = vld [vmem:[%s241 + $0x118] sm:$0xff]
      %v303 = vld [vmem:[%s241 + $0x120] sm:$0xff]
      %v304 = vld [vmem:[%s241 + $0x128] sm:$0xff]
      %v305 = vld [vmem:[%s241 + $0x130] sm:$0xff]
      %v306 = vld [vmem:[%s241 + $0x138] sm:$0xff]
      %v307 = vld [vmem:[%s241 + $0x140] sm:$0xff]
      %v308 = vld [vmem:[%s241 + $0x148] sm:$0xff]
      %v309 = vld [vmem:[%s241 + $0x150] sm:$0xff]
      %v310 = vld [vmem:[%s241 + $0x158] sm:$0xff]
      %v311 = vld [vmem:[%s241 + $0x160] sm:$0xff]
      %v312 = vld [vmem:[%s241 + $0x168] sm:$0xff]
      %v313 = vld [vmem:[%s241 + $0x170] sm:$0xff]
      %v314 = vld [vmem:[%s241 + $0x178] sm:$0xff]
      %v315 = vld [vmem:[%s241 + $0x180] sm:$0xff]
      %v316 = vld [vmem:[%s241 + $0x188] sm:$0xff]
      %v317 = vld [vmem:[%s241 + $0x190] sm:$0xff]
      %v318 = vld [vmem:[%s241 + $0x198] sm:$0xff]
      %v319 = vld [vmem:[%s241 + $0x1a0] sm:$0xff]
      %v320 = vld [vmem:[%s241 + $0x1a8] sm:$0xff]
      %v321 = vld [vmem:[%s241 + $0x1b0] sm:$0xff]
      %v322 = vld [vmem:[%s241 + $0x1b8] sm:$0xff]
      %v323 = vld [vmem:[%s241 + $0x1c0] sm:$0xff]
      %v324 = vld [vmem:[%s241 + $0x1c8] sm:$0xff]
      %v325 = vld [vmem:[%s241 + $0x1d0] sm:$0xff]
      %v326 = vld [vmem:[%s241 + $0x1d8] sm:$0xff]
      %v327 = vld [vmem:[%s241 + $0x1e0] sm:$0xff]
      %v328 = vld [vmem:[%s241 + $0x1e8] sm:$0xff]
      %v329 = vld [vmem:[%s241 + $0x1f0] sm:$0xff]
      %v330 = vld [vmem:[%s241 + $0x1f8] sm:$0xff]
      %v331 = vld [vmem:[%s241 + $0x200] sm:$0xff]
      %v332 = vld [vmem:[%s241 + $0x208] sm:$0xff]
      %v333 = vld [vmem:[%s241 + $0x210] sm:$0xff]
      %v334 = vld [vmem:[%s241 + $0x218] sm:$0xff]
      %v335 = vld [vmem:[%s241 + $0x220] sm:$0xff]
      %v336 = vld [vmem:[%s241 + $0x228] sm:$0xff]
      %v337 = vld [vmem:[%s241 + $0x230] sm:$0xff]
      %v338 = vld [vmem:[%s241 + $0x238] sm:$0xff]
      %v339 = vld [vmem:[%s241 + $0x240] sm:$0xff]
      %v340 = vld [vmem:[%s241 + $0x248] sm:$0xff]
      %v341 = vld [vmem:[%s241 + $0x250] sm:$0xff]
      %v342 = vld [vmem:[%s241 + $0x258] sm:$0xff]
      %v343 = vld [vmem:[%s241 + $0x260] sm:$0xff]
      %v344 = vld [vmem:[%s241 + $0x268] sm:$0xff]
      %v345 = vld [vmem:[%s241 + $0x270] sm:$0xff]
      %v346 = vld [vmem:[%s241 + $0x278] sm:$0xff]
      %v347 = vld [vmem:[%s241 + $0x280] sm:$0xff]
      %v348 = vld [vmem:[%s241 + $0x288] sm:$0xff]
      %v349 = vld [vmem:[%s241 + $0x290] sm:$0xff]
      %v350 = vld [vmem:[%s241 + $0x298] sm:$0xff]
      %v351 = vld [vmem:[%s241 + $0x2a0] sm:$0xff]
      %v352 = vld [vmem:[%s241 + $0x2a8] sm:$0xff]
      %v353 = vld [vmem:[%s241 + $0x2b0] sm:$0xff]
      %v354 = vld [vmem:[%s241 + $0x2b8] sm:$0xff]
      %v355 = vld [vmem:[%s241 + $0x2c0] sm:$0xff]
      %v356 = vld [vmem:[%s241 + $0x2c8] sm:$0xff]
      %v357 = vld [vmem:[%s241 + $0x2d0] sm:$0xff]
      %v358 = vld [vmem:[%s241 + $0x2d8] sm:$0xff]
      %v359 = vld [vmem:[%s241 + $0x2e0] sm:$0xff]
      %v360 = vld [vmem:[%s241 + $0x2e8] sm:$0xff]
      %v361 = vld [vmem:[%s241 + $0x2f0] sm:$0xff]
      %v362 = vld [vmem:[%s241 + $0x2f8] sm:$0xff]
      %v363 = vld [vmem:[%s241 + $0x300] sm:$0xff]
      %v364 = vld [vmem:[%s241 + $0x308] sm:$0xff]
      %v365 = vld [vmem:[%s241 + $0x310] sm:$0xff]
      %v366 = vld [vmem:[%s241 + $0x318] sm:$0xff]
      %v367 = vld [vmem:[%s241 + $0x320] sm:$0xff]
      %v368 = vld [vmem:[%s241 + $0x328] sm:$0xff]
      %v369 = vld [vmem:[%s241 + $0x330] sm:$0xff]
      %v370 = vld [vmem:[%s241 + $0x338] sm:$0xff]
      %v371 = vld [vmem:[%s241 + $0x340] sm:$0xff]
      %v372 = vld [vmem:[%s241 + $0x348] sm:$0xff]
      %v373 = vld [vmem:[%s241 + $0x350] sm:$0xff]
      %v374 = vld [vmem:[%s241 + $0x358] sm:$0xff]
      %v375 = vld [vmem:[%s241 + $0x360] sm:$0xff]
      %v376 = vld [vmem:[%s241 + $0x368] sm:$0xff]
      %v377 = vld [vmem:[%s241 + $0x370] sm:$0xff]
      %v378 = vld [vmem:[%s241 + $0x378] sm:$0xff]
      %v379 = vld [vmem:[%s241 + $0x380] sm:$0xff]
      %v380 = vld [vmem:[%s241 + $0x388] sm:$0xff]
      %v381 = vld [vmem:[%s241 + $0x390] sm:$0xff]
      %v382 = vld [vmem:[%s241 + $0x398] sm:$0xff]
      %v383 = vld [vmem:[%s241 + $0x3a0] sm:$0xff]
      %v384 = vld [vmem:[%s241 + $0x3a8] sm:$0xff]
      %v385 = vld [vmem:[%s241 + $0x3b0] sm:$0xff]
      %v386 = vld [vmem:[%s241 + $0x3b8] sm:$0xff]
      %v387 = vld [vmem:[%s241 + $0x3c0] sm:$0xff]
      %v388 = vld [vmem:[%s241 + $0x3c8] sm:$0xff]
      %v389 = vld [vmem:[%s241 + $0x3d0] sm:$0xff]
      %v390 = vld [vmem:[%s241 + $0x3d8] sm:$0xff]
      %v391 = vld [vmem:[%s241 + $0x3e0] sm:$0xff]
      %v392 = vld [vmem:[%s241 + $0x3e8] sm:$0xff]
      %v393 = vld [vmem:[%s241 + $0x3f0] sm:$0xff]
      %v394 = vld [vmem:[%s241 + $0x3f8] sm:$0xff]
      %vm395 = vcmask 400384
      %v396 = vsel %vm395, %v267, 0.0
      %397 = vadd.xlane.f32.xlu0 %v396
      %v398 = vpop.xlane.xlu0 %397
      %v399 = vsel %vm395, %v268, 0.0
      %400 = vadd.xlane.f32.xlu0 %v399
      %v401 = vpop.xlane.xlu0 %400
      %v402 = vsel %vm395, %v269, 0.0
      %403 = vadd.xlane.f32.xlu0 %v402
      %v404 = vpop.xlane.xlu0 %403
      %v405 = vsel %vm395, %v270, 0.0
      %406 = vadd.xlane.f32.xlu0 %v405
      %v407 = vpop.xlane.xlu0 %406
      %v408 = vsel %vm395, %v271, 0.0
      %409 = vadd.xlane.f32.xlu0 %v408
      %v410 = vpop.xlane.xlu0 %409
      %v411 = vsel %vm395, %v272, 0.0
      %412 = vadd.xlane.f32.xlu0 %v411
      %v413 = vpop.xlane.xlu0 %412
      %v414 = vsel %vm395, %v273, 0.0
      %415 = vadd.xlane.f32.xlu0 %v414
      %v416 = vpop.xlane.xlu0 %415
      %v417 = vsel %vm395, %v274, 0.0
      %418 = vadd.xlane.f32.xlu0 %v417
      %v419 = vpop.xlane.xlu0 %418
      %v420 = vsel %vm395, %v275, 0.0
      %421 = vadd.xlane.f32.xlu0 %v420
      %v422 = vpop.xlane.xlu0 %421
      %v423 = vsel %vm395, %v276, 0.0
      %424 = vadd.xlane.f32.xlu0 %v423
      %v425 = vpop.xlane.xlu0 %424
      %v426 = vsel %vm395, %v277, 0.0
      %427 = vadd.xlane.f32.xlu0 %v426
      %v428 = vpop.xlane.xlu0 %427
      %v429 = vsel %vm395, %v278, 0.0
      %430 = vadd.xlane.f32.xlu0 %v429
      %v431 = vpop.xlane.xlu0 %430
      %v432 = vsel %vm395, %v279, 0.0
      %433 = vadd.xlane.f32.xlu0 %v432
      %v434 = vpop.xlane.xlu0 %433
      %v435 = vsel %vm395, %v280, 0.0
      %436 = vadd.xlane.f32.xlu0 %v435
      %v437 = vpop.xlane.xlu0 %436
      %v438 = vsel %vm395, %v281, 0.0
      %439 = vadd.xlane.f32.xlu0 %v438
      %v440 = vpop.xlane.xlu0 %439
      %v441 = vsel %vm395, %v282, 0.0
      %442 = vadd.xlane.f32.xlu0 %v441
      %v443 = vpop.xlane.xlu0 %442
      %v444 = vsel %vm395, %v283, 0.0
      %445 = vadd.xlane.f32.xlu0 %v444
      %v446 = vpop.xlane.xlu0 %445
      %v447 = vsel %vm395, %v284, 0.0
      %448 = vadd.xlane.f32.xlu0 %v447
      %v449 = vpop.xlane.xlu0 %448
      %v450 = vsel %vm395, %v285, 0.0
      %451 = vadd.xlane.f32.xlu0 %v450
      %v452 = vpop.xlane.xlu0 %451
      %v453 = vsel %vm395, %v286, 0.0
      %454 = vadd.xlane.f32.xlu0 %v453
      %v455 = vpop.xlane.xlu0 %454
      %v456 = vsel %vm395, %v287, 0.0
      %457 = vadd.xlane.f32.xlu0 %v456
      %v458 = vpop.xlane.xlu0 %457
      %v459 = vsel %vm395, %v288, 0.0
      %460 = vadd.xlane.f32.xlu0 %v459
      %v461 = vpop.xlane.xlu0 %460
      %v462 = vsel %vm395, %v289, 0.0
      %463 = vadd.xlane.f32.xlu0 %v462
      %v464 = vpop.xlane.xlu0 %463
      %v465 = vsel %vm395, %v290, 0.0
      %466 = vadd.xlane.f32.xlu0 %v465
      %v467 = vpop.xlane.xlu0 %466
      %v468 = vsel %vm395, %v291, 0.0
      %469 = vadd.xlane.f32.xlu0 %v468
      %v470 = vpop.xlane.xlu0 %469
      %v471 = vsel %vm395, %v292, 0.0
      %472 = vadd.xlane.f32.xlu0 %v471
      %v473 = vpop.xlane.xlu0 %472
      %v474 = vsel %vm395, %v293, 0.0
      %475 = vadd.xlane.f32.xlu0 %v474
      %v476 = vpop.xlane.xlu0 %475
      %v477 = vsel %vm395, %v294, 0.0
      %478 = vadd.xlane.f32.xlu0 %v477
      %v479 = vpop.xlane.xlu0 %478
      %v480 = vsel %vm395, %v295, 0.0
      %481 = vadd.xlane.f32.xlu0 %v480
      %v482 = vpop.xlane.xlu0 %481
      %v483 = vsel %vm395, %v296, 0.0
      %484 = vadd.xlane.f32.xlu0 %v483
      %v485 = vpop.xlane.xlu0 %484
      %v486 = vsel %vm395, %v297, 0.0
      %487 = vadd.xlane.f32.xlu0 %v486
      %v488 = vpop.xlane.xlu0 %487
      %v489 = vsel %vm395, %v298, 0.0
      %490 = vadd.xlane.f32.xlu0 %v489
      %v491 = vpop.xlane.xlu0 %490
      %v492 = vsel %vm395, %v299, 0.0
      %493 = vadd.xlane.f32.xlu0 %v492
      %v494 = vpop.xlane.xlu0 %493
      %v495 = vsel %vm395, %v300, 0.0
      %496 = vadd.xlane.f32.xlu0 %v495
      %v497 = vpop.xlane.xlu0 %496
      %v498 = vsel %vm395, %v301, 0.0
      %499 = vadd.xlane.f32.xlu0 %v498
      %v500 = vpop.xlane.xlu0 %499
      %v501 = vsel %vm395, %v302, 0.0
      %502 = vadd.xlane.f32.xlu0 %v501
      %v503 = vpop.xlane.xlu0 %502
      %v504 = vsel %vm395, %v303, 0.0
      %505 = vadd.xlane.f32.xlu0 %v504
      %v506 = vpop.xlane.xlu0 %505
      %v507 = vsel %vm395, %v304, 0.0
      %508 = vadd.xlane.f32.xlu0 %v507
      %v509 = vpop.xlane.xlu0 %508
      %v510 = vsel %vm395, %v305, 0.0
      %511 = vadd.xlane.f32.xlu0 %v510
      %v512 = vpop.xlane.xlu0 %511
      %v513 = vsel %vm395, %v306, 0.0
      %514 = vadd.xlane.f32.xlu0 %v513
      %v515 = vpop.xlane.xlu0 %514
      %v516 = vsel %vm395, %v307, 0.0
      %517 = vadd.xlane.f32.xlu0 %v516
      %v518 = vpop.xlane.xlu0 %517
      %v519 = vsel %vm395, %v308, 0.0
      %520 = vadd.xlane.f32.xlu0 %v519
      %v521 = vpop.xlane.xlu0 %520
      %v522 = vsel %vm395, %v309, 0.0
      %523 = vadd.xlane.f32.xlu0 %v522
      %v524 = vpop.xlane.xlu0 %523
      %v525 = vsel %vm395, %v310, 0.0
      %526 = vadd.xlane.f32.xlu0 %v525
      %v527 = vpop.xlane.xlu0 %526
      %v528 = vsel %vm395, %v311, 0.0
      %529 = vadd.xlane.f32.xlu0 %v528
      %v530 = vpop.xlane.xlu0 %529
      %v531 = vsel %vm395, %v312, 0.0
      %532 = vadd.xlane.f32.xlu0 %v531
      %v533 = vpop.xlane.xlu0 %532
      %v534 = vsel %vm395, %v313, 0.0
      %535 = vadd.xlane.f32.xlu0 %v534
      %v536 = vpop.xlane.xlu0 %535
      %v537 = vsel %vm395, %v314, 0.0
      %538 = vadd.xlane.f32.xlu0 %v537
      %v539 = vpop.xlane.xlu0 %538
      %v540 = vsel %vm395, %v315, 0.0
      %541 = vadd.xlane.f32.xlu0 %v540
      %v542 = vpop.xlane.xlu0 %541
      %v543 = vsel %vm395, %v316, 0.0
      %544 = vadd.xlane.f32.xlu0 %v543
      %v545 = vpop.xlane.xlu0 %544
      %v546 = vsel %vm395, %v317, 0.0
      %547 = vadd.xlane.f32.xlu0 %v546
      %v548 = vpop.xlane.xlu0 %547
      %v549 = vsel %vm395, %v318, 0.0
      %550 = vadd.xlane.f32.xlu0 %v549
      %v551 = vpop.xlane.xlu0 %550
      %v552 = vsel %vm395, %v319, 0.0
      %553 = vadd.xlane.f32.xlu0 %v552
      %v554 = vpop.xlane.xlu0 %553
      %v555 = vsel %vm395, %v320, 0.0
      %556 = vadd.xlane.f32.xlu0 %v555
      %v557 = vpop.xlane.xlu0 %556
      %v558 = vsel %vm395, %v321, 0.0
      %559 = vadd.xlane.f32.xlu0 %v558
      %v560 = vpop.xlane.xlu0 %559
      %v561 = vsel %vm395, %v322, 0.0
      %562 = vadd.xlane.f32.xlu0 %v561
      %v563 = vpop.xlane.xlu0 %562
      %v564 = vsel %vm395, %v323, 0.0
      %565 = vadd.xlane.f32.xlu0 %v564
      %v566 = vpop.xlane.xlu0 %565
      %v567 = vsel %vm395, %v324, 0.0
      %568 = vadd.xlane.f32.xlu0 %v567
      %v569 = vpop.xlane.xlu0 %568
      %v570 = vsel %vm395, %v325, 0.0
      %571 = vadd.xlane.f32.xlu0 %v570
      %v572 = vpop.xlane.xlu0 %571
      %v573 = vsel %vm395, %v326, 0.0
      %574 = vadd.xlane.f32.xlu0 %v573
      %v575 = vpop.xlane.xlu0 %574
      %v576 = vsel %vm395, %v327, 0.0
      %577 = vadd.xlane.f32.xlu0 %v576
      %v578 = vpop.xlane.xlu0 %577
      %v579 = vsel %vm395, %v328, 0.0
      %580 = vadd.xlane.f32.xlu0 %v579
      %v581 = vpop.xlane.xlu0 %580
      %v582 = vsel %vm395, %v329, 0.0
      %583 = vadd.xlane.f32.xlu0 %v582
      %v584 = vpop.xlane.xlu0 %583
      %v585 = vsel %vm395, %v330, 0.0
      %586 = vadd.xlane.f32.xlu0 %v585
      %v587 = vpop.xlane.xlu0 %586
      %v588 = vsel %vm395, %v331, 0.0
      %589 = vadd.xlane.f32.xlu0 %v588
      %v590 = vpop.xlane.xlu0 %589
      %v591 = vsel %vm395, %v332, 0.0
      %592 = vadd.xlane.f32.xlu0 %v591
      %v593 = vpop.xlane.xlu0 %592
      %v594 = vsel %vm395, %v333, 0.0
      %595 = vadd.xlane.f32.xlu0 %v594
      %v596 = vpop.xlane.xlu0 %595
      %v597 = vsel %vm395, %v334, 0.0
      %598 = vadd.xlane.f32.xlu0 %v597
      %v599 = vpop.xlane.xlu0 %598
      %v600 = vsel %vm395, %v335, 0.0
      %601 = vadd.xlane.f32.xlu0 %v600
      %v602 = vpop.xlane.xlu0 %601
      %v603 = vsel %vm395, %v336, 0.0
      %604 = vadd.xlane.f32.xlu0 %v603
      %v605 = vpop.xlane.xlu0 %604
      %v606 = vsel %vm395, %v337, 0.0
      %607 = vadd.xlane.f32.xlu0 %v606
      %v608 = vpop.xlane.xlu0 %607
      %v609 = vsel %vm395, %v338, 0.0
      %610 = vadd.xlane.f32.xlu0 %v609
      %v611 = vpop.xlane.xlu0 %610
      %v612 = vsel %vm395, %v339, 0.0
      %613 = vadd.xlane.f32.xlu0 %v612
      %v614 = vpop.xlane.xlu0 %613
      %v615 = vsel %vm395, %v340, 0.0
      %616 = vadd.xlane.f32.xlu0 %v615
      %v617 = vpop.xlane.xlu0 %616
      %v618 = vsel %vm395, %v341, 0.0
      %619 = vadd.xlane.f32.xlu0 %v618
      %v620 = vpop.xlane.xlu0 %619
      %v621 = vsel %vm395, %v342, 0.0
      %622 = vadd.xlane.f32.xlu0 %v621
      %v623 = vpop.xlane.xlu0 %622
      %v624 = vsel %vm395, %v343, 0.0
      %625 = vadd.xlane.f32.xlu0 %v624
      %v626 = vpop.xlane.xlu0 %625
      %v627 = vsel %vm395, %v344, 0.0
      %628 = vadd.xlane.f32.xlu0 %v627
      %v629 = vpop.xlane.xlu0 %628
      %v630 = vsel %vm395, %v345, 0.0
      %631 = vadd.xlane.f32.xlu0 %v630
      %v632 = vpop.xlane.xlu0 %631
      %v633 = vsel %vm395, %v346, 0.0
      %634 = vadd.xlane.f32.xlu0 %v633
      %v635 = vpop.xlane.xlu0 %634
      %v636 = vsel %vm395, %v347, 0.0
      %637 = vadd.xlane.f32.xlu0 %v636
      %v638 = vpop.xlane.xlu0 %637
      %v639 = vsel %vm395, %v348, 0.0
      %640 = vadd.xlane.f32.xlu0 %v639
      %v641 = vpop.xlane.xlu0 %640
      %v642 = vsel %vm395, %v349, 0.0
      %643 = vadd.xlane.f32.xlu0 %v642
      %v644 = vpop.xlane.xlu0 %643
      %v645 = vsel %vm395, %v350, 0.0
      %646 = vadd.xlane.f32.xlu0 %v645
      %v647 = vpop.xlane.xlu0 %646
      %v648 = vsel %vm395, %v351, 0.0
      %649 = vadd.xlane.f32.xlu0 %v648
      %v650 = vpop.xlane.xlu0 %649
      %v651 = vsel %vm395, %v352, 0.0
      %652 = vadd.xlane.f32.xlu0 %v651
      %v653 = vpop.xlane.xlu0 %652
      %v654 = vsel %vm395, %v353, 0.0
      %655 = vadd.xlane.f32.xlu0 %v654
      %v656 = vpop.xlane.xlu0 %655
      %v657 = vsel %vm395, %v354, 0.0
      %658 = vadd.xlane.f32.xlu0 %v657
      %v659 = vpop.xlane.xlu0 %658
      %v660 = vsel %vm395, %v355, 0.0
      %661 = vadd.xlane.f32.xlu0 %v660
      %v662 = vpop.xlane.xlu0 %661
      %v663 = vsel %vm395, %v356, 0.0
      %664 = vadd.xlane.f32.xlu0 %v663
      %v665 = vpop.xlane.xlu0 %664
      %v666 = vsel %vm395, %v357, 0.0
      %667 = vadd.xlane.f32.xlu0 %v666
      %v668 = vpop.xlane.xlu0 %667
      %v669 = vsel %vm395, %v358, 0.0
      %670 = vadd.xlane.f32.xlu0 %v669
      %v671 = vpop.xlane.xlu0 %670
      %v672 = vsel %vm395, %v359, 0.0
      %673 = vadd.xlane.f32.xlu0 %v672
      %v674 = vpop.xlane.xlu0 %673
      %v675 = vsel %vm395, %v360, 0.0
      %676 = vadd.xlane.f32.xlu0 %v675
      %v677 = vpop.xlane.xlu0 %676
      %v678 = vsel %vm395, %v361, 0.0
      %679 = vadd.xlane.f32.xlu0 %v678
      %v680 = vpop.xlane.xlu0 %679
      %v681 = vsel %vm395, %v362, 0.0
      %682 = vadd.xlane.f32.xlu0 %v681
      %v683 = vpop.xlane.xlu0 %682
      %v684 = vsel %vm395, %v363, 0.0
      %685 = vadd.xlane.f32.xlu0 %v684
      %v686 = vpop.xlane.xlu0 %685
      %v687 = vsel %vm395, %v364, 0.0
      %688 = vadd.xlane.f32.xlu0 %v687
      %v689 = vpop.xlane.xlu0 %688
      %v690 = vsel %vm395, %v365, 0.0
      %691 = vadd.xlane.f32.xlu0 %v690
      %v692 = vpop.xlane.xlu0 %691
      %v693 = vsel %vm395, %v366, 0.0
      %694 = vadd.xlane.f32.xlu0 %v693
      %v695 = vpop.xlane.xlu0 %694
      %v696 = vsel %vm395, %v367, 0.0
      %697 = vadd.xlane.f32.xlu0 %v696
      %v698 = vpop.xlane.xlu0 %697
      %v699 = vsel %vm395, %v368, 0.0
      %700 = vadd.xlane.f32.xlu0 %v699
      %v701 = vpop.xlane.xlu0 %700
      %v702 = vsel %vm395, %v369, 0.0
      %703 = vadd.xlane.f32.xlu0 %v702
      %v704 = vpop.xlane.xlu0 %703
      %v705 = vsel %vm395, %v370, 0.0
      %706 = vadd.xlane.f32.xlu0 %v705
      %v707 = vpop.xlane.xlu0 %706
      %v708 = vsel %vm395, %v371, 0.0
      %709 = vadd.xlane.f32.xlu0 %v708
      %v710 = vpop.xlane.xlu0 %709
      %v711 = vsel %vm395, %v372, 0.0
      %712 = vadd.xlane.f32.xlu0 %v711
      %v713 = vpop.xlane.xlu0 %712
      %v714 = vsel %vm395, %v373, 0.0
      %715 = vadd.xlane.f32.xlu0 %v714
      %v716 = vpop.xlane.xlu0 %715
      %v717 = vsel %vm395, %v374, 0.0
      %718 = vadd.xlane.f32.xlu0 %v717
      %v719 = vpop.xlane.xlu0 %718
      %v720 = vsel %vm395, %v375, 0.0
      %721 = vadd.xlane.f32.xlu0 %v720
      %v722 = vpop.xlane.xlu0 %721
      %v723 = vsel %vm395, %v376, 0.0
      %724 = vadd.xlane.f32.xlu0 %v723
      %v725 = vpop.xlane.xlu0 %724
      %v726 = vsel %vm395, %v377, 0.0
      %727 = vadd.xlane.f32.xlu0 %v726
      %v728 = vpop.xlane.xlu0 %727
      %v729 = vsel %vm395, %v378, 0.0
      %730 = vadd.xlane.f32.xlu0 %v729
      %v731 = vpop.xlane.xlu0 %730
      %v732 = vsel %vm395, %v379, 0.0
      %733 = vadd.xlane.f32.xlu0 %v732
      %v734 = vpop.xlane.xlu0 %733
      %v735 = vsel %vm395, %v380, 0.0
      %736 = vadd.xlane.f32.xlu0 %v735
      %v737 = vpop.xlane.xlu0 %736
      %v738 = vsel %vm395, %v381, 0.0
      %739 = vadd.xlane.f32.xlu0 %v738
      %v740 = vpop.xlane.xlu0 %739
      %v741 = vsel %vm395, %v382, 0.0
      %742 = vadd.xlane.f32.xlu0 %v741
      %v743 = vpop.xlane.xlu0 %742
      %v744 = vsel %vm395, %v383, 0.0
      %745 = vadd.xlane.f32.xlu0 %v744
      %v746 = vpop.xlane.xlu0 %745
      %v747 = vsel %vm395, %v384, 0.0
      %748 = vadd.xlane.f32.xlu0 %v747
      %v749 = vpop.xlane.xlu0 %748
      %v750 = vsel %vm395, %v385, 0.0
      %751 = vadd.xlane.f32.xlu0 %v750
      %v752 = vpop.xlane.xlu0 %751
      %v753 = vsel %vm395, %v386, 0.0
      %754 = vadd.xlane.f32.xlu0 %v753
      %v755 = vpop.xlane.xlu0 %754
      %v756 = vsel %vm395, %v387, 0.0
      %757 = vadd.xlane.f32.xlu0 %v756
      %v758 = vpop.xlane.xlu0 %757
      %v759 = vsel %vm395, %v388, 0.0
      %760 = vadd.xlane.f32.xlu0 %v759
      %v761 = vpop.xlane.xlu0 %760
      %v762 = vsel %vm395, %v389, 0.0
      %763 = vadd.xlane.f32.xlu0 %v762
      %v764 = vpop.xlane.xlu0 %763
      %v765 = vsel %vm395, %v390, 0.0
      %766 = vadd.xlane.f32.xlu0 %v765
      %v767 = vpop.xlane.xlu0 %766
      %v768 = vsel %vm395, %v391, 0.0
      %769 = vadd.xlane.f32.xlu0 %v768
      %v770 = vpop.xlane.xlu0 %769
      %v771 = vsel %vm395, %v392, 0.0
      %772 = vadd.xlane.f32.xlu0 %v771
      %v773 = vpop.xlane.xlu0 %772
      %v774 = vsel %vm395, %v393, 0.0
      %775 = vadd.xlane.f32.xlu0 %v774
      %v776 = vpop.xlane.xlu0 %775
      %v777 = vsel %vm395, %v394, 0.0
      %778 = vadd.xlane.f32.xlu0 %v777
      %v779 = vpop.xlane.xlu0 %778
      %v780 = vmul.f32 %v267, %v267
      %v781 = vmul.f32 %v268, %v268
      %v782 = vmul.f32 %v269, %v269
      %v783 = vmul.f32 %v270, %v270
      %v784 = vmul.f32 %v271, %v271
      %v785 = vmul.f32 %v272, %v272
      %v786 = vmul.f32 %v273, %v273
      %v787 = vmul.f32 %v274, %v274
      %v788 = vmul.f32 %v275, %v275
      %v789 = vmul.f32 %v276, %v276
      %v790 = vmul.f32 %v277, %v277
      %v791 = vmul.f32 %v278, %v278
      %v792 = vmul.f32 %v279, %v279
      %v793 = vmul.f32 %v280, %v280
      %v794 = vmul.f32 %v281, %v281
      %v795 = vmul.f32 %v282, %v282
      %v796 = vmul.f32 %v283, %v283
      %v797 = vmul.f32 %v284, %v284
      %v798 = vmul.f32 %v285, %v285
      %v799 = vmul.f32 %v286, %v286
      %v800 = vmul.f32 %v287, %v287
      %v801 = vmul.f32 %v288, %v288
      %v802 = vmul.f32 %v289, %v289
      %v803 = vmul.f32 %v290, %v290
      %v804 = vmul.f32 %v291, %v291
      %v805 = vmul.f32 %v292, %v292
      %v806 = vmul.f32 %v293, %v293
      %v807 = vmul.f32 %v294, %v294
      %v808 = vmul.f32 %v295, %v295
      %v809 = vmul.f32 %v296, %v296
      %v810 = vmul.f32 %v297, %v297
      %v811 = vmul.f32 %v298, %v298
      %v812 = vmul.f32 %v299, %v299
      %v813 = vmul.f32 %v300, %v300
      %v814 = vmul.f32 %v301, %v301
      %v815 = vmul.f32 %v302, %v302
      %v816 = vmul.f32 %v303, %v303
      %v817 = vmul.f32 %v304, %v304
      %v818 = vmul.f32 %v305, %v305
      %v819 = vmul.f32 %v306, %v306
      %v820 = vmul.f32 %v307, %v307
      %v821 = vmul.f32 %v308, %v308
      %v822 = vmul.f32 %v309, %v309
      %v823 = vmul.f32 %v310, %v310
      %v824 = vmul.f32 %v311, %v311
      %v825 = vmul.f32 %v312, %v312
      %v826 = vmul.f32 %v313, %v313
      %v827 = vmul.f32 %v314, %v314
      %v828 = vmul.f32 %v315, %v315
      %v829 = vmul.f32 %v316, %v316
      %v830 = vmul.f32 %v317, %v317
      %v831 = vmul.f32 %v318, %v318
      %v832 = vmul.f32 %v319, %v319
      %v833 = vmul.f32 %v320, %v320
      %v834 = vmul.f32 %v321, %v321
      %v835 = vmul.f32 %v322, %v322
      %v836 = vmul.f32 %v323, %v323
      %v837 = vmul.f32 %v324, %v324
      %v838 = vmul.f32 %v325, %v325
      %v839 = vmul.f32 %v326, %v326
      %v840 = vmul.f32 %v327, %v327
      %v841 = vmul.f32 %v328, %v328
      %v842 = vmul.f32 %v329, %v329
      %v843 = vmul.f32 %v330, %v330
      %v844 = vmul.f32 %v331, %v331
      %v845 = vmul.f32 %v332, %v332
      %v846 = vmul.f32 %v333, %v333
      %v847 = vmul.f32 %v334, %v334
      %v848 = vmul.f32 %v335, %v335
      %v849 = vmul.f32 %v336, %v336
      %v850 = vmul.f32 %v337, %v337
      %v851 = vmul.f32 %v338, %v338
      %v852 = vmul.f32 %v339, %v339
      %v853 = vmul.f32 %v340, %v340
      %v854 = vmul.f32 %v341, %v341
      %v855 = vmul.f32 %v342, %v342
      %v856 = vmul.f32 %v343, %v343
      %v857 = vmul.f32 %v344, %v344
      %v858 = vmul.f32 %v345, %v345
      %v859 = vmul.f32 %v346, %v346
      %v860 = vmul.f32 %v347, %v347
      %v861 = vmul.f32 %v348, %v348
      %v862 = vmul.f32 %v349, %v349
      %v863 = vmul.f32 %v350, %v350
      %v864 = vmul.f32 %v351, %v351
      %v865 = vmul.f32 %v352, %v352
      %v866 = vmul.f32 %v353, %v353
      %v867 = vmul.f32 %v354, %v354
      %v868 = vmul.f32 %v355, %v355
      %v869 = vmul.f32 %v356, %v356
      %v870 = vmul.f32 %v357, %v357
      %v871 = vmul.f32 %v358, %v358
      %v872 = vmul.f32 %v359, %v359
      %v873 = vmul.f32 %v360, %v360
      %v874 = vmul.f32 %v361, %v361
      %v875 = vmul.f32 %v362, %v362
      %v876 = vmul.f32 %v363, %v363
      %v877 = vmul.f32 %v364, %v364
      %v878 = vmul.f32 %v365, %v365
      %v879 = vmul.f32 %v366, %v366
      %v880 = vmul.f32 %v367, %v367
      %v881 = vmul.f32 %v368, %v368
      %v882 = vmul.f32 %v369, %v369
      %v883 = vmul.f32 %v370, %v370
      %v884 = vmul.f32 %v371, %v371
      %v885 = vmul.f32 %v372, %v372
      %v886 = vmul.f32 %v373, %v373
      %v887 = vmul.f32 %v374, %v374
      %v888 = vmul.f32 %v375, %v375
      %v889 = vmul.f32 %v376, %v376
      %v890 = vmul.f32 %v377, %v377
      %v891 = vmul.f32 %v378, %v378
      %v892 = vmul.f32 %v379, %v379
      %v893 = vmul.f32 %v380, %v380
      %v894 = vmul.f32 %v381, %v381
      %v895 = vmul.f32 %v382, %v382
      %v896 = vmul.f32 %v383, %v383
      %v897 = vmul.f32 %v384, %v384
      %v898 = vmul.f32 %v385, %v385
      %v899 = vmul.f32 %v386, %v386
      %v900 = vmul.f32 %v387, %v387
      %v901 = vmul.f32 %v388, %v388
      %v902 = vmul.f32 %v389, %v389
      %v903 = vmul.f32 %v390, %v390
      %v904 = vmul.f32 %v391, %v391
      %v905 = vmul.f32 %v392, %v392
      %v906 = vmul.f32 %v393, %v393
      %v907 = vmul.f32 %v394, %v394
      %v908 = vsel %vm395, %v780, 0.0
      %909 = vadd.xlane.f32.xlu0 %v908
      %v910 = vpop.xlane.xlu0 %909
      %v911 = vsel %vm395, %v781, 0.0
      %912 = vadd.xlane.f32.xlu0 %v911
      %v913 = vpop.xlane.xlu0 %912
      %v914 = vsel %vm395, %v782, 0.0
      %915 = vadd.xlane.f32.xlu0 %v914
      %v916 = vpop.xlane.xlu0 %915
      %v917 = vsel %vm395, %v783, 0.0
      %918 = vadd.xlane.f32.xlu0 %v917
      %v919 = vpop.xlane.xlu0 %918
      %v920 = vsel %vm395, %v784, 0.0
      %921 = vadd.xlane.f32.xlu0 %v920
      %v922 = vpop.xlane.xlu0 %921
      %v923 = vsel %vm395, %v785, 0.0
      %924 = vadd.xlane.f32.xlu0 %v923
      %v925 = vpop.xlane.xlu0 %924
      %v926 = vsel %vm395, %v786, 0.0
      %927 = vadd.xlane.f32.xlu0 %v926
      %v928 = vpop.xlane.xlu0 %927
      %v929 = vsel %vm395, %v787, 0.0
      %930 = vadd.xlane.f32.xlu0 %v929
      %v931 = vpop.xlane.xlu0 %930
      %v932 = vsel %vm395, %v788, 0.0
      %933 = vadd.xlane.f32.xlu0 %v932
      %v934 = vpop.xlane.xlu0 %933
      %v935 = vsel %vm395, %v789, 0.0
      %936 = vadd.xlane.f32.xlu0 %v935
      %v937 = vpop.xlane.xlu0 %936
      %v938 = vsel %vm395, %v790, 0.0
      %939 = vadd.xlane.f32.xlu0 %v938
      %v940 = vpop.xlane.xlu0 %939
      %v941 = vsel %vm395, %v791, 0.0
      %942 = vadd.xlane.f32.xlu0 %v941
      %v943 = vpop.xlane.xlu0 %942
      %v944 = vsel %vm395, %v792, 0.0
      %945 = vadd.xlane.f32.xlu0 %v944
      %v946 = vpop.xlane.xlu0 %945
      %v947 = vsel %vm395, %v793, 0.0
      %948 = vadd.xlane.f32.xlu0 %v947
      %v949 = vpop.xlane.xlu0 %948
      %v950 = vsel %vm395, %v794, 0.0
      %951 = vadd.xlane.f32.xlu0 %v950
      %v952 = vpop.xlane.xlu0 %951
      %v953 = vsel %vm395, %v795, 0.0
      %954 = vadd.xlane.f32.xlu0 %v953
      %v955 = vpop.xlane.xlu0 %954
      %v956 = vsel %vm395, %v796, 0.0
      %957 = vadd.xlane.f32.xlu0 %v956
      %v958 = vpop.xlane.xlu0 %957
      %v959 = vsel %vm395, %v797, 0.0
      %960 = vadd.xlane.f32.xlu0 %v959
      %v961 = vpop.xlane.xlu0 %960
      %v962 = vsel %vm395, %v798, 0.0
      %963 = vadd.xlane.f32.xlu0 %v962
      %v964 = vpop.xlane.xlu0 %963
      %v965 = vsel %vm395, %v799, 0.0
      %966 = vadd.xlane.f32.xlu0 %v965
      %v967 = vpop.xlane.xlu0 %966
      %v968 = vsel %vm395, %v800, 0.0
      %969 = vadd.xlane.f32.xlu0 %v968
      %v970 = vpop.xlane.xlu0 %969
      %v971 = vsel %vm395, %v801, 0.0
      %972 = vadd.xlane.f32.xlu0 %v971
      %v973 = vpop.xlane.xlu0 %972
      %v974 = vsel %vm395, %v802, 0.0
      %975 = vadd.xlane.f32.xlu0 %v974
      %v976 = vpop.xlane.xlu0 %975
      %v977 = vsel %vm395, %v803, 0.0
      %978 = vadd.xlane.f32.xlu0 %v977
      %v979 = vpop.xlane.xlu0 %978
      %v980 = vsel %vm395, %v804, 0.0
      %981 = vadd.xlane.f32.xlu0 %v980
      %v982 = vpop.xlane.xlu0 %981
      %v983 = vsel %vm395, %v805, 0.0
      %984 = vadd.xlane.f32.xlu0 %v983
      %v985 = vpop.xlane.xlu0 %984
      %v986 = vsel %vm395, %v806, 0.0
      %987 = vadd.xlane.f32.xlu0 %v986
      %v988 = vpop.xlane.xlu0 %987
      %v989 = vsel %vm395, %v807, 0.0
      %990 = vadd.xlane.f32.xlu0 %v989
      %v991 = vpop.xlane.xlu0 %990
      %v992 = vsel %vm395, %v808, 0.0
      %993 = vadd.xlane.f32.xlu0 %v992
      %v994 = vpop.xlane.xlu0 %993
      %v995 = vsel %vm395, %v809, 0.0
      %996 = vadd.xlane.f32.xlu0 %v995
      %v997 = vpop.xlane.xlu0 %996
      %v998 = vsel %vm395, %v810, 0.0
      %999 = vadd.xlane.f32.xlu0 %v998
      %v1000 = vpop.xlane.xlu0 %999
      %v1001 = vsel %vm395, %v811, 0.0
      %1002 = vadd.xlane.f32.xlu0 %v1001
      %v1003 = vpop.xlane.xlu0 %1002
      %v1004 = vsel %vm395, %v812, 0.0
      %1005 = vadd.xlane.f32.xlu0 %v1004
      %v1006 = vpop.xlane.xlu0 %1005
      %v1007 = vsel %vm395, %v813, 0.0
      %1008 = vadd.xlane.f32.xlu0 %v1007
      %v1009 = vpop.xlane.xlu0 %1008
      %v1010 = vsel %vm395, %v814, 0.0
      %1011 = vadd.xlane.f32.xlu0 %v1010
      %v1012 = vpop.xlane.xlu0 %1011
      %v1013 = vsel %vm395, %v815, 0.0
      %1014 = vadd.xlane.f32.xlu0 %v1013
      %v1015 = vpop.xlane.xlu0 %1014
      %v1016 = vsel %vm395, %v816, 0.0
      %1017 = vadd.xlane.f32.xlu0 %v1016
      %v1018 = vpop.xlane.xlu0 %1017
      %v1019 = vsel %vm395, %v817, 0.0
      %1020 = vadd.xlane.f32.xlu0 %v1019
      %v1021 = vpop.xlane.xlu0 %1020
      %v1022 = vsel %vm395, %v818, 0.0
      %1023 = vadd.xlane.f32.xlu0 %v1022
      %v1024 = vpop.xlane.xlu0 %1023
      %v1025 = vsel %vm395, %v819, 0.0
      %1026 = vadd.xlane.f32.xlu0 %v1025
      %v1027 = vpop.xlane.xlu0 %1026
      %v1028 = vsel %vm395, %v820, 0.0
      %1029 = vadd.xlane.f32.xlu0 %v1028
      %v1030 = vpop.xlane.xlu0 %1029
      %v1031 = vsel %vm395, %v821, 0.0
      %1032 = vadd.xlane.f32.xlu0 %v1031
      %v1033 = vpop.xlane.xlu0 %1032
      %v1034 = vsel %vm395, %v822, 0.0
      %1035 = vadd.xlane.f32.xlu0 %v1034
      %v1036 = vpop.xlane.xlu0 %1035
      %v1037 = vsel %vm395, %v823, 0.0
      %1038 = vadd.xlane.f32.xlu0 %v1037
      %v1039 = vpop.xlane.xlu0 %1038
      %v1040 = vsel %vm395, %v824, 0.0
      %1041 = vadd.xlane.f32.xlu0 %v1040
      %v1042 = vpop.xlane.xlu0 %1041
      %v1043 = vsel %vm395, %v825, 0.0
      %1044 = vadd.xlane.f32.xlu0 %v1043
      %v1045 = vpop.xlane.xlu0 %1044
      %v1046 = vsel %vm395, %v826, 0.0
      %1047 = vadd.xlane.f32.xlu0 %v1046
      %v1048 = vpop.xlane.xlu0 %1047
      %v1049 = vsel %vm395, %v827, 0.0
      %1050 = vadd.xlane.f32.xlu0 %v1049
      %v1051 = vpop.xlane.xlu0 %1050
      %v1052 = vsel %vm395, %v828, 0.0
      %1053 = vadd.xlane.f32.xlu0 %v1052
      %v1054 = vpop.xlane.xlu0 %1053
      %v1055 = vsel %vm395, %v829, 0.0
      %1056 = vadd.xlane.f32.xlu0 %v1055
      %v1057 = vpop.xlane.xlu0 %1056
      %v1058 = vsel %vm395, %v830, 0.0
      %1059 = vadd.xlane.f32.xlu0 %v1058
      %v1060 = vpop.xlane.xlu0 %1059
      %v1061 = vsel %vm395, %v831, 0.0
      %1062 = vadd.xlane.f32.xlu0 %v1061
      %v1063 = vpop.xlane.xlu0 %1062
      %v1064 = vsel %vm395, %v832, 0.0
      %1065 = vadd.xlane.f32.xlu0 %v1064
      %v1066 = vpop.xlane.xlu0 %1065
      %v1067 = vsel %vm395, %v833, 0.0
      %1068 = vadd.xlane.f32.xlu0 %v1067
      %v1069 = vpop.xlane.xlu0 %1068
      %v1070 = vsel %vm395, %v834, 0.0
      %1071 = vadd.xlane.f32.xlu0 %v1070
      %v1072 = vpop.xlane.xlu0 %1071
      %v1073 = vsel %vm395, %v835, 0.0
      %1074 = vadd.xlane.f32.xlu0 %v1073
      %v1075 = vpop.xlane.xlu0 %1074
      %v1076 = vsel %vm395, %v836, 0.0
      %1077 = vadd.xlane.f32.xlu0 %v1076
      %v1078 = vpop.xlane.xlu0 %1077
      %v1079 = vsel %vm395, %v837, 0.0
      %1080 = vadd.xlane.f32.xlu0 %v1079
      %v1081 = vpop.xlane.xlu0 %1080
      %v1082 = vsel %vm395, %v838, 0.0
      %1083 = vadd.xlane.f32.xlu0 %v1082
      %v1084 = vpop.xlane.xlu0 %1083
      %v1085 = vsel %vm395, %v839, 0.0
      %1086 = vadd.xlane.f32.xlu0 %v1085
      %v1087 = vpop.xlane.xlu0 %1086
      %v1088 = vsel %vm395, %v840, 0.0
      %1089 = vadd.xlane.f32.xlu0 %v1088
      %v1090 = vpop.xlane.xlu0 %1089
      %v1091 = vsel %vm395, %v841, 0.0
      %1092 = vadd.xlane.f32.xlu0 %v1091
      %v1093 = vpop.xlane.xlu0 %1092
      %v1094 = vsel %vm395, %v842, 0.0
      %1095 = vadd.xlane.f32.xlu0 %v1094
      %v1096 = vpop.xlane.xlu0 %1095
      %v1097 = vsel %vm395, %v843, 0.0
      %1098 = vadd.xlane.f32.xlu0 %v1097
      %v1099 = vpop.xlane.xlu0 %1098
      %v1100 = vsel %vm395, %v844, 0.0
      %1101 = vadd.xlane.f32.xlu0 %v1100
      %v1102 = vpop.xlane.xlu0 %1101
      %v1103 = vsel %vm395, %v845, 0.0
      %1104 = vadd.xlane.f32.xlu0 %v1103
      %v1105 = vpop.xlane.xlu0 %1104
      %v1106 = vsel %vm395, %v846, 0.0
      %1107 = vadd.xlane.f32.xlu0 %v1106
      %v1108 = vpop.xlane.xlu0 %1107
      %v1109 = vsel %vm395, %v847, 0.0
      %1110 = vadd.xlane.f32.xlu0 %v1109
      %v1111 = vpop.xlane.xlu0 %1110
      %v1112 = vsel %vm395, %v848, 0.0
      %1113 = vadd.xlane.f32.xlu0 %v1112
      %v1114 = vpop.xlane.xlu0 %1113
      %v1115 = vsel %vm395, %v849, 0.0
      %1116 = vadd.xlane.f32.xlu0 %v1115
      %v1117 = vpop.xlane.xlu0 %1116
      %v1118 = vsel %vm395, %v850, 0.0
      %1119 = vadd.xlane.f32.xlu0 %v1118
      %v1120 = vpop.xlane.xlu0 %1119
      %v1121 = vsel %vm395, %v851, 0.0
      %1122 = vadd.xlane.f32.xlu0 %v1121
      %v1123 = vpop.xlane.xlu0 %1122
      %v1124 = vsel %vm395, %v852, 0.0
      %1125 = vadd.xlane.f32.xlu0 %v1124
      %v1126 = vpop.xlane.xlu0 %1125
      %v1127 = vsel %vm395, %v853, 0.0
      %1128 = vadd.xlane.f32.xlu0 %v1127
      %v1129 = vpop.xlane.xlu0 %1128
      %v1130 = vsel %vm395, %v854, 0.0
      %1131 = vadd.xlane.f32.xlu0 %v1130
      %v1132 = vpop.xlane.xlu0 %1131
      %v1133 = vsel %vm395, %v855, 0.0
      %1134 = vadd.xlane.f32.xlu0 %v1133
      %v1135 = vpop.xlane.xlu0 %1134
      %v1136 = vsel %vm395, %v856, 0.0
      %1137 = vadd.xlane.f32.xlu0 %v1136
      %v1138 = vpop.xlane.xlu0 %1137
      %v1139 = vsel %vm395, %v857, 0.0
      %1140 = vadd.xlane.f32.xlu0 %v1139
      %v1141 = vpop.xlane.xlu0 %1140
      %v1142 = vsel %vm395, %v858, 0.0
      %1143 = vadd.xlane.f32.xlu0 %v1142
      %v1144 = vpop.xlane.xlu0 %1143
      %v1145 = vsel %vm395, %v859, 0.0
      %1146 = vadd.xlane.f32.xlu0 %v1145
      %v1147 = vpop.xlane.xlu0 %1146
      %v1148 = vsel %vm395, %v860, 0.0
      %1149 = vadd.xlane.f32.xlu0 %v1148
      %v1150 = vpop.xlane.xlu0 %1149
      %v1151 = vsel %vm395, %v861, 0.0
      %1152 = vadd.xlane.f32.xlu0 %v1151
      %v1153 = vpop.xlane.xlu0 %1152
      %v1154 = vsel %vm395, %v862, 0.0
      %1155 = vadd.xlane.f32.xlu0 %v1154
      %v1156 = vpop.xlane.xlu0 %1155
      %v1157 = vsel %vm395, %v863, 0.0
      %1158 = vadd.xlane.f32.xlu0 %v1157
      %v1159 = vpop.xlane.xlu0 %1158
      %v1160 = vsel %vm395, %v864, 0.0
      %1161 = vadd.xlane.f32.xlu0 %v1160
      %v1162 = vpop.xlane.xlu0 %1161
      %v1163 = vsel %vm395, %v865, 0.0
      %1164 = vadd.xlane.f32.xlu0 %v1163
      %v1165 = vpop.xlane.xlu0 %1164
      %v1166 = vsel %vm395, %v866, 0.0
      %1167 = vadd.xlane.f32.xlu0 %v1166
      %v1168 = vpop.xlane.xlu0 %1167
      %v1169 = vsel %vm395, %v867, 0.0
      %1170 = vadd.xlane.f32.xlu0 %v1169
      %v1171 = vpop.xlane.xlu0 %1170
      %v1172 = vsel %vm395, %v868, 0.0
      %1173 = vadd.xlane.f32.xlu0 %v1172
      %v1174 = vpop.xlane.xlu0 %1173
      %v1175 = vsel %vm395, %v869, 0.0
      %1176 = vadd.xlane.f32.xlu0 %v1175
      %v1177 = vpop.xlane.xlu0 %1176
      %v1178 = vsel %vm395, %v870, 0.0
      %1179 = vadd.xlane.f32.xlu0 %v1178
      %v1180 = vpop.xlane.xlu0 %1179
      %v1181 = vsel %vm395, %v871, 0.0
      %1182 = vadd.xlane.f32.xlu0 %v1181
      %v1183 = vpop.xlane.xlu0 %1182
      %v1184 = vsel %vm395, %v872, 0.0
      %1185 = vadd.xlane.f32.xlu0 %v1184
      %v1186 = vpop.xlane.xlu0 %1185
      %v1187 = vsel %vm395, %v873, 0.0
      %1188 = vadd.xlane.f32.xlu0 %v1187
      %v1189 = vpop.xlane.xlu0 %1188
      %v1190 = vsel %vm395, %v874, 0.0
      %1191 = vadd.xlane.f32.xlu0 %v1190
      %v1192 = vpop.xlane.xlu0 %1191
      %v1193 = vsel %vm395, %v875, 0.0
      %1194 = vadd.xlane.f32.xlu0 %v1193
      %v1195 = vpop.xlane.xlu0 %1194
      %v1196 = vsel %vm395, %v876, 0.0
      %1197 = vadd.xlane.f32.xlu0 %v1196
      %v1198 = vpop.xlane.xlu0 %1197
      %v1199 = vsel %vm395, %v877, 0.0
      %1200 = vadd.xlane.f32.xlu0 %v1199
      %v1201 = vpop.xlane.xlu0 %1200
      %v1202 = vsel %vm395, %v878, 0.0
      %1203 = vadd.xlane.f32.xlu0 %v1202
      %v1204 = vpop.xlane.xlu0 %1203
      %v1205 = vsel %vm395, %v879, 0.0
      %1206 = vadd.xlane.f32.xlu0 %v1205
      %v1207 = vpop.xlane.xlu0 %1206
      %v1208 = vsel %vm395, %v880, 0.0
      %1209 = vadd.xlane.f32.xlu0 %v1208
      %v1210 = vpop.xlane.xlu0 %1209
      %v1211 = vsel %vm395, %v881, 0.0
      %1212 = vadd.xlane.f32.xlu0 %v1211
      %v1213 = vpop.xlane.xlu0 %1212
      %v1214 = vsel %vm395, %v882, 0.0
      %1215 = vadd.xlane.f32.xlu0 %v1214
      %v1216 = vpop.xlane.xlu0 %1215
      %v1217 = vsel %vm395, %v883, 0.0
      %1218 = vadd.xlane.f32.xlu0 %v1217
      %v1219 = vpop.xlane.xlu0 %1218
      %v1220 = vsel %vm395, %v884, 0.0
      %1221 = vadd.xlane.f32.xlu0 %v1220
      %v1222 = vpop.xlane.xlu0 %1221
      %v1223 = vsel %vm395, %v885, 0.0
      %1224 = vadd.xlane.f32.xlu0 %v1223
      %v1225 = vpop.xlane.xlu0 %1224
      %v1226 = vsel %vm395, %v886, 0.0
      %1227 = vadd.xlane.f32.xlu0 %v1226
      %v1228 = vpop.xlane.xlu0 %1227
      %v1229 = vsel %vm395, %v887, 0.0
      %1230 = vadd.xlane.f32.xlu0 %v1229
      %v1231 = vpop.xlane.xlu0 %1230
      %v1232 = vsel %vm395, %v888, 0.0
      %1233 = vadd.xlane.f32.xlu0 %v1232
      %v1234 = vpop.xlane.xlu0 %1233
      %v1235 = vsel %vm395, %v889, 0.0
      %1236 = vadd.xlane.f32.xlu0 %v1235
      %v1237 = vpop.xlane.xlu0 %1236
      %v1238 = vsel %vm395, %v890, 0.0
      %1239 = vadd.xlane.f32.xlu0 %v1238
      %v1240 = vpop.xlane.xlu0 %1239
      %v1241 = vsel %vm395, %v891, 0.0
      %1242 = vadd.xlane.f32.xlu0 %v1241
      %v1243 = vpop.xlane.xlu0 %1242
      %v1244 = vsel %vm395, %v892, 0.0
      %1245 = vadd.xlane.f32.xlu0 %v1244
      %v1246 = vpop.xlane.xlu0 %1245
      %v1247 = vsel %vm395, %v893, 0.0
      %1248 = vadd.xlane.f32.xlu0 %v1247
      %v1249 = vpop.xlane.xlu0 %1248
      %v1250 = vsel %vm395, %v894, 0.0
      %1251 = vadd.xlane.f32.xlu0 %v1250
      %v1252 = vpop.xlane.xlu0 %1251
      %v1253 = vsel %vm395, %v895, 0.0
      %1254 = vadd.xlane.f32.xlu0 %v1253
      %v1255 = vpop.xlane.xlu0 %1254
      %v1256 = vsel %vm395, %v896, 0.0
      %1257 = vadd.xlane.f32.xlu0 %v1256
      %v1258 = vpop.xlane.xlu0 %1257
      %v1259 = vsel %vm395, %v897, 0.0
      %1260 = vadd.xlane.f32.xlu0 %v1259
      %v1261 = vpop.xlane.xlu0 %1260
      %v1262 = vsel %vm395, %v898, 0.0
      %1263 = vadd.xlane.f32.xlu0 %v1262
      %v1264 = vpop.xlane.xlu0 %1263
      %v1265 = vsel %vm395, %v899, 0.0
      %1266 = vadd.xlane.f32.xlu0 %v1265
      %v1267 = vpop.xlane.xlu0 %1266
      %v1268 = vsel %vm395, %v900, 0.0
      %1269 = vadd.xlane.f32.xlu0 %v1268
      %v1270 = vpop.xlane.xlu0 %1269
      %v1271 = vsel %vm395, %v901, 0.0
      %1272 = vadd.xlane.f32.xlu0 %v1271
      %v1273 = vpop.xlane.xlu0 %1272
      %v1274 = vsel %vm395, %v902, 0.0
      %1275 = vadd.xlane.f32.xlu0 %v1274
      %v1276 = vpop.xlane.xlu0 %1275
      %v1277 = vsel %vm395, %v903, 0.0
      %1278 = vadd.xlane.f32.xlu0 %v1277
      %v1279 = vpop.xlane.xlu0 %1278
      %v1280 = vsel %vm395, %v904, 0.0
      %1281 = vadd.xlane.f32.xlu0 %v1280
      %v1282 = vpop.xlane.xlu0 %1281
      %v1283 = vsel %vm395, %v905, 0.0
      %1284 = vadd.xlane.f32.xlu0 %v1283
      %v1285 = vpop.xlane.xlu0 %1284
      %v1286 = vsel %vm395, %v906, 0.0
      %1287 = vadd.xlane.f32.xlu0 %v1286
      %v1288 = vpop.xlane.xlu0 %1287
      %v1289 = vsel %vm395, %v907, 0.0
      %1290 = vadd.xlane.f32.xlu0 %v1289
      %v1291 = vpop.xlane.xlu0 %1290
      %v1292 = vmul.f32 %v398, 0.020408163
      %v1293 = vmul.f32 %v401, 0.020408163
      %v1294 = vmul.f32 %v404, 0.020408163
      %v1295 = vmul.f32 %v407, 0.020408163
      %v1296 = vmul.f32 %v410, 0.020408163
      %v1297 = vmul.f32 %v413, 0.020408163
      %v1298 = vmul.f32 %v416, 0.020408163
      %v1299 = vmul.f32 %v419, 0.020408163
      %v1300 = vmul.f32 %v422, 0.020408163
      %v1301 = vmul.f32 %v425, 0.020408163
      %v1302 = vmul.f32 %v428, 0.020408163
      %v1303 = vmul.f32 %v431, 0.020408163
      %v1304 = vmul.f32 %v434, 0.020408163
      %v1305 = vmul.f32 %v437, 0.020408163
      %v1306 = vmul.f32 %v440, 0.020408163
      %v1307 = vmul.f32 %v443, 0.020408163
      %v1308 = vmul.f32 %v446, 0.020408163
      %v1309 = vmul.f32 %v449, 0.020408163
      %v1310 = vmul.f32 %v452, 0.020408163
      %v1311 = vmul.f32 %v455, 0.020408163
      %v1312 = vmul.f32 %v458, 0.020408163
      %v1313 = vmul.f32 %v461, 0.020408163
      %v1314 = vmul.f32 %v464, 0.020408163
      %v1315 = vmul.f32 %v467, 0.020408163
      %v1316 = vmul.f32 %v470, 0.020408163
      %v1317 = vmul.f32 %v473, 0.020408163
      %v1318 = vmul.f32 %v476, 0.020408163
      %v1319 = vmul.f32 %v479, 0.020408163
      %v1320 = vmul.f32 %v482, 0.020408163
      %v1321 = vmul.f32 %v485, 0.020408163
      %v1322 = vmul.f32 %v488, 0.020408163
      %v1323 = vmul.f32 %v491, 0.020408163
      %v1324 = vmul.f32 %v494, 0.020408163
      %v1325 = vmul.f32 %v497, 0.020408163
      %v1326 = vmul.f32 %v500, 0.020408163
      %v1327 = vmul.f32 %v503, 0.020408163
      %v1328 = vmul.f32 %v506, 0.020408163
      %v1329 = vmul.f32 %v509, 0.020408163
      %v1330 = vmul.f32 %v512, 0.020408163
      %v1331 = vmul.f32 %v515, 0.020408163
      %v1332 = vmul.f32 %v518, 0.020408163
      %v1333 = vmul.f32 %v521, 0.020408163
      %v1334 = vmul.f32 %v524, 0.020408163
      %v1335 = vmul.f32 %v527, 0.020408163
      %v1336 = vmul.f32 %v530, 0.020408163
      %v1337 = vmul.f32 %v533, 0.020408163
      %v1338 = vmul.f32 %v536, 0.020408163
      %v1339 = vmul.f32 %v539, 0.020408163
      %v1340 = vmul.f32 %v542, 0.020408163
      %v1341 = vmul.f32 %v545, 0.020408163
      %v1342 = vmul.f32 %v548, 0.020408163
      %v1343 = vmul.f32 %v551, 0.020408163
      %v1344 = vmul.f32 %v554, 0.020408163
      %v1345 = vmul.f32 %v557, 0.020408163
      %v1346 = vmul.f32 %v560, 0.020408163
      %v1347 = vmul.f32 %v563, 0.020408163
      %v1348 = vmul.f32 %v566, 0.020408163
      %v1349 = vmul.f32 %v569, 0.020408163
      %v1350 = vmul.f32 %v572, 0.020408163
      %v1351 = vmul.f32 %v575, 0.020408163
      %v1352 = vmul.f32 %v578, 0.020408163
      %v1353 = vmul.f32 %v581, 0.020408163
      %v1354 = vmul.f32 %v584, 0.020408163
      %v1355 = vmul.f32 %v587, 0.020408163
      %v1356 = vmul.f32 %v590, 0.020408163
      %v1357 = vmul.f32 %v593, 0.020408163
      %v1358 = vmul.f32 %v596, 0.020408163
      %v1359 = vmul.f32 %v599, 0.020408163
      %v1360 = vmul.f32 %v602, 0.020408163
      %v1361 = vmul.f32 %v605, 0.020408163
      %v1362 = vmul.f32 %v608, 0.020408163
      %v1363 = vmul.f32 %v611, 0.020408163
      %v1364 = vmul.f32 %v614, 0.020408163
      %v1365 = vmul.f32 %v617, 0.020408163
      %v1366 = vmul.f32 %v620, 0.020408163
      %v1367 = vmul.f32 %v623, 0.020408163
      %v1368 = vmul.f32 %v626, 0.020408163
      %v1369 = vmul.f32 %v629, 0.020408163
      %v1370 = vmul.f32 %v632, 0.020408163
      %v1371 = vmul.f32 %v635, 0.020408163
      %v1372 = vmul.f32 %v638, 0.020408163
      %v1373 = vmul.f32 %v641, 0.020408163
      %v1374 = vmul.f32 %v644, 0.020408163
      %v1375 = vmul.f32 %v647, 0.020408163
      %v1376 = vmul.f32 %v650, 0.020408163
      %v1377 = vmul.f32 %v653, 0.020408163
      %v1378 = vmul.f32 %v656, 0.020408163
      %v1379 = vmul.f32 %v659, 0.020408163
      %v1380 = vmul.f32 %v662, 0.020408163
      %v1381 = vmul.f32 %v665, 0.020408163
      %v1382 = vmul.f32 %v668, 0.020408163
      %v1383 = vmul.f32 %v671, 0.020408163
      %v1384 = vmul.f32 %v674, 0.020408163
      %v1385 = vmul.f32 %v677, 0.020408163
      %v1386 = vmul.f32 %v680, 0.020408163
      %v1387 = vmul.f32 %v683, 0.020408163
      %v1388 = vmul.f32 %v686, 0.020408163
      %v1389 = vmul.f32 %v689, 0.020408163
      %v1390 = vmul.f32 %v692, 0.020408163
      %v1391 = vmul.f32 %v695, 0.020408163
      %v1392 = vmul.f32 %v698, 0.020408163
      %v1393 = vmul.f32 %v701, 0.020408163
      %v1394 = vmul.f32 %v704, 0.020408163
      %v1395 = vmul.f32 %v707, 0.020408163
      %v1396 = vmul.f32 %v710, 0.020408163
      %v1397 = vmul.f32 %v713, 0.020408163
      %v1398 = vmul.f32 %v716, 0.020408163
      %v1399 = vmul.f32 %v719, 0.020408163
      %v1400 = vmul.f32 %v722, 0.020408163
      %v1401 = vmul.f32 %v725, 0.020408163
      %v1402 = vmul.f32 %v728, 0.020408163
      %v1403 = vmul.f32 %v731, 0.020408163
      %v1404 = vmul.f32 %v734, 0.020408163
      %v1405 = vmul.f32 %v737, 0.020408163
      %v1406 = vmul.f32 %v740, 0.020408163
      %v1407 = vmul.f32 %v743, 0.020408163
      %v1408 = vmul.f32 %v746, 0.020408163
      %v1409 = vmul.f32 %v749, 0.020408163
      %v1410 = vmul.f32 %v752, 0.020408163
      %v1411 = vmul.f32 %v755, 0.020408163
      %v1412 = vmul.f32 %v758, 0.020408163
      %v1413 = vmul.f32 %v761, 0.020408163
      %v1414 = vmul.f32 %v764, 0.020408163
      %v1415 = vmul.f32 %v767, 0.020408163
      %v1416 = vmul.f32 %v770, 0.020408163
      %v1417 = vmul.f32 %v773, 0.020408163
      %v1418 = vmul.f32 %v776, 0.020408163
      %v1419 = vmul.f32 %v779, 0.020408163
      %v1420 = vmul.f32 %v910, 0.020408163
      %v1421 = vmul.f32 %v913, 0.020408163
      %v1422 = vmul.f32 %v916, 0.020408163
      %v1423 = vmul.f32 %v919, 0.020408163
      %v1424 = vmul.f32 %v922, 0.020408163
      %v1425 = vmul.f32 %v925, 0.020408163
      %v1426 = vmul.f32 %v928, 0.020408163
      %v1427 = vmul.f32 %v931, 0.020408163
      %v1428 = vmul.f32 %v934, 0.020408163
      %v1429 = vmul.f32 %v937, 0.020408163
      %v1430 = vmul.f32 %v940, 0.020408163
      %v1431 = vmul.f32 %v943, 0.020408163
      %v1432 = vmul.f32 %v946, 0.020408163
      %v1433 = vmul.f32 %v949, 0.020408163
      %v1434 = vmul.f32 %v952, 0.020408163
      %v1435 = vmul.f32 %v955, 0.020408163
      %v1436 = vmul.f32 %v958, 0.020408163
      %v1437 = vmul.f32 %v961, 0.020408163
      %v1438 = vmul.f32 %v964, 0.020408163
      %v1439 = vmul.f32 %v967, 0.020408163
      %v1440 = vmul.f32 %v970, 0.020408163
      %v1441 = vmul.f32 %v973, 0.020408163
      %v1442 = vmul.f32 %v976, 0.020408163
      %v1443 = vmul.f32 %v979, 0.020408163
      %v1444 = vmul.f32 %v982, 0.020408163
      %v1445 = vmul.f32 %v985, 0.020408163
      %v1446 = vmul.f32 %v988, 0.020408163
      %v1447 = vmul.f32 %v991, 0.020408163
      %v1448 = vmul.f32 %v994, 0.020408163
      %v1449 = vmul.f32 %v997, 0.020408163
      %v1450 = vmul.f32 %v1000, 0.020408163
      %v1451 = vmul.f32 %v1003, 0.020408163
      %v1452 = vmul.f32 %v1006, 0.020408163
      %v1453 = vmul.f32 %v1009, 0.020408163
      %v1454 = vmul.f32 %v1012, 0.020408163
      %v1455 = vmul.f32 %v1015, 0.020408163
      %v1456 = vmul.f32 %v1018, 0.020408163
      %v1457 = vmul.f32 %v1021, 0.020408163
      %v1458 = vmul.f32 %v1024, 0.020408163
      %v1459 = vmul.f32 %v1027, 0.020408163
      %v1460 = vmul.f32 %v1030, 0.020408163
      %v1461 = vmul.f32 %v1033, 0.020408163
      %v1462 = vmul.f32 %v1036, 0.020408163
      %v1463 = vmul.f32 %v1039, 0.020408163
      %v1464 = vmul.f32 %v1042, 0.020408163
      %v1465 = vmul.f32 %v1045, 0.020408163
      %v1466 = vmul.f32 %v1048, 0.020408163
      %v1467 = vmul.f32 %v1051, 0.020408163
      %v1468 = vmul.f32 %v1054, 0.020408163
      %v1469 = vmul.f32 %v1057, 0.020408163
      %v1470 = vmul.f32 %v1060, 0.020408163
      %v1471 = vmul.f32 %v1063, 0.020408163
      %v1472 = vmul.f32 %v1066, 0.020408163
      %v1473 = vmul.f32 %v1069, 0.020408163
      %v1474 = vmul.f32 %v1072, 0.020408163
      %v1475 = vmul.f32 %v1075, 0.020408163
      %v1476 = vmul.f32 %v1078, 0.020408163
      %v1477 = vmul.f32 %v1081, 0.020408163
      %v1478 = vmul.f32 %v1084, 0.020408163
      %v1479 = vmul.f32 %v1087, 0.020408163
      %v1480 = vmul.f32 %v1090, 0.020408163
      %v1481 = vmul.f32 %v1093, 0.020408163
      %v1482 = vmul.f32 %v1096, 0.020408163
      %v1483 = vmul.f32 %v1099, 0.020408163
      %v1484 = vmul.f32 %v1102, 0.020408163
      %v1485 = vmul.f32 %v1105, 0.020408163
      %v1486 = vmul.f32 %v1108, 0.020408163
      %v1487 = vmul.f32 %v1111, 0.020408163
      %v1488 = vmul.f32 %v1114, 0.020408163
      %v1489 = vmul.f32 %v1117, 0.020408163
      %v1490 = vmul.f32 %v1120, 0.020408163
      %v1491 = vmul.f32 %v1123, 0.020408163
      %v1492 = vmul.f32 %v1126, 0.020408163
      %v1493 = vmul.f32 %v1129, 0.020408163
      %v1494 = vmul.f32 %v1132, 0.020408163
      %v1495 = vmul.f32 %v1135, 0.020408163
      %v1496 = vmul.f32 %v1138, 0.020408163
      %v1497 = vmul.f32 %v1141, 0.020408163
      %v1498 = vmul.f32 %v1144, 0.020408163
      %v1499 = vmul.f32 %v1147, 0.020408163
      %v1500 = vmul.f32 %v1150, 0.020408163
      %v1501 = vmul.f32 %v1153, 0.020408163
      %v1502 = vmul.f32 %v1156, 0.020408163
      %v1503 = vmul.f32 %v1159, 0.020408163
      %v1504 = vmul.f32 %v1162, 0.020408163
      %v1505 = vmul.f32 %v1165, 0.020408163
      %v1506 = vmul.f32 %v1168, 0.020408163
      %v1507 = vmul.f32 %v1171, 0.020408163
      %v1508 = vmul.f32 %v1174, 0.020408163
      %v1509 = vmul.f32 %v1177, 0.020408163
      %v1510 = vmul.f32 %v1180, 0.020408163
      %v1511 = vmul.f32 %v1183, 0.020408163
      %v1512 = vmul.f32 %v1186, 0.020408163
      %v1513 = vmul.f32 %v1189, 0.020408163
      %v1514 = vmul.f32 %v1192, 0.020408163
      %v1515 = vmul.f32 %v1195, 0.020408163
      %v1516 = vmul.f32 %v1198, 0.020408163
      %v1517 = vmul.f32 %v1201, 0.020408163
      %v1518 = vmul.f32 %v1204, 0.020408163
      %v1519 = vmul.f32 %v1207, 0.020408163
      %v1520 = vmul.f32 %v1210, 0.020408163
      %v1521 = vmul.f32 %v1213, 0.020408163
      %v1522 = vmul.f32 %v1216, 0.020408163
      %v1523 = vmul.f32 %v1219, 0.020408163
      %v1524 = vmul.f32 %v1222, 0.020408163
      %v1525 = vmul.f32 %v1225, 0.020408163
      %v1526 = vmul.f32 %v1228, 0.020408163
      %v1527 = vmul.f32 %v1231, 0.020408163
      %v1528 = vmul.f32 %v1234, 0.020408163
      %v1529 = vmul.f32 %v1237, 0.020408163
      %v1530 = vmul.f32 %v1240, 0.020408163
      %v1531 = vmul.f32 %v1243, 0.020408163
      %v1532 = vmul.f32 %v1246, 0.020408163
      %v1533 = vmul.f32 %v1249, 0.020408163
      %v1534 = vmul.f32 %v1252, 0.020408163
      %v1535 = vmul.f32 %v1255, 0.020408163
      %v1536 = vmul.f32 %v1258, 0.020408163
      %v1537 = vmul.f32 %v1261, 0.020408163
      %v1538 = vmul.f32 %v1264, 0.020408163
      %v1539 = vmul.f32 %v1267, 0.020408163
      %v1540 = vmul.f32 %v1270, 0.020408163
      %v1541 = vmul.f32 %v1273, 0.020408163
      %v1542 = vmul.f32 %v1276, 0.020408163
      %v1543 = vmul.f32 %v1279, 0.020408163
      %v1544 = vmul.f32 %v1282, 0.020408163
      %v1545 = vmul.f32 %v1285, 0.020408163
      %v1546 = vmul.f32 %v1288, 0.020408163
      %v1547 = vmul.f32 %v1291, 0.020408163
      %v1548 = vmul.f32 %v1292, %v1292
      %v1549 = vmul.f32 %v1293, %v1293
      %v1550 = vmul.f32 %v1294, %v1294
      %v1551 = vmul.f32 %v1295, %v1295
      %v1552 = vmul.f32 %v1296, %v1296
      %v1553 = vmul.f32 %v1297, %v1297
      %v1554 = vmul.f32 %v1298, %v1298
      %v1555 = vmul.f32 %v1299, %v1299
      %v1556 = vmul.f32 %v1300, %v1300
      %v1557 = vmul.f32 %v1301, %v1301
      %v1558 = vmul.f32 %v1302, %v1302
      %v1559 = vmul.f32 %v1303, %v1303
      %v1560 = vmul.f32 %v1304, %v1304
      %v1561 = vmul.f32 %v1305, %v1305
      %v1562 = vmul.f32 %v1306, %v1306
      %v1563 = vmul.f32 %v1307, %v1307
      %v1564 = vmul.f32 %v1308, %v1308
      %v1565 = vmul.f32 %v1309, %v1309
      %v1566 = vmul.f32 %v1310, %v1310
      %v1567 = vmul.f32 %v1311, %v1311
      %v1568 = vmul.f32 %v1312, %v1312
      %v1569 = vmul.f32 %v1313, %v1313
      %v1570 = vmul.f32 %v1314, %v1314
      %v1571 = vmul.f32 %v1315, %v1315
      %v1572 = vmul.f32 %v1316, %v1316
      %v1573 = vmul.f32 %v1317, %v1317
      %v1574 = vmul.f32 %v1318, %v1318
      %v1575 = vmul.f32 %v1319, %v1319
      %v1576 = vmul.f32 %v1320, %v1320
      %v1577 = vmul.f32 %v1321, %v1321
      %v1578 = vmul.f32 %v1322, %v1322
      %v1579 = vmul.f32 %v1323, %v1323
      %v1580 = vmul.f32 %v1324, %v1324
      %v1581 = vmul.f32 %v1325, %v1325
      %v1582 = vmul.f32 %v1326, %v1326
      %v1583 = vmul.f32 %v1327, %v1327
      %v1584 = vmul.f32 %v1328, %v1328
      %v1585 = vmul.f32 %v1329, %v1329
      %v1586 = vmul.f32 %v1330, %v1330
      %v1587 = vmul.f32 %v1331, %v1331
      %v1588 = vmul.f32 %v1332, %v1332
      %v1589 = vmul.f32 %v1333, %v1333
      %v1590 = vmul.f32 %v1334, %v1334
      %v1591 = vmul.f32 %v1335, %v1335
      %v1592 = vmul.f32 %v1336, %v1336
      %v1593 = vmul.f32 %v1337, %v1337
      %v1594 = vmul.f32 %v1338, %v1338
      %v1595 = vmul.f32 %v1339, %v1339
      %v1596 = vmul.f32 %v1340, %v1340
      %v1597 = vmul.f32 %v1341, %v1341
      %v1598 = vmul.f32 %v1342, %v1342
      %v1599 = vmul.f32 %v1343, %v1343
      %v1600 = vmul.f32 %v1344, %v1344
      %v1601 = vmul.f32 %v1345, %v1345
      %v1602 = vmul.f32 %v1346, %v1346
      %v1603 = vmul.f32 %v1347, %v1347
      %v1604 = vmul.f32 %v1348, %v1348
      %v1605 = vmul.f32 %v1349, %v1349
      %v1606 = vmul.f32 %v1350, %v1350
      %v1607 = vmul.f32 %v1351, %v1351
      %v1608 = vmul.f32 %v1352, %v1352
      %v1609 = vmul.f32 %v1353, %v1353
      %v1610 = vmul.f32 %v1354, %v1354
      %v1611 = vmul.f32 %v1355, %v1355
      %v1612 = vmul.f32 %v1356, %v1356
      %v1613 = vmul.f32 %v1357, %v1357
      %v1614 = vmul.f32 %v1358, %v1358
      %v1615 = vmul.f32 %v1359, %v1359
      %v1616 = vmul.f32 %v1360, %v1360
      %v1617 = vmul.f32 %v1361, %v1361
      %v1618 = vmul.f32 %v1362, %v1362
      %v1619 = vmul.f32 %v1363, %v1363
      %v1620 = vmul.f32 %v1364, %v1364
      %v1621 = vmul.f32 %v1365, %v1365
      %v1622 = vmul.f32 %v1366, %v1366
      %v1623 = vmul.f32 %v1367, %v1367
      %v1624 = vmul.f32 %v1368, %v1368
      %v1625 = vmul.f32 %v1369, %v1369
      %v1626 = vmul.f32 %v1370, %v1370
      %v1627 = vmul.f32 %v1371, %v1371
      %v1628 = vmul.f32 %v1372, %v1372
      %v1629 = vmul.f32 %v1373, %v1373
      %v1630 = vmul.f32 %v1374, %v1374
      %v1631 = vmul.f32 %v1375, %v1375
      %v1632 = vmul.f32 %v1376, %v1376
      %v1633 = vmul.f32 %v1377, %v1377
      %v1634 = vmul.f32 %v1378, %v1378
      %v1635 = vmul.f32 %v1379, %v1379
      %v1636 = vmul.f32 %v1380, %v1380
      %v1637 = vmul.f32 %v1381, %v1381
      %v1638 = vmul.f32 %v1382, %v1382
      %v1639 = vmul.f32 %v1383, %v1383
      %v1640 = vmul.f32 %v1384, %v1384
      %v1641 = vmul.f32 %v1385, %v1385
      %v1642 = vmul.f32 %v1386, %v1386
      %v1643 = vmul.f32 %v1387, %v1387
      %v1644 = vmul.f32 %v1388, %v1388
      %v1645 = vmul.f32 %v1389, %v1389
      %v1646 = vmul.f32 %v1390, %v1390
      %v1647 = vmul.f32 %v1391, %v1391
      %v1648 = vmul.f32 %v1392, %v1392
      %v1649 = vmul.f32 %v1393, %v1393
      %v1650 = vmul.f32 %v1394, %v1394
      %v1651 = vmul.f32 %v1395, %v1395
      %v1652 = vmul.f32 %v1396, %v1396
      %v1653 = vmul.f32 %v1397, %v1397
      %v1654 = vmul.f32 %v1398, %v1398
      %v1655 = vmul.f32 %v1399, %v1399
      %v1656 = vmul.f32 %v1400, %v1400
      %v1657 = vmul.f32 %v1401, %v1401
      %v1658 = vmul.f32 %v1402, %v1402
      %v1659 = vmul.f32 %v1403, %v1403
      %v1660 = vmul.f32 %v1404, %v1404
      %v1661 = vmul.f32 %v1405, %v1405
      %v1662 = vmul.f32 %v1406, %v1406
      %v1663 = vmul.f32 %v1407, %v1407
      %v1664 = vmul.f32 %v1408, %v1408
      %v1665 = vmul.f32 %v1409, %v1409
      %v1666 = vmul.f32 %v1410, %v1410
      %v1667 = vmul.f32 %v1411, %v1411
      %v1668 = vmul.f32 %v1412, %v1412
      %v1669 = vmul.f32 %v1413, %v1413
      %v1670 = vmul.f32 %v1414, %v1414
      %v1671 = vmul.f32 %v1415, %v1415
      %v1672 = vmul.f32 %v1416, %v1416
      %v1673 = vmul.f32 %v1417, %v1417
      %v1674 = vmul.f32 %v1418, %v1418
      %v1675 = vmul.f32 %v1419, %v1419
      %v1676 = vsub.f32 %v1420, %v1548
      %v1677 = vsub.f32 %v1421, %v1549
      %v1678 = vsub.f32 %v1422, %v1550
      %v1679 = vsub.f32 %v1423, %v1551
      %v1680 = vsub.f32 %v1424, %v1552
      %v1681 = vsub.f32 %v1425, %v1553
      %v1682 = vsub.f32 %v1426, %v1554
      %v1683 = vsub.f32 %v1427, %v1555
      %v1684 = vsub.f32 %v1428, %v1556
      %v1685 = vsub.f32 %v1429, %v1557
      %v1686 = vsub.f32 %v1430, %v1558
      %v1687 = vsub.f32 %v1431, %v1559
      %v1688 = vsub.f32 %v1432, %v1560
      %v1689 = vsub.f32 %v1433, %v1561
      %v1690 = vsub.f32 %v1434, %v1562
      %v1691 = vsub.f32 %v1435, %v1563
      %v1692 = vsub.f32 %v1436, %v1564
      %v1693 = vsub.f32 %v1437, %v1565
      %v1694 = vsub.f32 %v1438, %v1566
      %v1695 = vsub.f32 %v1439, %v1567
      %v1696 = vsub.f32 %v1440, %v1568
      %v1697 = vsub.f32 %v1441, %v1569
      %v1698 = vsub.f32 %v1442, %v1570
      %v1699 = vsub.f32 %v1443, %v1571
      %v1700 = vsub.f32 %v1444, %v1572
      %v1701 = vsub.f32 %v1445, %v1573
      %v1702 = vsub.f32 %v1446, %v1574
      %v1703 = vsub.f32 %v1447, %v1575
      %v1704 = vsub.f32 %v1448, %v1576
      %v1705 = vsub.f32 %v1449, %v1577
      %v1706 = vsub.f32 %v1450, %v1578
      %v1707 = vsub.f32 %v1451, %v1579
      %v1708 = vsub.f32 %v1452, %v1580
      %v1709 = vsub.f32 %v1453, %v1581
      %v1710 = vsub.f32 %v1454, %v1582
      %v1711 = vsub.f32 %v1455, %v1583
      %v1712 = vsub.f32 %v1456, %v1584
      %v1713 = vsub.f32 %v1457, %v1585
      %v1714 = vsub.f32 %v1458, %v1586
      %v1715 = vsub.f32 %v1459, %v1587
      %v1716 = vsub.f32 %v1460, %v1588
      %v1717 = vsub.f32 %v1461, %v1589
      %v1718 = vsub.f32 %v1462, %v1590
      %v1719 = vsub.f32 %v1463, %v1591
      %v1720 = vsub.f32 %v1464, %v1592
      %v1721 = vsub.f32 %v1465, %v1593
      %v1722 = vsub.f32 %v1466, %v1594
      %v1723 = vsub.f32 %v1467, %v1595
      %v1724 = vsub.f32 %v1468, %v1596
      %v1725 = vsub.f32 %v1469, %v1597
      %v1726 = vsub.f32 %v1470, %v1598
      %v1727 = vsub.f32 %v1471, %v1599
      %v1728 = vsub.f32 %v1472, %v1600
      %v1729 = vsub.f32 %v1473, %v1601
      %v1730 = vsub.f32 %v1474, %v1602
      %v1731 = vsub.f32 %v1475, %v1603
      %v1732 = vsub.f32 %v1476, %v1604
      %v1733 = vsub.f32 %v1477, %v1605
      %v1734 = vsub.f32 %v1478, %v1606
      %v1735 = vsub.f32 %v1479, %v1607
      %v1736 = vsub.f32 %v1480, %v1608
      %v1737 = vsub.f32 %v1481, %v1609
      %v1738 = vsub.f32 %v1482, %v1610
      %v1739 = vsub.f32 %v1483, %v1611
      %v1740 = vsub.f32 %v1484, %v1612
      %v1741 = vsub.f32 %v1485, %v1613
      %v1742 = vsub.f32 %v1486, %v1614
      %v1743 = vsub.f32 %v1487, %v1615
      %v1744 = vsub.f32 %v1488, %v1616
      %v1745 = vsub.f32 %v1489, %v1617
      %v1746 = vsub.f32 %v1490, %v1618
      %v1747 = vsub.f32 %v1491, %v1619
      %v1748 = vsub.f32 %v1492, %v1620
      %v1749 = vsub.f32 %v1493, %v1621
      %v1750 = vsub.f32 %v1494, %v1622
      %v1751 = vsub.f32 %v1495, %v1623
      %v1752 = vsub.f32 %v1496, %v1624
      %v1753 = vsub.f32 %v1497, %v1625
      %v1754 = vsub.f32 %v1498, %v1626
      %v1755 = vsub.f32 %v1499, %v1627
      %v1756 = vsub.f32 %v1500, %v1628
      %v1757 = vsub.f32 %v1501, %v1629
      %v1758 = vsub.f32 %v1502, %v1630
      %v1759 = vsub.f32 %v1503, %v1631
      %v1760 = vsub.f32 %v1504, %v1632
      %v1761 = vsub.f32 %v1505, %v1633
      %v1762 = vsub.f32 %v1506, %v1634
      %v1763 = vsub.f32 %v1507, %v1635
      %v1764 = vsub.f32 %v1508, %v1636
      %v1765 = vsub.f32 %v1509, %v1637
      %v1766 = vsub.f32 %v1510, %v1638
      %v1767 = vsub.f32 %v1511, %v1639
      %v1768 = vsub.f32 %v1512, %v1640
      %v1769 = vsub.f32 %v1513, %v1641
      %v1770 = vsub.f32 %v1514, %v1642
      %v1771 = vsub.f32 %v1515, %v1643
      %v1772 = vsub.f32 %v1516, %v1644
      %v1773 = vsub.f32 %v1517, %v1645
      %v1774 = vsub.f32 %v1518, %v1646
      %v1775 = vsub.f32 %v1519, %v1647
      %v1776 = vsub.f32 %v1520, %v1648
      %v1777 = vsub.f32 %v1521, %v1649
      %v1778 = vsub.f32 %v1522, %v1650
      %v1779 = vsub.f32 %v1523, %v1651
      %v1780 = vsub.f32 %v1524, %v1652
      %v1781 = vsub.f32 %v1525, %v1653
      %v1782 = vsub.f32 %v1526, %v1654
      %v1783 = vsub.f32 %v1527, %v1655
      %v1784 = vsub.f32 %v1528, %v1656
      %v1785 = vsub.f32 %v1529, %v1657
      %v1786 = vsub.f32 %v1530, %v1658
      %v1787 = vsub.f32 %v1531, %v1659
      %v1788 = vsub.f32 %v1532, %v1660
      %v1789 = vsub.f32 %v1533, %v1661
      %v1790 = vsub.f32 %v1534, %v1662
      %v1791 = vsub.f32 %v1535, %v1663
      %v1792 = vsub.f32 %v1536, %v1664
      %v1793 = vsub.f32 %v1537, %v1665
      %v1794 = vsub.f32 %v1538, %v1666
      %v1795 = vsub.f32 %v1539, %v1667
      %v1796 = vsub.f32 %v1540, %v1668
      %v1797 = vsub.f32 %v1541, %v1669
      %v1798 = vsub.f32 %v1542, %v1670
      %v1799 = vsub.f32 %v1543, %v1671
      %v1800 = vsub.f32 %v1544, %v1672
      %v1801 = vsub.f32 %v1545, %v1673
      %v1802 = vsub.f32 %v1546, %v1674
      %v1803 = vsub.f32 %v1547, %v1675
      %v1804 = vadd.f32 %v1676, 1e-05
      %v1805 = vadd.f32 %v1677, 1e-05
      %v1806 = vadd.f32 %v1678, 1e-05
      %v1807 = vadd.f32 %v1679, 1e-05
      %v1808 = vadd.f32 %v1680, 1e-05
      %v1809 = vadd.f32 %v1681, 1e-05
      %v1810 = vadd.f32 %v1682, 1e-05
      %v1811 = vadd.f32 %v1683, 1e-05
      %v1812 = vadd.f32 %v1684, 1e-05
      %v1813 = vadd.f32 %v1685, 1e-05
      %v1814 = vadd.f32 %v1686, 1e-05
      %v1815 = vadd.f32 %v1687, 1e-05
      %v1816 = vadd.f32 %v1688, 1e-05
      %v1817 = vadd.f32 %v1689, 1e-05
      %v1818 = vadd.f32 %v1690, 1e-05
      %v1819 = vadd.f32 %v1691, 1e-05
      %v1820 = vadd.f32 %v1692, 1e-05
      %v1821 = vadd.f32 %v1693, 1e-05
      %v1822 = vadd.f32 %v1694, 1e-05
      %v1823 = vadd.f32 %v1695, 1e-05
      %v1824 = vadd.f32 %v1696, 1e-05
      %v1825 = vadd.f32 %v1697, 1e-05
      %v1826 = vadd.f32 %v1698, 1e-05
      %v1827 = vadd.f32 %v1699, 1e-05
      %v1828 = vadd.f32 %v1700, 1e-05
      %v1829 = vadd.f32 %v1701, 1e-05
      %v1830 = vadd.f32 %v1702, 1e-05
      %v1831 = vadd.f32 %v1703, 1e-05
      %v1832 = vadd.f32 %v1704, 1e-05
      %v1833 = vadd.f32 %v1705, 1e-05
      %v1834 = vadd.f32 %v1706, 1e-05
      %v1835 = vadd.f32 %v1707, 1e-05
      %v1836 = vadd.f32 %v1708, 1e-05
      %v1837 = vadd.f32 %v1709, 1e-05
      %v1838 = vadd.f32 %v1710, 1e-05
      %v1839 = vadd.f32 %v1711, 1e-05
      %v1840 = vadd.f32 %v1712, 1e-05
      %v1841 = vadd.f32 %v1713, 1e-05
      %v1842 = vadd.f32 %v1714, 1e-05
      %v1843 = vadd.f32 %v1715, 1e-05
      %v1844 = vadd.f32 %v1716, 1e-05
      %v1845 = vadd.f32 %v1717, 1e-05
      %v1846 = vadd.f32 %v1718, 1e-05
      %v1847 = vadd.f32 %v1719, 1e-05
      %v1848 = vadd.f32 %v1720, 1e-05
      %v1849 = vadd.f32 %v1721, 1e-05
      %v1850 = vadd.f32 %v1722, 1e-05
      %v1851 = vadd.f32 %v1723, 1e-05
      %v1852 = vadd.f32 %v1724, 1e-05
      %v1853 = vadd.f32 %v1725, 1e-05
      %v1854 = vadd.f32 %v1726, 1e-05
      %v1855 = vadd.f32 %v1727, 1e-05
      %v1856 = vadd.f32 %v1728, 1e-05
      %v1857 = vadd.f32 %v1729, 1e-05
      %v1858 = vadd.f32 %v1730, 1e-05
      %v1859 = vadd.f32 %v1731, 1e-05
      %v1860 = vadd.f32 %v1732, 1e-05
      %v1861 = vadd.f32 %v1733, 1e-05
      %v1862 = vadd.f32 %v1734, 1e-05
      %v1863 = vadd.f32 %v1735, 1e-05
      %v1864 = vadd.f32 %v1736, 1e-05
      %v1865 = vadd.f32 %v1737, 1e-05
      %v1866 = vadd.f32 %v1738, 1e-05
      %v1867 = vadd.f32 %v1739, 1e-05
      %v1868 = vadd.f32 %v1740, 1e-05
      %v1869 = vadd.f32 %v1741, 1e-05
      %v1870 = vadd.f32 %v1742, 1e-05
      %v1871 = vadd.f32 %v1743, 1e-05
      %v1872 = vadd.f32 %v1744, 1e-05
      %v1873 = vadd.f32 %v1745, 1e-05
      %v1874 = vadd.f32 %v1746, 1e-05
      %v1875 = vadd.f32 %v1747, 1e-05
      %v1876 = vadd.f32 %v1748, 1e-05
      %v1877 = vadd.f32 %v1749, 1e-05
      %v1878 = vadd.f32 %v1750, 1e-05
      %v1879 = vadd.f32 %v1751, 1e-05
      %v1880 = vadd.f32 %v1752, 1e-05
      %v1881 = vadd.f32 %v1753, 1e-05
      %v1882 = vadd.f32 %v1754, 1e-05
      %v1883 = vadd.f32 %v1755, 1e-05
      %v1884 = vadd.f32 %v1756, 1e-05
      %v1885 = vadd.f32 %v1757, 1e-05
      %v1886 = vadd.f32 %v1758, 1e-05
      %v1887 = vadd.f32 %v1759, 1e-05
      %v1888 = vadd.f32 %v1760, 1e-05
      %v1889 = vadd.f32 %v1761, 1e-05
      %v1890 = vadd.f32 %v1762, 1e-05
      %v1891 = vadd.f32 %v1763, 1e-05
      %v1892 = vadd.f32 %v1764, 1e-05
      %v1893 = vadd.f32 %v1765, 1e-05
      %v1894 = vadd.f32 %v1766, 1e-05
      %v1895 = vadd.f32 %v1767, 1e-05
      %v1896 = vadd.f32 %v1768, 1e-05
      %v1897 = vadd.f32 %v1769, 1e-05
      %v1898 = vadd.f32 %v1770, 1e-05
      %v1899 = vadd.f32 %v1771, 1e-05
      %v1900 = vadd.f32 %v1772, 1e-05
      %v1901 = vadd.f32 %v1773, 1e-05
      %v1902 = vadd.f32 %v1774, 1e-05
      %v1903 = vadd.f32 %v1775, 1e-05
      %v1904 = vadd.f32 %v1776, 1e-05
      %v1905 = vadd.f32 %v1777, 1e-05
      %v1906 = vadd.f32 %v1778, 1e-05
      %v1907 = vadd.f32 %v1779, 1e-05
      %v1908 = vadd.f32 %v1780, 1e-05
      %v1909 = vadd.f32 %v1781, 1e-05
      %v1910 = vadd.f32 %v1782, 1e-05
      %v1911 = vadd.f32 %v1783, 1e-05
      %v1912 = vadd.f32 %v1784, 1e-05
      %v1913 = vadd.f32 %v1785, 1e-05
      %v1914 = vadd.f32 %v1786, 1e-05
      %v1915 = vadd.f32 %v1787, 1e-05
      %v1916 = vadd.f32 %v1788, 1e-05
      %v1917 = vadd.f32 %v1789, 1e-05
      %v1918 = vadd.f32 %v1790, 1e-05
      %v1919 = vadd.f32 %v1791, 1e-05
      %v1920 = vadd.f32 %v1792, 1e-05
      %v1921 = vadd.f32 %v1793, 1e-05
      %v1922 = vadd.f32 %v1794, 1e-05
      %v1923 = vadd.f32 %v1795, 1e-05
      %v1924 = vadd.f32 %v1796, 1e-05
      %v1925 = vadd.f32 %v1797, 1e-05
      %v1926 = vadd.f32 %v1798, 1e-05
      %v1927 = vadd.f32 %v1799, 1e-05
      %v1928 = vadd.f32 %v1800, 1e-05
      %v1929 = vadd.f32 %v1801, 1e-05
      %v1930 = vadd.f32 %v1802, 1e-05
      %v1931 = vadd.f32 %v1803, 1e-05
      %v1932 = vrsqrt.pop %v1804
      %v1933 = vmul.f32 %v1932, %v1804
      %v1934 = vmul.f32 %v1933, %v1932
      %v1935 = vmul.f32 0.5, %v1934
      %v1936 = vsub.f32 1.5, %v1935
      %v1937 = vmul.f32 %v1932, %v1936
      %vm1938 = vweird.f32 %v1804
      %vm1939 = vweird.f32 %v1932
      %vm1940 = vmor %vm1938, %vm1939
      %v1941 = vsel %vm1940, %v1932, %v1937
      %v1942 = vrsqrt.pop %v1805
      %v1943 = vmul.f32 %v1942, %v1805
      %v1944 = vmul.f32 %v1943, %v1942
      %v1945 = vmul.f32 0.5, %v1944
      %v1946 = vsub.f32 1.5, %v1945
      %v1947 = vmul.f32 %v1942, %v1946
      %vm1948 = vweird.f32 %v1805
      %vm1949 = vweird.f32 %v1942
      %vm1950 = vmor %vm1948, %vm1949
      %v1951 = vsel %vm1950, %v1942, %v1947
      %v1952 = vrsqrt.pop %v1806
      %v1953 = vmul.f32 %v1952, %v1806
      %v1954 = vmul.f32 %v1953, %v1952
      %v1955 = vmul.f32 0.5, %v1954
      %v1956 = vsub.f32 1.5, %v1955
      %v1957 = vmul.f32 %v1952, %v1956
      %vm1958 = vweird.f32 %v1806
      %vm1959 = vweird.f32 %v1952
      %vm1960 = vmor %vm1958, %vm1959
      %v1961 = vsel %vm1960, %v1952, %v1957
      %v1962 = vrsqrt.pop %v1807
      %v1963 = vmul.f32 %v1962, %v1807
      %v1964 = vmul.f32 %v1963, %v1962
      %v1965 = vmul.f32 0.5, %v1964
      %v1966 = vsub.f32 1.5, %v1965
      %v1967 = vmul.f32 %v1962, %v1966
      %vm1968 = vweird.f32 %v1807
      %vm1969 = vweird.f32 %v1962
      %vm1970 = vmor %vm1968, %vm1969
      %v1971 = vsel %vm1970, %v1962, %v1967
      %v1972 = vrsqrt.pop %v1808
      %v1973 = vmul.f32 %v1972, %v1808
      %v1974 = vmul.f32 %v1973, %v1972
      %v1975 = vmul.f32 0.5, %v1974
      %v1976 = vsub.f32 1.5, %v1975
      %v1977 = vmul.f32 %v1972, %v1976
      %vm1978 = vweird.f32 %v1808
      %vm1979 = vweird.f32 %v1972
      %vm1980 = vmor %vm1978, %vm1979
      %v1981 = vsel %vm1980, %v1972, %v1977
      %v1982 = vrsqrt.pop %v1809
      %v1983 = vmul.f32 %v1982, %v1809
      %v1984 = vmul.f32 %v1983, %v1982
      %v1985 = vmul.f32 0.5, %v1984
      %v1986 = vsub.f32 1.5, %v1985
      %v1987 = vmul.f32 %v1982, %v1986
      %vm1988 = vweird.f32 %v1809
      %vm1989 = vweird.f32 %v1982
      %vm1990 = vmor %vm1988, %vm1989
      %v1991 = vsel %vm1990, %v1982, %v1987
      %v1992 = vrsqrt.pop %v1810
      %v1993 = vmul.f32 %v1992, %v1810
      %v1994 = vmul.f32 %v1993, %v1992
      %v1995 = vmul.f32 0.5, %v1994
      %v1996 = vsub.f32 1.5, %v1995
      %v1997 = vmul.f32 %v1992, %v1996
      %vm1998 = vweird.f32 %v1810
      %vm1999 = vweird.f32 %v1992
      %vm2000 = vmor %vm1998, %vm1999
      %v2001 = vsel %vm2000, %v1992, %v1997
      %v2002 = vrsqrt.pop %v1811
      %v2003 = vmul.f32 %v2002, %v1811
      %v2004 = vmul.f32 %v2003, %v2002
      %v2005 = vmul.f32 0.5, %v2004
      %v2006 = vsub.f32 1.5, %v2005
      %v2007 = vmul.f32 %v2002, %v2006
      %vm2008 = vweird.f32 %v1811
      %vm2009 = vweird.f32 %v2002
      %vm2010 = vmor %vm2008, %vm2009
      %v2011 = vsel %vm2010, %v2002, %v2007
      %v2012 = vrsqrt.pop %v1812
      %v2013 = vmul.f32 %v2012, %v1812
      %v2014 = vmul.f32 %v2013, %v2012
      %v2015 = vmul.f32 0.5, %v2014
      %v2016 = vsub.f32 1.5, %v2015
      %v2017 = vmul.f32 %v2012, %v2016
      %vm2018 = vweird.f32 %v1812
      %vm2019 = vweird.f32 %v2012
      %vm2020 = vmor %vm2018, %vm2019
      %v2021 = vsel %vm2020, %v2012, %v2017
      %v2022 = vrsqrt.pop %v1813
      %v2023 = vmul.f32 %v2022, %v1813
      %v2024 = vmul.f32 %v2023, %v2022
      %v2025 = vmul.f32 0.5, %v2024
      %v2026 = vsub.f32 1.5, %v2025
      %v2027 = vmul.f32 %v2022, %v2026
      %vm2028 = vweird.f32 %v1813
      %vm2029 = vweird.f32 %v2022
      %vm2030 = vmor %vm2028, %vm2029
      %v2031 = vsel %vm2030, %v2022, %v2027
      %v2032 = vrsqrt.pop %v1814
      %v2033 = vmul.f32 %v2032, %v1814
      %v2034 = vmul.f32 %v2033, %v2032
      %v2035 = vmul.f32 0.5, %v2034
      %v2036 = vsub.f32 1.5, %v2035
      %v2037 = vmul.f32 %v2032, %v2036
      %vm2038 = vweird.f32 %v1814
      %vm2039 = vweird.f32 %v2032
      %vm2040 = vmor %vm2038, %vm2039
      %v2041 = vsel %vm2040, %v2032, %v2037
      %v2042 = vrsqrt.pop %v1815
      %v2043 = vmul.f32 %v2042, %v1815
      %v2044 = vmul.f32 %v2043, %v2042
      %v2045 = vmul.f32 0.5, %v2044
      %v2046 = vsub.f32 1.5, %v2045
      %v2047 = vmul.f32 %v2042, %v2046
      %vm2048 = vweird.f32 %v1815
      %vm2049 = vweird.f32 %v2042
      %vm2050 = vmor %vm2048, %vm2049
      %v2051 = vsel %vm2050, %v2042, %v2047
      %v2052 = vrsqrt.pop %v1816
      %v2053 = vmul.f32 %v2052, %v1816
      %v2054 = vmul.f32 %v2053, %v2052
      %v2055 = vmul.f32 0.5, %v2054
      %v2056 = vsub.f32 1.5, %v2055
      %v2057 = vmul.f32 %v2052, %v2056
      %vm2058 = vweird.f32 %v1816
      %vm2059 = vweird.f32 %v2052
      %vm2060 = vmor %vm2058, %vm2059
      %v2061 = vsel %vm2060, %v2052, %v2057
      %v2062 = vrsqrt.pop %v1817
      %v2063 = vmul.f32 %v2062, %v1817
      %v2064 = vmul.f32 %v2063, %v2062
      %v2065 = vmul.f32 0.5, %v2064
      %v2066 = vsub.f32 1.5, %v2065
      %v2067 = vmul.f32 %v2062, %v2066
      %vm2068 = vweird.f32 %v1817
      %vm2069 = vweird.f32 %v2062
      %vm2070 = vmor %vm2068, %vm2069
      %v2071 = vsel %vm2070, %v2062, %v2067
      %v2072 = vrsqrt.pop %v1818
      %v2073 = vmul.f32 %v2072, %v1818
      %v2074 = vmul.f32 %v2073, %v2072
      %v2075 = vmul.f32 0.5, %v2074
      %v2076 = vsub.f32 1.5, %v2075
      %v2077 = vmul.f32 %v2072, %v2076
      %vm2078 = vweird.f32 %v1818
      %vm2079 = vweird.f32 %v2072
      %vm2080 = vmor %vm2078, %vm2079
      %v2081 = vsel %vm2080, %v2072, %v2077
      %v2082 = vrsqrt.pop %v1819
      %v2083 = vmul.f32 %v2082, %v1819
      %v2084 = vmul.f32 %v2083, %v2082
      %v2085 = vmul.f32 0.5, %v2084
      %v2086 = vsub.f32 1.5, %v2085
      %v2087 = vmul.f32 %v2082, %v2086
      %vm2088 = vweird.f32 %v1819
      %vm2089 = vweird.f32 %v2082
      %vm2090 = vmor %vm2088, %vm2089
      %v2091 = vsel %vm2090, %v2082, %v2087
      %v2092 = vrsqrt.pop %v1820
      %v2093 = vmul.f32 %v2092, %v1820
      %v2094 = vmul.f32 %v2093, %v2092
      %v2095 = vmul.f32 0.5, %v2094
      %v2096 = vsub.f32 1.5, %v2095
      %v2097 = vmul.f32 %v2092, %v2096
      %vm2098 = vweird.f32 %v1820
      %vm2099 = vweird.f32 %v2092
      %vm2100 = vmor %vm2098, %vm2099
      %v2101 = vsel %vm2100, %v2092, %v2097
      %v2102 = vrsqrt.pop %v1821
      %v2103 = vmul.f32 %v2102, %v1821
      %v2104 = vmul.f32 %v2103, %v2102
      %v2105 = vmul.f32 0.5, %v2104
      %v2106 = vsub.f32 1.5, %v2105
      %v2107 = vmul.f32 %v2102, %v2106
      %vm2108 = vweird.f32 %v1821
      %vm2109 = vweird.f32 %v2102
      %vm2110 = vmor %vm2108, %vm2109
      %v2111 = vsel %vm2110, %v2102, %v2107
      %v2112 = vrsqrt.pop %v1822
      %v2113 = vmul.f32 %v2112, %v1822
      %v2114 = vmul.f32 %v2113, %v2112
      %v2115 = vmul.f32 0.5, %v2114
      %v2116 = vsub.f32 1.5, %v2115
      %v2117 = vmul.f32 %v2112, %v2116
      %vm2118 = vweird.f32 %v1822
      %vm2119 = vweird.f32 %v2112
      %vm2120 = vmor %vm2118, %vm2119
      %v2121 = vsel %vm2120, %v2112, %v2117
      %v2122 = vrsqrt.pop %v1823
      %v2123 = vmul.f32 %v2122, %v1823
      %v2124 = vmul.f32 %v2123, %v2122
      %v2125 = vmul.f32 0.5, %v2124
      %v2126 = vsub.f32 1.5, %v2125
      %v2127 = vmul.f32 %v2122, %v2126
      %vm2128 = vweird.f32 %v1823
      %vm2129 = vweird.f32 %v2122
      %vm2130 = vmor %vm2128, %vm2129
      %v2131 = vsel %vm2130, %v2122, %v2127
      %v2132 = vrsqrt.pop %v1824
      %v2133 = vmul.f32 %v2132, %v1824
      %v2134 = vmul.f32 %v2133, %v2132
      %v2135 = vmul.f32 0.5, %v2134
      %v2136 = vsub.f32 1.5, %v2135
      %v2137 = vmul.f32 %v2132, %v2136
      %vm2138 = vweird.f32 %v1824
      %vm2139 = vweird.f32 %v2132
      %vm2140 = vmor %vm2138, %vm2139
      %v2141 = vsel %vm2140, %v2132, %v2137
      %v2142 = vrsqrt.pop %v1825
      %v2143 = vmul.f32 %v2142, %v1825
      %v2144 = vmul.f32 %v2143, %v2142
      %v2145 = vmul.f32 0.5, %v2144
      %v2146 = vsub.f32 1.5, %v2145
      %v2147 = vmul.f32 %v2142, %v2146
      %vm2148 = vweird.f32 %v1825
      %vm2149 = vweird.f32 %v2142
      %vm2150 = vmor %vm2148, %vm2149
      %v2151 = vsel %vm2150, %v2142, %v2147
      %v2152 = vrsqrt.pop %v1826
      %v2153 = vmul.f32 %v2152, %v1826
      %v2154 = vmul.f32 %v2153, %v2152
      %v2155 = vmul.f32 0.5, %v2154
      %v2156 = vsub.f32 1.5, %v2155
      %v2157 = vmul.f32 %v2152, %v2156
      %vm2158 = vweird.f32 %v1826
      %vm2159 = vweird.f32 %v2152
      %vm2160 = vmor %vm2158, %vm2159
      %v2161 = vsel %vm2160, %v2152, %v2157
      %v2162 = vrsqrt.pop %v1827
      %v2163 = vmul.f32 %v2162, %v1827
      %v2164 = vmul.f32 %v2163, %v2162
      %v2165 = vmul.f32 0.5, %v2164
      %v2166 = vsub.f32 1.5, %v2165
      %v2167 = vmul.f32 %v2162, %v2166
      %vm2168 = vweird.f32 %v1827
      %vm2169 = vweird.f32 %v2162
      %vm2170 = vmor %vm2168, %vm2169
      %v2171 = vsel %vm2170, %v2162, %v2167
      %v2172 = vrsqrt.pop %v1828
      %v2173 = vmul.f32 %v2172, %v1828
      %v2174 = vmul.f32 %v2173, %v2172
      %v2175 = vmul.f32 0.5, %v2174
      %v2176 = vsub.f32 1.5, %v2175
      %v2177 = vmul.f32 %v2172, %v2176
      %vm2178 = vweird.f32 %v1828
      %vm2179 = vweird.f32 %v2172
      %vm2180 = vmor %vm2178, %vm2179
      %v2181 = vsel %vm2180, %v2172, %v2177
      %v2182 = vrsqrt.pop %v1829
      %v2183 = vmul.f32 %v2182, %v1829
      %v2184 = vmul.f32 %v2183, %v2182
      %v2185 = vmul.f32 0.5, %v2184
      %v2186 = vsub.f32 1.5, %v2185
      %v2187 = vmul.f32 %v2182, %v2186
      %vm2188 = vweird.f32 %v1829
      %vm2189 = vweird.f32 %v2182
      %vm2190 = vmor %vm2188, %vm2189
      %v2191 = vsel %vm2190, %v2182, %v2187
      %v2192 = vrsqrt.pop %v1830
      %v2193 = vmul.f32 %v2192, %v1830
      %v2194 = vmul.f32 %v2193, %v2192
      %v2195 = vmul.f32 0.5, %v2194
      %v2196 = vsub.f32 1.5, %v2195
      %v2197 = vmul.f32 %v2192, %v2196
      %vm2198 = vweird.f32 %v1830
      %vm2199 = vweird.f32 %v2192
      %vm2200 = vmor %vm2198, %vm2199
      %v2201 = vsel %vm2200, %v2192, %v2197
      %v2202 = vrsqrt.pop %v1831
      %v2203 = vmul.f32 %v2202, %v1831
      %v2204 = vmul.f32 %v2203, %v2202
      %v2205 = vmul.f32 0.5, %v2204
      %v2206 = vsub.f32 1.5, %v2205
      %v2207 = vmul.f32 %v2202, %v2206
      %vm2208 = vweird.f32 %v1831
      %vm2209 = vweird.f32 %v2202
      %vm2210 = vmor %vm2208, %vm2209
      %v2211 = vsel %vm2210, %v2202, %v2207
      %v2212 = vrsqrt.pop %v1832
      %v2213 = vmul.f32 %v2212, %v1832
      %v2214 = vmul.f32 %v2213, %v2212
      %v2215 = vmul.f32 0.5, %v2214
      %v2216 = vsub.f32 1.5, %v2215
      %v2217 = vmul.f32 %v2212, %v2216
      %vm2218 = vweird.f32 %v1832
      %vm2219 = vweird.f32 %v2212
      %vm2220 = vmor %vm2218, %vm2219
      %v2221 = vsel %vm2220, %v2212, %v2217
      %v2222 = vrsqrt.pop %v1833
      %v2223 = vmul.f32 %v2222, %v1833
      %v2224 = vmul.f32 %v2223, %v2222
      %v2225 = vmul.f32 0.5, %v2224
      %v2226 = vsub.f32 1.5, %v2225
      %v2227 = vmul.f32 %v2222, %v2226
      %vm2228 = vweird.f32 %v1833
      %vm2229 = vweird.f32 %v2222
      %vm2230 = vmor %vm2228, %vm2229
      %v2231 = vsel %vm2230, %v2222, %v2227
      %v2232 = vrsqrt.pop %v1834
      %v2233 = vmul.f32 %v2232, %v1834
      %v2234 = vmul.f32 %v2233, %v2232
      %v2235 = vmul.f32 0.5, %v2234
      %v2236 = vsub.f32 1.5, %v2235
      %v2237 = vmul.f32 %v2232, %v2236
      %vm2238 = vweird.f32 %v1834
      %vm2239 = vweird.f32 %v2232
      %vm2240 = vmor %vm2238, %vm2239
      %v2241 = vsel %vm2240, %v2232, %v2237
      %v2242 = vrsqrt.pop %v1835
      %v2243 = vmul.f32 %v2242, %v1835
      %v2244 = vmul.f32 %v2243, %v2242
      %v2245 = vmul.f32 0.5, %v2244
      %v2246 = vsub.f32 1.5, %v2245
      %v2247 = vmul.f32 %v2242, %v2246
      %vm2248 = vweird.f32 %v1835
      %vm2249 = vweird.f32 %v2242
      %vm2250 = vmor %vm2248, %vm2249
      %v2251 = vsel %vm2250, %v2242, %v2247
      %v2252 = vrsqrt.pop %v1836
      %v2253 = vmul.f32 %v2252, %v1836
      %v2254 = vmul.f32 %v2253, %v2252
      %v2255 = vmul.f32 0.5, %v2254
      %v2256 = vsub.f32 1.5, %v2255
      %v2257 = vmul.f32 %v2252, %v2256
      %vm2258 = vweird.f32 %v1836
      %vm2259 = vweird.f32 %v2252
      %vm2260 = vmor %vm2258, %vm2259
      %v2261 = vsel %vm2260, %v2252, %v2257
      %v2262 = vrsqrt.pop %v1837
      %v2263 = vmul.f32 %v2262, %v1837
      %v2264 = vmul.f32 %v2263, %v2262
      %v2265 = vmul.f32 0.5, %v2264
      %v2266 = vsub.f32 1.5, %v2265
      %v2267 = vmul.f32 %v2262, %v2266
      %vm2268 = vweird.f32 %v1837
      %vm2269 = vweird.f32 %v2262
      %vm2270 = vmor %vm2268, %vm2269
      %v2271 = vsel %vm2270, %v2262, %v2267
      %v2272 = vrsqrt.pop %v1838
      %v2273 = vmul.f32 %v2272, %v1838
      %v2274 = vmul.f32 %v2273, %v2272
      %v2275 = vmul.f32 0.5, %v2274
      %v2276 = vsub.f32 1.5, %v2275
      %v2277 = vmul.f32 %v2272, %v2276
      %vm2278 = vweird.f32 %v1838
      %vm2279 = vweird.f32 %v2272
      %vm2280 = vmor %vm2278, %vm2279
      %v2281 = vsel %vm2280, %v2272, %v2277
      %v2282 = vrsqrt.pop %v1839
      %v2283 = vmul.f32 %v2282, %v1839
      %v2284 = vmul.f32 %v2283, %v2282
      %v2285 = vmul.f32 0.5, %v2284
      %v2286 = vsub.f32 1.5, %v2285
      %v2287 = vmul.f32 %v2282, %v2286
      %vm2288 = vweird.f32 %v1839
      %vm2289 = vweird.f32 %v2282
      %vm2290 = vmor %vm2288, %vm2289
      %v2291 = vsel %vm2290, %v2282, %v2287
      %v2292 = vrsqrt.pop %v1840
      %v2293 = vmul.f32 %v2292, %v1840
      %v2294 = vmul.f32 %v2293, %v2292
      %v2295 = vmul.f32 0.5, %v2294
      %v2296 = vsub.f32 1.5, %v2295
      %v2297 = vmul.f32 %v2292, %v2296
      %vm2298 = vweird.f32 %v1840
      %vm2299 = vweird.f32 %v2292
      %vm2300 = vmor %vm2298, %vm2299
      %v2301 = vsel %vm2300, %v2292, %v2297
      %v2302 = vrsqrt.pop %v1841
      %v2303 = vmul.f32 %v2302, %v1841
      %v2304 = vmul.f32 %v2303, %v2302
      %v2305 = vmul.f32 0.5, %v2304
      %v2306 = vsub.f32 1.5, %v2305
      %v2307 = vmul.f32 %v2302, %v2306
      %vm2308 = vweird.f32 %v1841
      %vm2309 = vweird.f32 %v2302
      %vm2310 = vmor %vm2308, %vm2309
      %v2311 = vsel %vm2310, %v2302, %v2307
      %v2312 = vrsqrt.pop %v1842
      %v2313 = vmul.f32 %v2312, %v1842
      %v2314 = vmul.f32 %v2313, %v2312
      %v2315 = vmul.f32 0.5, %v2314
      %v2316 = vsub.f32 1.5, %v2315
      %v2317 = vmul.f32 %v2312, %v2316
      %vm2318 = vweird.f32 %v1842
      %vm2319 = vweird.f32 %v2312
      %vm2320 = vmor %vm2318, %vm2319
      %v2321 = vsel %vm2320, %v2312, %v2317
      %v2322 = vrsqrt.pop %v1843
      %v2323 = vmul.f32 %v2322, %v1843
      %v2324 = vmul.f32 %v2323, %v2322
      %v2325 = vmul.f32 0.5, %v2324
      %v2326 = vsub.f32 1.5, %v2325
      %v2327 = vmul.f32 %v2322, %v2326
      %vm2328 = vweird.f32 %v1843
      %vm2329 = vweird.f32 %v2322
      %vm2330 = vmor %vm2328, %vm2329
      %v2331 = vsel %vm2330, %v2322, %v2327
      %v2332 = vrsqrt.pop %v1844
      %v2333 = vmul.f32 %v2332, %v1844
      %v2334 = vmul.f32 %v2333, %v2332
      %v2335 = vmul.f32 0.5, %v2334
      %v2336 = vsub.f32 1.5, %v2335
      %v2337 = vmul.f32 %v2332, %v2336
      %vm2338 = vweird.f32 %v1844
      %vm2339 = vweird.f32 %v2332
      %vm2340 = vmor %vm2338, %vm2339
      %v2341 = vsel %vm2340, %v2332, %v2337
      %v2342 = vrsqrt.pop %v1845
      %v2343 = vmul.f32 %v2342, %v1845
      %v2344 = vmul.f32 %v2343, %v2342
      %v2345 = vmul.f32 0.5, %v2344
      %v2346 = vsub.f32 1.5, %v2345
      %v2347 = vmul.f32 %v2342, %v2346
      %vm2348 = vweird.f32 %v1845
      %vm2349 = vweird.f32 %v2342
      %vm2350 = vmor %vm2348, %vm2349
      %v2351 = vsel %vm2350, %v2342, %v2347
      %v2352 = vrsqrt.pop %v1846
      %v2353 = vmul.f32 %v2352, %v1846
      %v2354 = vmul.f32 %v2353, %v2352
      %v2355 = vmul.f32 0.5, %v2354
      %v2356 = vsub.f32 1.5, %v2355
      %v2357 = vmul.f32 %v2352, %v2356
      %vm2358 = vweird.f32 %v1846
      %vm2359 = vweird.f32 %v2352
      %vm2360 = vmor %vm2358, %vm2359
      %v2361 = vsel %vm2360, %v2352, %v2357
      %v2362 = vrsqrt.pop %v1847
      %v2363 = vmul.f32 %v2362, %v1847
      %v2364 = vmul.f32 %v2363, %v2362
      %v2365 = vmul.f32 0.5, %v2364
      %v2366 = vsub.f32 1.5, %v2365
      %v2367 = vmul.f32 %v2362, %v2366
      %vm2368 = vweird.f32 %v1847
      %vm2369 = vweird.f32 %v2362
      %vm2370 = vmor %vm2368, %vm2369
      %v2371 = vsel %vm2370, %v2362, %v2367
      %v2372 = vrsqrt.pop %v1848
      %v2373 = vmul.f32 %v2372, %v1848
      %v2374 = vmul.f32 %v2373, %v2372
      %v2375 = vmul.f32 0.5, %v2374
      %v2376 = vsub.f32 1.5, %v2375
      %v2377 = vmul.f32 %v2372, %v2376
      %vm2378 = vweird.f32 %v1848
      %vm2379 = vweird.f32 %v2372
      %vm2380 = vmor %vm2378, %vm2379
      %v2381 = vsel %vm2380, %v2372, %v2377
      %v2382 = vrsqrt.pop %v1849
      %v2383 = vmul.f32 %v2382, %v1849
      %v2384 = vmul.f32 %v2383, %v2382
      %v2385 = vmul.f32 0.5, %v2384
      %v2386 = vsub.f32 1.5, %v2385
      %v2387 = vmul.f32 %v2382, %v2386
      %vm2388 = vweird.f32 %v1849
      %vm2389 = vweird.f32 %v2382
      %vm2390 = vmor %vm2388, %vm2389
      %v2391 = vsel %vm2390, %v2382, %v2387
      %v2392 = vrsqrt.pop %v1850
      %v2393 = vmul.f32 %v2392, %v1850
      %v2394 = vmul.f32 %v2393, %v2392
      %v2395 = vmul.f32 0.5, %v2394
      %v2396 = vsub.f32 1.5, %v2395
      %v2397 = vmul.f32 %v2392, %v2396
      %vm2398 = vweird.f32 %v1850
      %vm2399 = vweird.f32 %v2392
      %vm2400 = vmor %vm2398, %vm2399
      %v2401 = vsel %vm2400, %v2392, %v2397
      %v2402 = vrsqrt.pop %v1851
      %v2403 = vmul.f32 %v2402, %v1851
      %v2404 = vmul.f32 %v2403, %v2402
      %v2405 = vmul.f32 0.5, %v2404
      %v2406 = vsub.f32 1.5, %v2405
      %v2407 = vmul.f32 %v2402, %v2406
      %vm2408 = vweird.f32 %v1851
      %vm2409 = vweird.f32 %v2402
      %vm2410 = vmor %vm2408, %vm2409
      %v2411 = vsel %vm2410, %v2402, %v2407
      %v2412 = vrsqrt.pop %v1852
      %v2413 = vmul.f32 %v2412, %v1852
      %v2414 = vmul.f32 %v2413, %v2412
      %v2415 = vmul.f32 0.5, %v2414
      %v2416 = vsub.f32 1.5, %v2415
      %v2417 = vmul.f32 %v2412, %v2416
      %vm2418 = vweird.f32 %v1852
      %vm2419 = vweird.f32 %v2412
      %vm2420 = vmor %vm2418, %vm2419
      %v2421 = vsel %vm2420, %v2412, %v2417
      %v2422 = vrsqrt.pop %v1853
      %v2423 = vmul.f32 %v2422, %v1853
      %v2424 = vmul.f32 %v2423, %v2422
      %v2425 = vmul.f32 0.5, %v2424
      %v2426 = vsub.f32 1.5, %v2425
      %v2427 = vmul.f32 %v2422, %v2426
      %vm2428 = vweird.f32 %v1853
      %vm2429 = vweird.f32 %v2422
      %vm2430 = vmor %vm2428, %vm2429
      %v2431 = vsel %vm2430, %v2422, %v2427
      %v2432 = vrsqrt.pop %v1854
      %v2433 = vmul.f32 %v2432, %v1854
      %v2434 = vmul.f32 %v2433, %v2432
      %v2435 = vmul.f32 0.5, %v2434
      %v2436 = vsub.f32 1.5, %v2435
      %v2437 = vmul.f32 %v2432, %v2436
      %vm2438 = vweird.f32 %v1854
      %vm2439 = vweird.f32 %v2432
      %vm2440 = vmor %vm2438, %vm2439
      %v2441 = vsel %vm2440, %v2432, %v2437
      %v2442 = vrsqrt.pop %v1855
      %v2443 = vmul.f32 %v2442, %v1855
      %v2444 = vmul.f32 %v2443, %v2442
      %v2445 = vmul.f32 0.5, %v2444
      %v2446 = vsub.f32 1.5, %v2445
      %v2447 = vmul.f32 %v2442, %v2446
      %vm2448 = vweird.f32 %v1855
      %vm2449 = vweird.f32 %v2442
      %vm2450 = vmor %vm2448, %vm2449
      %v2451 = vsel %vm2450, %v2442, %v2447
      %v2452 = vrsqrt.pop %v1856
      %v2453 = vmul.f32 %v2452, %v1856
      %v2454 = vmul.f32 %v2453, %v2452
      %v2455 = vmul.f32 0.5, %v2454
      %v2456 = vsub.f32 1.5, %v2455
      %v2457 = vmul.f32 %v2452, %v2456
      %vm2458 = vweird.f32 %v1856
      %vm2459 = vweird.f32 %v2452
      %vm2460 = vmor %vm2458, %vm2459
      %v2461 = vsel %vm2460, %v2452, %v2457
      %v2462 = vrsqrt.pop %v1857
      %v2463 = vmul.f32 %v2462, %v1857
      %v2464 = vmul.f32 %v2463, %v2462
      %v2465 = vmul.f32 0.5, %v2464
      %v2466 = vsub.f32 1.5, %v2465
      %v2467 = vmul.f32 %v2462, %v2466
      %vm2468 = vweird.f32 %v1857
      %vm2469 = vweird.f32 %v2462
      %vm2470 = vmor %vm2468, %vm2469
      %v2471 = vsel %vm2470, %v2462, %v2467
      %v2472 = vrsqrt.pop %v1858
      %v2473 = vmul.f32 %v2472, %v1858
      %v2474 = vmul.f32 %v2473, %v2472
      %v2475 = vmul.f32 0.5, %v2474
      %v2476 = vsub.f32 1.5, %v2475
      %v2477 = vmul.f32 %v2472, %v2476
      %vm2478 = vweird.f32 %v1858
      %vm2479 = vweird.f32 %v2472
      %vm2480 = vmor %vm2478, %vm2479
      %v2481 = vsel %vm2480, %v2472, %v2477
      %v2482 = vrsqrt.pop %v1859
      %v2483 = vmul.f32 %v2482, %v1859
      %v2484 = vmul.f32 %v2483, %v2482
      %v2485 = vmul.f32 0.5, %v2484
      %v2486 = vsub.f32 1.5, %v2485
      %v2487 = vmul.f32 %v2482, %v2486
      %vm2488 = vweird.f32 %v1859
      %vm2489 = vweird.f32 %v2482
      %vm2490 = vmor %vm2488, %vm2489
      %v2491 = vsel %vm2490, %v2482, %v2487
      %v2492 = vrsqrt.pop %v1860
      %v2493 = vmul.f32 %v2492, %v1860
      %v2494 = vmul.f32 %v2493, %v2492
      %v2495 = vmul.f32 0.5, %v2494
      %v2496 = vsub.f32 1.5, %v2495
      %v2497 = vmul.f32 %v2492, %v2496
      %vm2498 = vweird.f32 %v1860
      %vm2499 = vweird.f32 %v2492
      %vm2500 = vmor %vm2498, %vm2499
      %v2501 = vsel %vm2500, %v2492, %v2497
      %v2502 = vrsqrt.pop %v1861
      %v2503 = vmul.f32 %v2502, %v1861
      %v2504 = vmul.f32 %v2503, %v2502
      %v2505 = vmul.f32 0.5, %v2504
      %v2506 = vsub.f32 1.5, %v2505
      %v2507 = vmul.f32 %v2502, %v2506
      %vm2508 = vweird.f32 %v1861
      %vm2509 = vweird.f32 %v2502
      %vm2510 = vmor %vm2508, %vm2509
      %v2511 = vsel %vm2510, %v2502, %v2507
      %v2512 = vrsqrt.pop %v1862
      %v2513 = vmul.f32 %v2512, %v1862
      %v2514 = vmul.f32 %v2513, %v2512
      %v2515 = vmul.f32 0.5, %v2514
      %v2516 = vsub.f32 1.5, %v2515
      %v2517 = vmul.f32 %v2512, %v2516
      %vm2518 = vweird.f32 %v1862
      %vm2519 = vweird.f32 %v2512
      %vm2520 = vmor %vm2518, %vm2519
      %v2521 = vsel %vm2520, %v2512, %v2517
      %v2522 = vrsqrt.pop %v1863
      %v2523 = vmul.f32 %v2522, %v1863
      %v2524 = vmul.f32 %v2523, %v2522
      %v2525 = vmul.f32 0.5, %v2524
      %v2526 = vsub.f32 1.5, %v2525
      %v2527 = vmul.f32 %v2522, %v2526
      %vm2528 = vweird.f32 %v1863
      %vm2529 = vweird.f32 %v2522
      %vm2530 = vmor %vm2528, %vm2529
      %v2531 = vsel %vm2530, %v2522, %v2527
      %v2532 = vrsqrt.pop %v1864
      %v2533 = vmul.f32 %v2532, %v1864
      %v2534 = vmul.f32 %v2533, %v2532
      %v2535 = vmul.f32 0.5, %v2534
      %v2536 = vsub.f32 1.5, %v2535
      %v2537 = vmul.f32 %v2532, %v2536
      %vm2538 = vweird.f32 %v1864
      %vm2539 = vweird.f32 %v2532
      %vm2540 = vmor %vm2538, %vm2539
      %v2541 = vsel %vm2540, %v2532, %v2537
      %v2542 = vrsqrt.pop %v1865
      %v2543 = vmul.f32 %v2542, %v1865
      %v2544 = vmul.f32 %v2543, %v2542
      %v2545 = vmul.f32 0.5, %v2544
      %v2546 = vsub.f32 1.5, %v2545
      %v2547 = vmul.f32 %v2542, %v2546
      %vm2548 = vweird.f32 %v1865
      %vm2549 = vweird.f32 %v2542
      %vm2550 = vmor %vm2548, %vm2549
      %v2551 = vsel %vm2550, %v2542, %v2547
      %v2552 = vrsqrt.pop %v1866
      %v2553 = vmul.f32 %v2552, %v1866
      %v2554 = vmul.f32 %v2553, %v2552
      %v2555 = vmul.f32 0.5, %v2554
      %v2556 = vsub.f32 1.5, %v2555
      %v2557 = vmul.f32 %v2552, %v2556
      %vm2558 = vweird.f32 %v1866
      %vm2559 = vweird.f32 %v2552
      %vm2560 = vmor %vm2558, %vm2559
      %v2561 = vsel %vm2560, %v2552, %v2557
      %v2562 = vrsqrt.pop %v1867
      %v2563 = vmul.f32 %v2562, %v1867
      %v2564 = vmul.f32 %v2563, %v2562
      %v2565 = vmul.f32 0.5, %v2564
      %v2566 = vsub.f32 1.5, %v2565
      %v2567 = vmul.f32 %v2562, %v2566
      %vm2568 = vweird.f32 %v1867
      %vm2569 = vweird.f32 %v2562
      %vm2570 = vmor %vm2568, %vm2569
      %v2571 = vsel %vm2570, %v2562, %v2567
      %v2572 = vrsqrt.pop %v1868
      %v2573 = vmul.f32 %v2572, %v1868
      %v2574 = vmul.f32 %v2573, %v2572
      %v2575 = vmul.f32 0.5, %v2574
      %v2576 = vsub.f32 1.5, %v2575
      %v2577 = vmul.f32 %v2572, %v2576
      %vm2578 = vweird.f32 %v1868
      %vm2579 = vweird.f32 %v2572
      %vm2580 = vmor %vm2578, %vm2579
      %v2581 = vsel %vm2580, %v2572, %v2577
      %v2582 = vrsqrt.pop %v1869
      %v2583 = vmul.f32 %v2582, %v1869
      %v2584 = vmul.f32 %v2583, %v2582
      %v2585 = vmul.f32 0.5, %v2584
      %v2586 = vsub.f32 1.5, %v2585
      %v2587 = vmul.f32 %v2582, %v2586
      %vm2588 = vweird.f32 %v1869
      %vm2589 = vweird.f32 %v2582
      %vm2590 = vmor %vm2588, %vm2589
      %v2591 = vsel %vm2590, %v2582, %v2587
      %v2592 = vrsqrt.pop %v1870
      %v2593 = vmul.f32 %v2592, %v1870
      %v2594 = vmul.f32 %v2593, %v2592
      %v2595 = vmul.f32 0.5, %v2594
      %v2596 = vsub.f32 1.5, %v2595
      %v2597 = vmul.f32 %v2592, %v2596
      %vm2598 = vweird.f32 %v1870
      %vm2599 = vweird.f32 %v2592
      %vm2600 = vmor %vm2598, %vm2599
      %v2601 = vsel %vm2600, %v2592, %v2597
      %v2602 = vrsqrt.pop %v1871
      %v2603 = vmul.f32 %v2602, %v1871
      %v2604 = vmul.f32 %v2603, %v2602
      %v2605 = vmul.f32 0.5, %v2604
      %v2606 = vsub.f32 1.5, %v2605
      %v2607 = vmul.f32 %v2602, %v2606
      %vm2608 = vweird.f32 %v1871
      %vm2609 = vweird.f32 %v2602
      %vm2610 = vmor %vm2608, %vm2609
      %v2611 = vsel %vm2610, %v2602, %v2607
      %v2612 = vrsqrt.pop %v1872
      %v2613 = vmul.f32 %v2612, %v1872
      %v2614 = vmul.f32 %v2613, %v2612
      %v2615 = vmul.f32 0.5, %v2614
      %v2616 = vsub.f32 1.5, %v2615
      %v2617 = vmul.f32 %v2612, %v2616
      %vm2618 = vweird.f32 %v1872
      %vm2619 = vweird.f32 %v2612
      %vm2620 = vmor %vm2618, %vm2619
      %v2621 = vsel %vm2620, %v2612, %v2617
      %v2622 = vrsqrt.pop %v1873
      %v2623 = vmul.f32 %v2622, %v1873
      %v2624 = vmul.f32 %v2623, %v2622
      %v2625 = vmul.f32 0.5, %v2624
      %v2626 = vsub.f32 1.5, %v2625
      %v2627 = vmul.f32 %v2622, %v2626
      %vm2628 = vweird.f32 %v1873
      %vm2629 = vweird.f32 %v2622
      %vm2630 = vmor %vm2628, %vm2629
      %v2631 = vsel %vm2630, %v2622, %v2627
      %v2632 = vrsqrt.pop %v1874
      %v2633 = vmul.f32 %v2632, %v1874
      %v2634 = vmul.f32 %v2633, %v2632
      %v2635 = vmul.f32 0.5, %v2634
      %v2636 = vsub.f32 1.5, %v2635
      %v2637 = vmul.f32 %v2632, %v2636
      %vm2638 = vweird.f32 %v1874
      %vm2639 = vweird.f32 %v2632
      %vm2640 = vmor %vm2638, %vm2639
      %v2641 = vsel %vm2640, %v2632, %v2637
      %v2642 = vrsqrt.pop %v1875
      %v2643 = vmul.f32 %v2642, %v1875
      %v2644 = vmul.f32 %v2643, %v2642
      %v2645 = vmul.f32 0.5, %v2644
      %v2646 = vsub.f32 1.5, %v2645
      %v2647 = vmul.f32 %v2642, %v2646
      %vm2648 = vweird.f32 %v1875
      %vm2649 = vweird.f32 %v2642
      %vm2650 = vmor %vm2648, %vm2649
      %v2651 = vsel %vm2650, %v2642, %v2647
      %v2652 = vrsqrt.pop %v1876
      %v2653 = vmul.f32 %v2652, %v1876
      %v2654 = vmul.f32 %v2653, %v2652
      %v2655 = vmul.f32 0.5, %v2654
      %v2656 = vsub.f32 1.5, %v2655
      %v2657 = vmul.f32 %v2652, %v2656
      %vm2658 = vweird.f32 %v1876
      %vm2659 = vweird.f32 %v2652
      %vm2660 = vmor %vm2658, %vm2659
      %v2661 = vsel %vm2660, %v2652, %v2657
      %v2662 = vrsqrt.pop %v1877
      %v2663 = vmul.f32 %v2662, %v1877
      %v2664 = vmul.f32 %v2663, %v2662
      %v2665 = vmul.f32 0.5, %v2664
      %v2666 = vsub.f32 1.5, %v2665
      %v2667 = vmul.f32 %v2662, %v2666
      %vm2668 = vweird.f32 %v1877
      %vm2669 = vweird.f32 %v2662
      %vm2670 = vmor %vm2668, %vm2669
      %v2671 = vsel %vm2670, %v2662, %v2667
      %v2672 = vrsqrt.pop %v1878
      %v2673 = vmul.f32 %v2672, %v1878
      %v2674 = vmul.f32 %v2673, %v2672
      %v2675 = vmul.f32 0.5, %v2674
      %v2676 = vsub.f32 1.5, %v2675
      %v2677 = vmul.f32 %v2672, %v2676
      %vm2678 = vweird.f32 %v1878
      %vm2679 = vweird.f32 %v2672
      %vm2680 = vmor %vm2678, %vm2679
      %v2681 = vsel %vm2680, %v2672, %v2677
      %v2682 = vrsqrt.pop %v1879
      %v2683 = vmul.f32 %v2682, %v1879
      %v2684 = vmul.f32 %v2683, %v2682
      %v2685 = vmul.f32 0.5, %v2684
      %v2686 = vsub.f32 1.5, %v2685
      %v2687 = vmul.f32 %v2682, %v2686
      %vm2688 = vweird.f32 %v1879
      %vm2689 = vweird.f32 %v2682
      %vm2690 = vmor %vm2688, %vm2689
      %v2691 = vsel %vm2690, %v2682, %v2687
      %v2692 = vrsqrt.pop %v1880
      %v2693 = vmul.f32 %v2692, %v1880
      %v2694 = vmul.f32 %v2693, %v2692
      %v2695 = vmul.f32 0.5, %v2694
      %v2696 = vsub.f32 1.5, %v2695
      %v2697 = vmul.f32 %v2692, %v2696
      %vm2698 = vweird.f32 %v1880
      %vm2699 = vweird.f32 %v2692
      %vm2700 = vmor %vm2698, %vm2699
      %v2701 = vsel %vm2700, %v2692, %v2697
      %v2702 = vrsqrt.pop %v1881
      %v2703 = vmul.f32 %v2702, %v1881
      %v2704 = vmul.f32 %v2703, %v2702
      %v2705 = vmul.f32 0.5, %v2704
      %v2706 = vsub.f32 1.5, %v2705
      %v2707 = vmul.f32 %v2702, %v2706
      %vm2708 = vweird.f32 %v1881
      %vm2709 = vweird.f32 %v2702
      %vm2710 = vmor %vm2708, %vm2709
      %v2711 = vsel %vm2710, %v2702, %v2707
      %v2712 = vrsqrt.pop %v1882
      %v2713 = vmul.f32 %v2712, %v1882
      %v2714 = vmul.f32 %v2713, %v2712
      %v2715 = vmul.f32 0.5, %v2714
      %v2716 = vsub.f32 1.5, %v2715
      %v2717 = vmul.f32 %v2712, %v2716
      %vm2718 = vweird.f32 %v1882
      %vm2719 = vweird.f32 %v2712
      %vm2720 = vmor %vm2718, %vm2719
      %v2721 = vsel %vm2720, %v2712, %v2717
      %v2722 = vrsqrt.pop %v1883
      %v2723 = vmul.f32 %v2722, %v1883
      %v2724 = vmul.f32 %v2723, %v2722
      %v2725 = vmul.f32 0.5, %v2724
      %v2726 = vsub.f32 1.5, %v2725
      %v2727 = vmul.f32 %v2722, %v2726
      %vm2728 = vweird.f32 %v1883
      %vm2729 = vweird.f32 %v2722
      %vm2730 = vmor %vm2728, %vm2729
      %v2731 = vsel %vm2730, %v2722, %v2727
      %v2732 = vrsqrt.pop %v1884
      %v2733 = vmul.f32 %v2732, %v1884
      %v2734 = vmul.f32 %v2733, %v2732
      %v2735 = vmul.f32 0.5, %v2734
      %v2736 = vsub.f32 1.5, %v2735
      %v2737 = vmul.f32 %v2732, %v2736
      %vm2738 = vweird.f32 %v1884
      %vm2739 = vweird.f32 %v2732
      %vm2740 = vmor %vm2738, %vm2739
      %v2741 = vsel %vm2740, %v2732, %v2737
      %v2742 = vrsqrt.pop %v1885
      %v2743 = vmul.f32 %v2742, %v1885
      %v2744 = vmul.f32 %v2743, %v2742
      %v2745 = vmul.f32 0.5, %v2744
      %v2746 = vsub.f32 1.5, %v2745
      %v2747 = vmul.f32 %v2742, %v2746
      %vm2748 = vweird.f32 %v1885
      %vm2749 = vweird.f32 %v2742
      %vm2750 = vmor %vm2748, %vm2749
      %v2751 = vsel %vm2750, %v2742, %v2747
      %v2752 = vrsqrt.pop %v1886
      %v2753 = vmul.f32 %v2752, %v1886
      %v2754 = vmul.f32 %v2753, %v2752
      %v2755 = vmul.f32 0.5, %v2754
      %v2756 = vsub.f32 1.5, %v2755
      %v2757 = vmul.f32 %v2752, %v2756
      %vm2758 = vweird.f32 %v1886
      %vm2759 = vweird.f32 %v2752
      %vm2760 = vmor %vm2758, %vm2759
      %v2761 = vsel %vm2760, %v2752, %v2757
      %v2762 = vrsqrt.pop %v1887
      %v2763 = vmul.f32 %v2762, %v1887
      %v2764 = vmul.f32 %v2763, %v2762
      %v2765 = vmul.f32 0.5, %v2764
      %v2766 = vsub.f32 1.5, %v2765
      %v2767 = vmul.f32 %v2762, %v2766
      %vm2768 = vweird.f32 %v1887
      %vm2769 = vweird.f32 %v2762
      %vm2770 = vmor %vm2768, %vm2769
      %v2771 = vsel %vm2770, %v2762, %v2767
      %v2772 = vrsqrt.pop %v1888
      %v2773 = vmul.f32 %v2772, %v1888
      %v2774 = vmul.f32 %v2773, %v2772
      %v2775 = vmul.f32 0.5, %v2774
      %v2776 = vsub.f32 1.5, %v2775
      %v2777 = vmul.f32 %v2772, %v2776
      %vm2778 = vweird.f32 %v1888
      %vm2779 = vweird.f32 %v2772
      %vm2780 = vmor %vm2778, %vm2779
      %v2781 = vsel %vm2780, %v2772, %v2777
      %v2782 = vrsqrt.pop %v1889
      %v2783 = vmul.f32 %v2782, %v1889
      %v2784 = vmul.f32 %v2783, %v2782
      %v2785 = vmul.f32 0.5, %v2784
      %v2786 = vsub.f32 1.5, %v2785
      %v2787 = vmul.f32 %v2782, %v2786
      %vm2788 = vweird.f32 %v1889
      %vm2789 = vweird.f32 %v2782
      %vm2790 = vmor %vm2788, %vm2789
      %v2791 = vsel %vm2790, %v2782, %v2787
      %v2792 = vrsqrt.pop %v1890
      %v2793 = vmul.f32 %v2792, %v1890
      %v2794 = vmul.f32 %v2793, %v2792
      %v2795 = vmul.f32 0.5, %v2794
      %v2796 = vsub.f32 1.5, %v2795
      %v2797 = vmul.f32 %v2792, %v2796
      %vm2798 = vweird.f32 %v1890
      %vm2799 = vweird.f32 %v2792
      %vm2800 = vmor %vm2798, %vm2799
      %v2801 = vsel %vm2800, %v2792, %v2797
      %v2802 = vrsqrt.pop %v1891
      %v2803 = vmul.f32 %v2802, %v1891
      %v2804 = vmul.f32 %v2803, %v2802
      %v2805 = vmul.f32 0.5, %v2804
      %v2806 = vsub.f32 1.5, %v2805
      %v2807 = vmul.f32 %v2802, %v2806
      %vm2808 = vweird.f32 %v1891
      %vm2809 = vweird.f32 %v2802
      %vm2810 = vmor %vm2808, %vm2809
      %v2811 = vsel %vm2810, %v2802, %v2807
      %v2812 = vrsqrt.pop %v1892
      %v2813 = vmul.f32 %v2812, %v1892
      %v2814 = vmul.f32 %v2813, %v2812
      %v2815 = vmul.f32 0.5, %v2814
      %v2816 = vsub.f32 1.5, %v2815
      %v2817 = vmul.f32 %v2812, %v2816
      %vm2818 = vweird.f32 %v1892
      %vm2819 = vweird.f32 %v2812
      %vm2820 = vmor %vm2818, %vm2819
      %v2821 = vsel %vm2820, %v2812, %v2817
      %v2822 = vrsqrt.pop %v1893
      %v2823 = vmul.f32 %v2822, %v1893
      %v2824 = vmul.f32 %v2823, %v2822
      %v2825 = vmul.f32 0.5, %v2824
      %v2826 = vsub.f32 1.5, %v2825
      %v2827 = vmul.f32 %v2822, %v2826
      %vm2828 = vweird.f32 %v1893
      %vm2829 = vweird.f32 %v2822
      %vm2830 = vmor %vm2828, %vm2829
      %v2831 = vsel %vm2830, %v2822, %v2827
      %v2832 = vrsqrt.pop %v1894
      %v2833 = vmul.f32 %v2832, %v1894
      %v2834 = vmul.f32 %v2833, %v2832
      %v2835 = vmul.f32 0.5, %v2834
      %v2836 = vsub.f32 1.5, %v2835
      %v2837 = vmul.f32 %v2832, %v2836
      %vm2838 = vweird.f32 %v1894
      %vm2839 = vweird.f32 %v2832
      %vm2840 = vmor %vm2838, %vm2839
      %v2841 = vsel %vm2840, %v2832, %v2837
      %v2842 = vrsqrt.pop %v1895
      %v2843 = vmul.f32 %v2842, %v1895
      %v2844 = vmul.f32 %v2843, %v2842
      %v2845 = vmul.f32 0.5, %v2844
      %v2846 = vsub.f32 1.5, %v2845
      %v2847 = vmul.f32 %v2842, %v2846
      %vm2848 = vweird.f32 %v1895
      %vm2849 = vweird.f32 %v2842
      %vm2850 = vmor %vm2848, %vm2849
      %v2851 = vsel %vm2850, %v2842, %v2847
      %v2852 = vrsqrt.pop %v1896
      %v2853 = vmul.f32 %v2852, %v1896
      %v2854 = vmul.f32 %v2853, %v2852
      %v2855 = vmul.f32 0.5, %v2854
      %v2856 = vsub.f32 1.5, %v2855
      %v2857 = vmul.f32 %v2852, %v2856
      %vm2858 = vweird.f32 %v1896
      %vm2859 = vweird.f32 %v2852
      %vm2860 = vmor %vm2858, %vm2859
      %v2861 = vsel %vm2860, %v2852, %v2857
      %v2862 = vrsqrt.pop %v1897
      %v2863 = vmul.f32 %v2862, %v1897
      %v2864 = vmul.f32 %v2863, %v2862
      %v2865 = vmul.f32 0.5, %v2864
      %v2866 = vsub.f32 1.5, %v2865
      %v2867 = vmul.f32 %v2862, %v2866
      %vm2868 = vweird.f32 %v1897
      %vm2869 = vweird.f32 %v2862
      %vm2870 = vmor %vm2868, %vm2869
      %v2871 = vsel %vm2870, %v2862, %v2867
      %v2872 = vrsqrt.pop %v1898
      %v2873 = vmul.f32 %v2872, %v1898
      %v2874 = vmul.f32 %v2873, %v2872
      %v2875 = vmul.f32 0.5, %v2874
      %v2876 = vsub.f32 1.5, %v2875
      %v2877 = vmul.f32 %v2872, %v2876
      %vm2878 = vweird.f32 %v1898
      %vm2879 = vweird.f32 %v2872
      %vm2880 = vmor %vm2878, %vm2879
      %v2881 = vsel %vm2880, %v2872, %v2877
      %v2882 = vrsqrt.pop %v1899
      %v2883 = vmul.f32 %v2882, %v1899
      %v2884 = vmul.f32 %v2883, %v2882
      %v2885 = vmul.f32 0.5, %v2884
      %v2886 = vsub.f32 1.5, %v2885
      %v2887 = vmul.f32 %v2882, %v2886
      %vm2888 = vweird.f32 %v1899
      %vm2889 = vweird.f32 %v2882
      %vm2890 = vmor %vm2888, %vm2889
      %v2891 = vsel %vm2890, %v2882, %v2887
      %v2892 = vrsqrt.pop %v1900
      %v2893 = vmul.f32 %v2892, %v1900
      %v2894 = vmul.f32 %v2893, %v2892
      %v2895 = vmul.f32 0.5, %v2894
      %v2896 = vsub.f32 1.5, %v2895
      %v2897 = vmul.f32 %v2892, %v2896
      %vm2898 = vweird.f32 %v1900
      %vm2899 = vweird.f32 %v2892
      %vm2900 = vmor %vm2898, %vm2899
      %v2901 = vsel %vm2900, %v2892, %v2897
      %v2902 = vrsqrt.pop %v1901
      %v2903 = vmul.f32 %v2902, %v1901
      %v2904 = vmul.f32 %v2903, %v2902
      %v2905 = vmul.f32 0.5, %v2904
      %v2906 = vsub.f32 1.5, %v2905
      %v2907 = vmul.f32 %v2902, %v2906
      %vm2908 = vweird.f32 %v1901
      %vm2909 = vweird.f32 %v2902
      %vm2910 = vmor %vm2908, %vm2909
      %v2911 = vsel %vm2910, %v2902, %v2907
      %v2912 = vrsqrt.pop %v1902
      %v2913 = vmul.f32 %v2912, %v1902
      %v2914 = vmul.f32 %v2913, %v2912
      %v2915 = vmul.f32 0.5, %v2914
      %v2916 = vsub.f32 1.5, %v2915
      %v2917 = vmul.f32 %v2912, %v2916
      %vm2918 = vweird.f32 %v1902
      %vm2919 = vweird.f32 %v2912
      %vm2920 = vmor %vm2918, %vm2919
      %v2921 = vsel %vm2920, %v2912, %v2917
      %v2922 = vrsqrt.pop %v1903
      %v2923 = vmul.f32 %v2922, %v1903
      %v2924 = vmul.f32 %v2923, %v2922
      %v2925 = vmul.f32 0.5, %v2924
      %v2926 = vsub.f32 1.5, %v2925
      %v2927 = vmul.f32 %v2922, %v2926
      %vm2928 = vweird.f32 %v1903
      %vm2929 = vweird.f32 %v2922
      %vm2930 = vmor %vm2928, %vm2929
      %v2931 = vsel %vm2930, %v2922, %v2927
      %v2932 = vrsqrt.pop %v1904
      %v2933 = vmul.f32 %v2932, %v1904
      %v2934 = vmul.f32 %v2933, %v2932
      %v2935 = vmul.f32 0.5, %v2934
      %v2936 = vsub.f32 1.5, %v2935
      %v2937 = vmul.f32 %v2932, %v2936
      %vm2938 = vweird.f32 %v1904
      %vm2939 = vweird.f32 %v2932
      %vm2940 = vmor %vm2938, %vm2939
      %v2941 = vsel %vm2940, %v2932, %v2937
      %v2942 = vrsqrt.pop %v1905
      %v2943 = vmul.f32 %v2942, %v1905
      %v2944 = vmul.f32 %v2943, %v2942
      %v2945 = vmul.f32 0.5, %v2944
      %v2946 = vsub.f32 1.5, %v2945
      %v2947 = vmul.f32 %v2942, %v2946
      %vm2948 = vweird.f32 %v1905
      %vm2949 = vweird.f32 %v2942
      %vm2950 = vmor %vm2948, %vm2949
      %v2951 = vsel %vm2950, %v2942, %v2947
      %v2952 = vrsqrt.pop %v1906
      %v2953 = vmul.f32 %v2952, %v1906
      %v2954 = vmul.f32 %v2953, %v2952
      %v2955 = vmul.f32 0.5, %v2954
      %v2956 = vsub.f32 1.5, %v2955
      %v2957 = vmul.f32 %v2952, %v2956
      %vm2958 = vweird.f32 %v1906
      %vm2959 = vweird.f32 %v2952
      %vm2960 = vmor %vm2958, %vm2959
      %v2961 = vsel %vm2960, %v2952, %v2957
      %v2962 = vrsqrt.pop %v1907
      %v2963 = vmul.f32 %v2962, %v1907
      %v2964 = vmul.f32 %v2963, %v2962
      %v2965 = vmul.f32 0.5, %v2964
      %v2966 = vsub.f32 1.5, %v2965
      %v2967 = vmul.f32 %v2962, %v2966
      %vm2968 = vweird.f32 %v1907
      %vm2969 = vweird.f32 %v2962
      %vm2970 = vmor %vm2968, %vm2969
      %v2971 = vsel %vm2970, %v2962, %v2967
      %v2972 = vrsqrt.pop %v1908
      %v2973 = vmul.f32 %v2972, %v1908
      %v2974 = vmul.f32 %v2973, %v2972
      %v2975 = vmul.f32 0.5, %v2974
      %v2976 = vsub.f32 1.5, %v2975
      %v2977 = vmul.f32 %v2972, %v2976
      %vm2978 = vweird.f32 %v1908
      %vm2979 = vweird.f32 %v2972
      %vm2980 = vmor %vm2978, %vm2979
      %v2981 = vsel %vm2980, %v2972, %v2977
      %v2982 = vrsqrt.pop %v1909
      %v2983 = vmul.f32 %v2982, %v1909
      %v2984 = vmul.f32 %v2983, %v2982
      %v2985 = vmul.f32 0.5, %v2984
      %v2986 = vsub.f32 1.5, %v2985
      %v2987 = vmul.f32 %v2982, %v2986
      %vm2988 = vweird.f32 %v1909
      %vm2989 = vweird.f32 %v2982
      %vm2990 = vmor %vm2988, %vm2989
      %v2991 = vsel %vm2990, %v2982, %v2987
      %v2992 = vrsqrt.pop %v1910
      %v2993 = vmul.f32 %v2992, %v1910
      %v2994 = vmul.f32 %v2993, %v2992
      %v2995 = vmul.f32 0.5, %v2994
      %v2996 = vsub.f32 1.5, %v2995
      %v2997 = vmul.f32 %v2992, %v2996
      %vm2998 = vweird.f32 %v1910
      %vm2999 = vweird.f32 %v2992
      %vm3000 = vmor %vm2998, %vm2999
      %v3001 = vsel %vm3000, %v2992, %v2997
      %v3002 = vrsqrt.pop %v1911
      %v3003 = vmul.f32 %v3002, %v1911
      %v3004 = vmul.f32 %v3003, %v3002
      %v3005 = vmul.f32 0.5, %v3004
      %v3006 = vsub.f32 1.5, %v3005
      %v3007 = vmul.f32 %v3002, %v3006
      %vm3008 = vweird.f32 %v1911
      %vm3009 = vweird.f32 %v3002
      %vm3010 = vmor %vm3008, %vm3009
      %v3011 = vsel %vm3010, %v3002, %v3007
      %v3012 = vrsqrt.pop %v1912
      %v3013 = vmul.f32 %v3012, %v1912
      %v3014 = vmul.f32 %v3013, %v3012
      %v3015 = vmul.f32 0.5, %v3014
      %v3016 = vsub.f32 1.5, %v3015
      %v3017 = vmul.f32 %v3012, %v3016
      %vm3018 = vweird.f32 %v1912
      %vm3019 = vweird.f32 %v3012
      %vm3020 = vmor %vm3018, %vm3019
      %v3021 = vsel %vm3020, %v3012, %v3017
      %v3022 = vrsqrt.pop %v1913
      %v3023 = vmul.f32 %v3022, %v1913
      %v3024 = vmul.f32 %v3023, %v3022
      %v3025 = vmul.f32 0.5, %v3024
      %v3026 = vsub.f32 1.5, %v3025
      %v3027 = vmul.f32 %v3022, %v3026
      %vm3028 = vweird.f32 %v1913
      %vm3029 = vweird.f32 %v3022
      %vm3030 = vmor %vm3028, %vm3029
      %v3031 = vsel %vm3030, %v3022, %v3027
      %v3032 = vrsqrt.pop %v1914
      %v3033 = vmul.f32 %v3032, %v1914
      %v3034 = vmul.f32 %v3033, %v3032
      %v3035 = vmul.f32 0.5, %v3034
      %v3036 = vsub.f32 1.5, %v3035
      %v3037 = vmul.f32 %v3032, %v3036
      %vm3038 = vweird.f32 %v1914
      %vm3039 = vweird.f32 %v3032
      %vm3040 = vmor %vm3038, %vm3039
      %v3041 = vsel %vm3040, %v3032, %v3037
      %v3042 = vrsqrt.pop %v1915
      %v3043 = vmul.f32 %v3042, %v1915
      %v3044 = vmul.f32 %v3043, %v3042
      %v3045 = vmul.f32 0.5, %v3044
      %v3046 = vsub.f32 1.5, %v3045
      %v3047 = vmul.f32 %v3042, %v3046
      %vm3048 = vweird.f32 %v1915
      %vm3049 = vweird.f32 %v3042
      %vm3050 = vmor %vm3048, %vm3049
      %v3051 = vsel %vm3050, %v3042, %v3047
      %v3052 = vrsqrt.pop %v1916
      %v3053 = vmul.f32 %v3052, %v1916
      %v3054 = vmul.f32 %v3053, %v3052
      %v3055 = vmul.f32 0.5, %v3054
      %v3056 = vsub.f32 1.5, %v3055
      %v3057 = vmul.f32 %v3052, %v3056
      %vm3058 = vweird.f32 %v1916
      %vm3059 = vweird.f32 %v3052
      %vm3060 = vmor %vm3058, %vm3059
      %v3061 = vsel %vm3060, %v3052, %v3057
      %v3062 = vrsqrt.pop %v1917
      %v3063 = vmul.f32 %v3062, %v1917
      %v3064 = vmul.f32 %v3063, %v3062
      %v3065 = vmul.f32 0.5, %v3064
      %v3066 = vsub.f32 1.5, %v3065
      %v3067 = vmul.f32 %v3062, %v3066
      %vm3068 = vweird.f32 %v1917
      %vm3069 = vweird.f32 %v3062
      %vm3070 = vmor %vm3068, %vm3069
      %v3071 = vsel %vm3070, %v3062, %v3067
      %v3072 = vrsqrt.pop %v1918
      %v3073 = vmul.f32 %v3072, %v1918
      %v3074 = vmul.f32 %v3073, %v3072
      %v3075 = vmul.f32 0.5, %v3074
      %v3076 = vsub.f32 1.5, %v3075
      %v3077 = vmul.f32 %v3072, %v3076
      %vm3078 = vweird.f32 %v1918
      %vm3079 = vweird.f32 %v3072
      %vm3080 = vmor %vm3078, %vm3079
      %v3081 = vsel %vm3080, %v3072, %v3077
      %v3082 = vrsqrt.pop %v1919
      %v3083 = vmul.f32 %v3082, %v1919
      %v3084 = vmul.f32 %v3083, %v3082
      %v3085 = vmul.f32 0.5, %v3084
      %v3086 = vsub.f32 1.5, %v3085
      %v3087 = vmul.f32 %v3082, %v3086
      %vm3088 = vweird.f32 %v1919
      %vm3089 = vweird.f32 %v3082
      %vm3090 = vmor %vm3088, %vm3089
      %v3091 = vsel %vm3090, %v3082, %v3087
      %v3092 = vrsqrt.pop %v1920
      %v3093 = vmul.f32 %v3092, %v1920
      %v3094 = vmul.f32 %v3093, %v3092
      %v3095 = vmul.f32 0.5, %v3094
      %v3096 = vsub.f32 1.5, %v3095
      %v3097 = vmul.f32 %v3092, %v3096
      %vm3098 = vweird.f32 %v1920
      %vm3099 = vweird.f32 %v3092
      %vm3100 = vmor %vm3098, %vm3099
      %v3101 = vsel %vm3100, %v3092, %v3097
      %v3102 = vrsqrt.pop %v1921
      %v3103 = vmul.f32 %v3102, %v1921
      %v3104 = vmul.f32 %v3103, %v3102
      %v3105 = vmul.f32 0.5, %v3104
      %v3106 = vsub.f32 1.5, %v3105
      %v3107 = vmul.f32 %v3102, %v3106
      %vm3108 = vweird.f32 %v1921
      %vm3109 = vweird.f32 %v3102
      %vm3110 = vmor %vm3108, %vm3109
      %v3111 = vsel %vm3110, %v3102, %v3107
      %v3112 = vrsqrt.pop %v1922
      %v3113 = vmul.f32 %v3112, %v1922
      %v3114 = vmul.f32 %v3113, %v3112
      %v3115 = vmul.f32 0.5, %v3114
      %v3116 = vsub.f32 1.5, %v3115
      %v3117 = vmul.f32 %v3112, %v3116
      %vm3118 = vweird.f32 %v1922
      %vm3119 = vweird.f32 %v3112
      %vm3120 = vmor %vm3118, %vm3119
      %v3121 = vsel %vm3120, %v3112, %v3117
      %v3122 = vrsqrt.pop %v1923
      %v3123 = vmul.f32 %v3122, %v1923
      %v3124 = vmul.f32 %v3123, %v3122
      %v3125 = vmul.f32 0.5, %v3124
      %v3126 = vsub.f32 1.5, %v3125
      %v3127 = vmul.f32 %v3122, %v3126
      %vm3128 = vweird.f32 %v1923
      %vm3129 = vweird.f32 %v3122
      %vm3130 = vmor %vm3128, %vm3129
      %v3131 = vsel %vm3130, %v3122, %v3127
      %v3132 = vrsqrt.pop %v1924
      %v3133 = vmul.f32 %v3132, %v1924
      %v3134 = vmul.f32 %v3133, %v3132
      %v3135 = vmul.f32 0.5, %v3134
      %v3136 = vsub.f32 1.5, %v3135
      %v3137 = vmul.f32 %v3132, %v3136
      %vm3138 = vweird.f32 %v1924
      %vm3139 = vweird.f32 %v3132
      %vm3140 = vmor %vm3138, %vm3139
      %v3141 = vsel %vm3140, %v3132, %v3137
      %v3142 = vrsqrt.pop %v1925
      %v3143 = vmul.f32 %v3142, %v1925
      %v3144 = vmul.f32 %v3143, %v3142
      %v3145 = vmul.f32 0.5, %v3144
      %v3146 = vsub.f32 1.5, %v3145
      %v3147 = vmul.f32 %v3142, %v3146
      %vm3148 = vweird.f32 %v1925
      %vm3149 = vweird.f32 %v3142
      %vm3150 = vmor %vm3148, %vm3149
      %v3151 = vsel %vm3150, %v3142, %v3147
      %v3152 = vrsqrt.pop %v1926
      %v3153 = vmul.f32 %v3152, %v1926
      %v3154 = vmul.f32 %v3153, %v3152
      %v3155 = vmul.f32 0.5, %v3154
      %v3156 = vsub.f32 1.5, %v3155
      %v3157 = vmul.f32 %v3152, %v3156
      %vm3158 = vweird.f32 %v1926
      %vm3159 = vweird.f32 %v3152
      %vm3160 = vmor %vm3158, %vm3159
      %v3161 = vsel %vm3160, %v3152, %v3157
      %v3162 = vrsqrt.pop %v1927
      %v3163 = vmul.f32 %v3162, %v1927
      %v3164 = vmul.f32 %v3163, %v3162
      %v3165 = vmul.f32 0.5, %v3164
      %v3166 = vsub.f32 1.5, %v3165
      %v3167 = vmul.f32 %v3162, %v3166
      %vm3168 = vweird.f32 %v1927
      %vm3169 = vweird.f32 %v3162
      %vm3170 = vmor %vm3168, %vm3169
      %v3171 = vsel %vm3170, %v3162, %v3167
      %v3172 = vrsqrt.pop %v1928
      %v3173 = vmul.f32 %v3172, %v1928
      %v3174 = vmul.f32 %v3173, %v3172
      %v3175 = vmul.f32 0.5, %v3174
      %v3176 = vsub.f32 1.5, %v3175
      %v3177 = vmul.f32 %v3172, %v3176
      %vm3178 = vweird.f32 %v1928
      %vm3179 = vweird.f32 %v3172
      %vm3180 = vmor %vm3178, %vm3179
      %v3181 = vsel %vm3180, %v3172, %v3177
      %v3182 = vrsqrt.pop %v1929
      %v3183 = vmul.f32 %v3182, %v1929
      %v3184 = vmul.f32 %v3183, %v3182
      %v3185 = vmul.f32 0.5, %v3184
      %v3186 = vsub.f32 1.5, %v3185
      %v3187 = vmul.f32 %v3182, %v3186
      %vm3188 = vweird.f32 %v1929
      %vm3189 = vweird.f32 %v3182
      %vm3190 = vmor %vm3188, %vm3189
      %v3191 = vsel %vm3190, %v3182, %v3187
      %v3192 = vrsqrt.pop %v1930
      %v3193 = vmul.f32 %v3192, %v1930
      %v3194 = vmul.f32 %v3193, %v3192
      %v3195 = vmul.f32 0.5, %v3194
      %v3196 = vsub.f32 1.5, %v3195
      %v3197 = vmul.f32 %v3192, %v3196
      %vm3198 = vweird.f32 %v1930
      %vm3199 = vweird.f32 %v3192
      %vm3200 = vmor %vm3198, %vm3199
      %v3201 = vsel %vm3200, %v3192, %v3197
      %v3202 = vrsqrt.pop %v1931
      %v3203 = vmul.f32 %v3202, %v1931
      %v3204 = vmul.f32 %v3203, %v3202
      %v3205 = vmul.f32 0.5, %v3204
      %v3206 = vsub.f32 1.5, %v3205
      %v3207 = vmul.f32 %v3202, %v3206
      %vm3208 = vweird.f32 %v1931
      %vm3209 = vweird.f32 %v3202
      %vm3210 = vmor %vm3208, %vm3209
      %v3211 = vsel %vm3210, %v3202, %v3207
      %v3212 = vld [vmem:[%s253] sm:$0xff]
      %v3213 = vld [vmem:[%s253 + $0x8] sm:$0xff]
      %v3214 = vld [vmem:[%s253 + $0x10] sm:$0xff]
      %v3215 = vld [vmem:[%s253 + $0x18] sm:$0xff]
      %v3216 = vld [vmem:[%s253 + $0x20] sm:$0xff]
      %v3217 = vld [vmem:[%s253 + $0x28] sm:$0xff]
      %v3218 = vld [vmem:[%s253 + $0x30] sm:$0xff]
      %v3219 = vld [vmem:[%s253 + $0x38] sm:$0xff]
      %v3220 = vld [vmem:[%s253 + $0x40] sm:$0xff]
      %v3221 = vld [vmem:[%s253 + $0x48] sm:$0xff]
      %v3222 = vld [vmem:[%s253 + $0x50] sm:$0xff]
      %v3223 = vld [vmem:[%s253 + $0x58] sm:$0xff]
      %v3224 = vld [vmem:[%s253 + $0x60] sm:$0xff]
      %v3225 = vld [vmem:[%s253 + $0x68] sm:$0xff]
      %v3226 = vld [vmem:[%s253 + $0x70] sm:$0xff]
      %v3227 = vld [vmem:[%s253 + $0x78] sm:$0xff]
      %v3228 = vld [vmem:[%s253 + $0x80] sm:$0xff]
      %v3229 = vld [vmem:[%s253 + $0x88] sm:$0xff]
      %v3230 = vld [vmem:[%s253 + $0x90] sm:$0xff]
      %v3231 = vld [vmem:[%s253 + $0x98] sm:$0xff]
      %v3232 = vld [vmem:[%s253 + $0xa0] sm:$0xff]
      %v3233 = vld [vmem:[%s253 + $0xa8] sm:$0xff]
      %v3234 = vld [vmem:[%s253 + $0xb0] sm:$0xff]
      %v3235 = vld [vmem:[%s253 + $0xb8] sm:$0xff]
      %v3236 = vld [vmem:[%s253 + $0xc0] sm:$0xff]
      %v3237 = vld [vmem:[%s253 + $0xc8] sm:$0xff]
      %v3238 = vld [vmem:[%s253 + $0xd0] sm:$0xff]
      %v3239 = vld [vmem:[%s253 + $0xd8] sm:$0xff]
      %v3240 = vld [vmem:[%s253 + $0xe0] sm:$0xff]
      %v3241 = vld [vmem:[%s253 + $0xe8] sm:$0xff]
      %v3242 = vld [vmem:[%s253 + $0xf0] sm:$0xff]
      %v3243 = vld [vmem:[%s253 + $0xf8] sm:$0xff]
      %v3244 = vld [vmem:[%s253 + $0x100] sm:$0xff]
      %v3245 = vld [vmem:[%s253 + $0x108] sm:$0xff]
      %v3246 = vld [vmem:[%s253 + $0x110] sm:$0xff]
      %v3247 = vld [vmem:[%s253 + $0x118] sm:$0xff]
      %v3248 = vld [vmem:[%s253 + $0x120] sm:$0xff]
      %v3249 = vld [vmem:[%s253 + $0x128] sm:$0xff]
      %v3250 = vld [vmem:[%s253 + $0x130] sm:$0xff]
      %v3251 = vld [vmem:[%s253 + $0x138] sm:$0xff]
      %v3252 = vld [vmem:[%s253 + $0x140] sm:$0xff]
      %v3253 = vld [vmem:[%s253 + $0x148] sm:$0xff]
      %v3254 = vld [vmem:[%s253 + $0x150] sm:$0xff]
      %v3255 = vld [vmem:[%s253 + $0x158] sm:$0xff]
      %v3256 = vld [vmem:[%s253 + $0x160] sm:$0xff]
      %v3257 = vld [vmem:[%s253 + $0x168] sm:$0xff]
      %v3258 = vld [vmem:[%s253 + $0x170] sm:$0xff]
      %v3259 = vld [vmem:[%s253 + $0x178] sm:$0xff]
      %v3260 = vld [vmem:[%s253 + $0x180] sm:$0xff]
      %v3261 = vld [vmem:[%s253 + $0x188] sm:$0xff]
      %v3262 = vld [vmem:[%s253 + $0x190] sm:$0xff]
      %v3263 = vld [vmem:[%s253 + $0x198] sm:$0xff]
      %v3264 = vld [vmem:[%s253 + $0x1a0] sm:$0xff]
      %v3265 = vld [vmem:[%s253 + $0x1a8] sm:$0xff]
      %v3266 = vld [vmem:[%s253 + $0x1b0] sm:$0xff]
      %v3267 = vld [vmem:[%s253 + $0x1b8] sm:$0xff]
      %v3268 = vld [vmem:[%s253 + $0x1c0] sm:$0xff]
      %v3269 = vld [vmem:[%s253 + $0x1c8] sm:$0xff]
      %v3270 = vld [vmem:[%s253 + $0x1d0] sm:$0xff]
      %v3271 = vld [vmem:[%s253 + $0x1d8] sm:$0xff]
      %v3272 = vld [vmem:[%s253 + $0x1e0] sm:$0xff]
      %v3273 = vld [vmem:[%s253 + $0x1e8] sm:$0xff]
      %v3274 = vld [vmem:[%s253 + $0x1f0] sm:$0xff]
      %v3275 = vld [vmem:[%s253 + $0x1f8] sm:$0xff]
      %v3276 = vld [vmem:[%s253 + $0x200] sm:$0xff]
      %v3277 = vld [vmem:[%s253 + $0x208] sm:$0xff]
      %v3278 = vld [vmem:[%s253 + $0x210] sm:$0xff]
      %v3279 = vld [vmem:[%s253 + $0x218] sm:$0xff]
      %v3280 = vld [vmem:[%s253 + $0x220] sm:$0xff]
      %v3281 = vld [vmem:[%s253 + $0x228] sm:$0xff]
      %v3282 = vld [vmem:[%s253 + $0x230] sm:$0xff]
      %v3283 = vld [vmem:[%s253 + $0x238] sm:$0xff]
      %v3284 = vld [vmem:[%s253 + $0x240] sm:$0xff]
      %v3285 = vld [vmem:[%s253 + $0x248] sm:$0xff]
      %v3286 = vld [vmem:[%s253 + $0x250] sm:$0xff]
      %v3287 = vld [vmem:[%s253 + $0x258] sm:$0xff]
      %v3288 = vld [vmem:[%s253 + $0x260] sm:$0xff]
      %v3289 = vld [vmem:[%s253 + $0x268] sm:$0xff]
      %v3290 = vld [vmem:[%s253 + $0x270] sm:$0xff]
      %v3291 = vld [vmem:[%s253 + $0x278] sm:$0xff]
      %v3292 = vld [vmem:[%s253 + $0x280] sm:$0xff]
      %v3293 = vld [vmem:[%s253 + $0x288] sm:$0xff]
      %v3294 = vld [vmem:[%s253 + $0x290] sm:$0xff]
      %v3295 = vld [vmem:[%s253 + $0x298] sm:$0xff]
      %v3296 = vld [vmem:[%s253 + $0x2a0] sm:$0xff]
      %v3297 = vld [vmem:[%s253 + $0x2a8] sm:$0xff]
      %v3298 = vld [vmem:[%s253 + $0x2b0] sm:$0xff]
      %v3299 = vld [vmem:[%s253 + $0x2b8] sm:$0xff]
      %v3300 = vld [vmem:[%s253 + $0x2c0] sm:$0xff]
      %v3301 = vld [vmem:[%s253 + $0x2c8] sm:$0xff]
      %v3302 = vld [vmem:[%s253 + $0x2d0] sm:$0xff]
      %v3303 = vld [vmem:[%s253 + $0x2d8] sm:$0xff]
      %v3304 = vld [vmem:[%s253 + $0x2e0] sm:$0xff]
      %v3305 = vld [vmem:[%s253 + $0x2e8] sm:$0xff]
      %v3306 = vld [vmem:[%s253 + $0x2f0] sm:$0xff]
      %v3307 = vld [vmem:[%s253 + $0x2f8] sm:$0xff]
      %v3308 = vld [vmem:[%s253 + $0x300] sm:$0xff]
      %v3309 = vld [vmem:[%s253 + $0x308] sm:$0xff]
      %v3310 = vld [vmem:[%s253 + $0x310] sm:$0xff]
      %v3311 = vld [vmem:[%s253 + $0x318] sm:$0xff]
      %v3312 = vld [vmem:[%s253 + $0x320] sm:$0xff]
      %v3313 = vld [vmem:[%s253 + $0x328] sm:$0xff]
      %v3314 = vld [vmem:[%s253 + $0x330] sm:$0xff]
      %v3315 = vld [vmem:[%s253 + $0x338] sm:$0xff]
      %v3316 = vld [vmem:[%s253 + $0x340] sm:$0xff]
      %v3317 = vld [vmem:[%s253 + $0x348] sm:$0xff]
      %v3318 = vld [vmem:[%s253 + $0x350] sm:$0xff]
      %v3319 = vld [vmem:[%s253 + $0x358] sm:$0xff]
      %v3320 = vld [vmem:[%s253 + $0x360] sm:$0xff]
      %v3321 = vld [vmem:[%s253 + $0x368] sm:$0xff]
      %v3322 = vld [vmem:[%s253 + $0x370] sm:$0xff]
      %v3323 = vld [vmem:[%s253 + $0x378] sm:$0xff]
      %v3324 = vld [vmem:[%s253 + $0x380] sm:$0xff]
      %v3325 = vld [vmem:[%s253 + $0x388] sm:$0xff]
      %v3326 = vld [vmem:[%s253 + $0x390] sm:$0xff]
      %v3327 = vld [vmem:[%s253 + $0x398] sm:$0xff]
      %v3328 = vld [vmem:[%s253 + $0x3a0] sm:$0xff]
      %v3329 = vld [vmem:[%s253 + $0x3a8] sm:$0xff]
      %v3330 = vld [vmem:[%s253 + $0x3b0] sm:$0xff]
      %v3331 = vld [vmem:[%s253 + $0x3b8] sm:$0xff]
      %v3332 = vld [vmem:[%s253 + $0x3c0] sm:$0xff]
      %v3333 = vld [vmem:[%s253 + $0x3c8] sm:$0xff]
      %v3334 = vld [vmem:[%s253 + $0x3d0] sm:$0xff]
      %v3335 = vld [vmem:[%s253 + $0x3d8] sm:$0xff]
      %v3336 = vld [vmem:[%s253 + $0x3e0] sm:$0xff]
      %v3337 = vld [vmem:[%s253 + $0x3e8] sm:$0xff]
      %v3338 = vld [vmem:[%s253 + $0x3f0] sm:$0xff]
      %v3339 = vld [vmem:[%s253 + $0x3f8] sm:$0xff]
      %v3340 = vmul.f32 %v1941, %v3212
      %v3341 = vmul.f32 %v1951, %v3213
      %v3342 = vmul.f32 %v1961, %v3214
      %v3343 = vmul.f32 %v1971, %v3215
      %v3344 = vmul.f32 %v1981, %v3216
      %v3345 = vmul.f32 %v1991, %v3217
      %v3346 = vmul.f32 %v2001, %v3218
      %v3347 = vmul.f32 %v2011, %v3219
      %v3348 = vmul.f32 %v2021, %v3220
      %v3349 = vmul.f32 %v2031, %v3221
      %v3350 = vmul.f32 %v2041, %v3222
      %v3351 = vmul.f32 %v2051, %v3223
      %v3352 = vmul.f32 %v2061, %v3224
      %v3353 = vmul.f32 %v2071, %v3225
      %v3354 = vmul.f32 %v2081, %v3226
      %v3355 = vmul.f32 %v2091, %v3227
      %v3356 = vmul.f32 %v2101, %v3228
      %v3357 = vmul.f32 %v2111, %v3229
      %v3358 = vmul.f32 %v2121, %v3230
      %v3359 = vmul.f32 %v2131, %v3231
      %v3360 = vmul.f32 %v2141, %v3232
      %v3361 = vmul.f32 %v2151, %v3233
      %v3362 = vmul.f32 %v2161, %v3234
      %v3363 = vmul.f32 %v2171, %v3235
      %v3364 = vmul.f32 %v2181, %v3236
      %v3365 = vmul.f32 %v2191, %v3237
      %v3366 = vmul.f32 %v2201, %v3238
      %v3367 = vmul.f32 %v2211, %v3239
      %v3368 = vmul.f32 %v2221, %v3240
      %v3369 = vmul.f32 %v2231, %v3241
      %v3370 = vmul.f32 %v2241, %v3242
      %v3371 = vmul.f32 %v2251, %v3243
      %v3372 = vmul.f32 %v2261, %v3244
      %v3373 = vmul.f32 %v2271, %v3245
      %v3374 = vmul.f32 %v2281, %v3246
      %v3375 = vmul.f32 %v2291, %v3247
      %v3376 = vmul.f32 %v2301, %v3248
      %v3377 = vmul.f32 %v2311, %v3249
      %v3378 = vmul.f32 %v2321, %v3250
      %v3379 = vmul.f32 %v2331, %v3251
      %v3380 = vmul.f32 %v2341, %v3252
      %v3381 = vmul.f32 %v2351, %v3253
      %v3382 = vmul.f32 %v2361, %v3254
      %v3383 = vmul.f32 %v2371, %v3255
      %v3384 = vmul.f32 %v2381, %v3256
      %v3385 = vmul.f32 %v2391, %v3257
      %v3386 = vmul.f32 %v2401, %v3258
      %v3387 = vmul.f32 %v2411, %v3259
      %v3388 = vmul.f32 %v2421, %v3260
      %v3389 = vmul.f32 %v2431, %v3261
      %v3390 = vmul.f32 %v2441, %v3262
      %v3391 = vmul.f32 %v2451, %v3263
      %v3392 = vmul.f32 %v2461, %v3264
      %v3393 = vmul.f32 %v2471, %v3265
      %v3394 = vmul.f32 %v2481, %v3266
      %v3395 = vmul.f32 %v2491, %v3267
      %v3396 = vmul.f32 %v2501, %v3268
      %v3397 = vmul.f32 %v2511, %v3269
      %v3398 = vmul.f32 %v2521, %v3270
      %v3399 = vmul.f32 %v2531, %v3271
      %v3400 = vmul.f32 %v2541, %v3272
      %v3401 = vmul.f32 %v2551, %v3273
      %v3402 = vmul.f32 %v2561, %v3274
      %v3403 = vmul.f32 %v2571, %v3275
      %v3404 = vmul.f32 %v2581, %v3276
      %v3405 = vmul.f32 %v2591, %v3277
      %v3406 = vmul.f32 %v2601, %v3278
      %v3407 = vmul.f32 %v2611, %v3279
      %v3408 = vmul.f32 %v2621, %v3280
      %v3409 = vmul.f32 %v2631, %v3281
      %v3410 = vmul.f32 %v2641, %v3282
      %v3411 = vmul.f32 %v2651, %v3283
      %v3412 = vmul.f32 %v2661, %v3284
      %v3413 = vmul.f32 %v2671, %v3285
      %v3414 = vmul.f32 %v2681, %v3286
      %v3415 = vmul.f32 %v2691, %v3287
      %v3416 = vmul.f32 %v2701, %v3288
      %v3417 = vmul.f32 %v2711, %v3289
      %v3418 = vmul.f32 %v2721, %v3290
      %v3419 = vmul.f32 %v2731, %v3291
      %v3420 = vmul.f32 %v2741, %v3292
      %v3421 = vmul.f32 %v2751, %v3293
      %v3422 = vmul.f32 %v2761, %v3294
      %v3423 = vmul.f32 %v2771, %v3295
      %v3424 = vmul.f32 %v2781, %v3296
      %v3425 = vmul.f32 %v2791, %v3297
      %v3426 = vmul.f32 %v2801, %v3298
      %v3427 = vmul.f32 %v2811, %v3299
      %v3428 = vmul.f32 %v2821, %v3300
      %v3429 = vmul.f32 %v2831, %v3301
      %v3430 = vmul.f32 %v2841, %v3302
      %v3431 = vmul.f32 %v2851, %v3303
      %v3432 = vmul.f32 %v2861, %v3304
      %v3433 = vmul.f32 %v2871, %v3305
      %v3434 = vmul.f32 %v2881, %v3306
      %v3435 = vmul.f32 %v2891, %v3307
      %v3436 = vmul.f32 %v2901, %v3308
      %v3437 = vmul.f32 %v2911, %v3309
      %v3438 = vmul.f32 %v2921, %v3310
      %v3439 = vmul.f32 %v2931, %v3311
      %v3440 = vmul.f32 %v2941, %v3312
      %v3441 = vmul.f32 %v2951, %v3313
      %v3442 = vmul.f32 %v2961, %v3314
      %v3443 = vmul.f32 %v2971, %v3315
      %v3444 = vmul.f32 %v2981, %v3316
      %v3445 = vmul.f32 %v2991, %v3317
      %v3446 = vmul.f32 %v3001, %v3318
      %v3447 = vmul.f32 %v3011, %v3319
      %v3448 = vmul.f32 %v3021, %v3320
      %v3449 = vmul.f32 %v3031, %v3321
      %v3450 = vmul.f32 %v3041, %v3322
      %v3451 = vmul.f32 %v3051, %v3323
      %v3452 = vmul.f32 %v3061, %v3324
      %v3453 = vmul.f32 %v3071, %v3325
      %v3454 = vmul.f32 %v3081, %v3326
      %v3455 = vmul.f32 %v3091, %v3327
      %v3456 = vmul.f32 %v3101, %v3328
      %v3457 = vmul.f32 %v3111, %v3329
      %v3458 = vmul.f32 %v3121, %v3330
      %v3459 = vmul.f32 %v3131, %v3331
      %v3460 = vmul.f32 %v3141, %v3332
      %v3461 = vmul.f32 %v3151, %v3333
      %v3462 = vmul.f32 %v3161, %v3334
      %v3463 = vmul.f32 %v3171, %v3335
      %v3464 = vmul.f32 %v3181, %v3336
      %v3465 = vmul.f32 %v3191, %v3337
      %v3466 = vmul.f32 %v3201, %v3338
      %v3467 = vmul.f32 %v3211, %v3339
      %v3468 = vld [vmem:[%s259] sm:$0xff]
      %v3469 = vld [vmem:[%s259 + $0x8] sm:$0xff]
      %v3470 = vld [vmem:[%s259 + $0x10] sm:$0xff]
      %v3471 = vld [vmem:[%s259 + $0x18] sm:$0xff]
      %v3472 = vld [vmem:[%s259 + $0x20] sm:$0xff]
      %v3473 = vld [vmem:[%s259 + $0x28] sm:$0xff]
      %v3474 = vld [vmem:[%s259 + $0x30] sm:$0xff]
      %v3475 = vld [vmem:[%s259 + $0x38] sm:$0xff]
      %v3476 = vld [vmem:[%s259 + $0x40] sm:$0xff]
      %v3477 = vld [vmem:[%s259 + $0x48] sm:$0xff]
      %v3478 = vld [vmem:[%s259 + $0x50] sm:$0xff]
      %v3479 = vld [vmem:[%s259 + $0x58] sm:$0xff]
      %v3480 = vld [vmem:[%s259 + $0x60] sm:$0xff]
      %v3481 = vld [vmem:[%s259 + $0x68] sm:$0xff]
      %v3482 = vld [vmem:[%s259 + $0x70] sm:$0xff]
      %v3483 = vld [vmem:[%s259 + $0x78] sm:$0xff]
      %v3484 = vld [vmem:[%s259 + $0x80] sm:$0xff]
      %v3485 = vld [vmem:[%s259 + $0x88] sm:$0xff]
      %v3486 = vld [vmem:[%s259 + $0x90] sm:$0xff]
      %v3487 = vld [vmem:[%s259 + $0x98] sm:$0xff]
      %v3488 = vld [vmem:[%s259 + $0xa0] sm:$0xff]
      %v3489 = vld [vmem:[%s259 + $0xa8] sm:$0xff]
      %v3490 = vld [vmem:[%s259 + $0xb0] sm:$0xff]
      %v3491 = vld [vmem:[%s259 + $0xb8] sm:$0xff]
      %v3492 = vld [vmem:[%s259 + $0xc0] sm:$0xff]
      %v3493 = vld [vmem:[%s259 + $0xc8] sm:$0xff]
      %v3494 = vld [vmem:[%s259 + $0xd0] sm:$0xff]
      %v3495 = vld [vmem:[%s259 + $0xd8] sm:$0xff]
      %v3496 = vld [vmem:[%s259 + $0xe0] sm:$0xff]
      %v3497 = vld [vmem:[%s259 + $0xe8] sm:$0xff]
      %v3498 = vld [vmem:[%s259 + $0xf0] sm:$0xff]
      %v3499 = vld [vmem:[%s259 + $0xf8] sm:$0xff]
      %v3500 = vld [vmem:[%s259 + $0x100] sm:$0xff]
      %v3501 = vld [vmem:[%s259 + $0x108] sm:$0xff]
      %v3502 = vld [vmem:[%s259 + $0x110] sm:$0xff]
      %v3503 = vld [vmem:[%s259 + $0x118] sm:$0xff]
      %v3504 = vld [vmem:[%s259 + $0x120] sm:$0xff]
      %v3505 = vld [vmem:[%s259 + $0x128] sm:$0xff]
      %v3506 = vld [vmem:[%s259 + $0x130] sm:$0xff]
      %v3507 = vld [vmem:[%s259 + $0x138] sm:$0xff]
      %v3508 = vld [vmem:[%s259 + $0x140] sm:$0xff]
      %v3509 = vld [vmem:[%s259 + $0x148] sm:$0xff]
      %v3510 = vld [vmem:[%s259 + $0x150] sm:$0xff]
      %v3511 = vld [vmem:[%s259 + $0x158] sm:$0xff]
      %v3512 = vld [vmem:[%s259 + $0x160] sm:$0xff]
      %v3513 = vld [vmem:[%s259 + $0x168] sm:$0xff]
      %v3514 = vld [vmem:[%s259 + $0x170] sm:$0xff]
      %v3515 = vld [vmem:[%s259 + $0x178] sm:$0xff]
      %v3516 = vld [vmem:[%s259 + $0x180] sm:$0xff]
      %v3517 = vld [vmem:[%s259 + $0x188] sm:$0xff]
      %v3518 = vld [vmem:[%s259 + $0x190] sm:$0xff]
      %v3519 = vld [vmem:[%s259 + $0x198] sm:$0xff]
      %v3520 = vld [vmem:[%s259 + $0x1a0] sm:$0xff]
      %v3521 = vld [vmem:[%s259 + $0x1a8] sm:$0xff]
      %v3522 = vld [vmem:[%s259 + $0x1b0] sm:$0xff]
      %v3523 = vld [vmem:[%s259 + $0x1b8] sm:$0xff]
      %v3524 = vld [vmem:[%s259 + $0x1c0] sm:$0xff]
      %v3525 = vld [vmem:[%s259 + $0x1c8] sm:$0xff]
      %v3526 = vld [vmem:[%s259 + $0x1d0] sm:$0xff]
      %v3527 = vld [vmem:[%s259 + $0x1d8] sm:$0xff]
      %v3528 = vld [vmem:[%s259 + $0x1e0] sm:$0xff]
      %v3529 = vld [vmem:[%s259 + $0x1e8] sm:$0xff]
      %v3530 = vld [vmem:[%s259 + $0x1f0] sm:$0xff]
      %v3531 = vld [vmem:[%s259 + $0x1f8] sm:$0xff]
      %v3532 = vld [vmem:[%s259 + $0x200] sm:$0xff]
      %v3533 = vld [vmem:[%s259 + $0x208] sm:$0xff]
      %v3534 = vld [vmem:[%s259 + $0x210] sm:$0xff]
      %v3535 = vld [vmem:[%s259 + $0x218] sm:$0xff]
      %v3536 = vld [vmem:[%s259 + $0x220] sm:$0xff]
      %v3537 = vld [vmem:[%s259 + $0x228] sm:$0xff]
      %v3538 = vld [vmem:[%s259 + $0x230] sm:$0xff]
      %v3539 = vld [vmem:[%s259 + $0x238] sm:$0xff]
      %v3540 = vld [vmem:[%s259 + $0x240] sm:$0xff]
      %v3541 = vld [vmem:[%s259 + $0x248] sm:$0xff]
      %v3542 = vld [vmem:[%s259 + $0x250] sm:$0xff]
      %v3543 = vld [vmem:[%s259 + $0x258] sm:$0xff]
      %v3544 = vld [vmem:[%s259 + $0x260] sm:$0xff]
      %v3545 = vld [vmem:[%s259 + $0x268] sm:$0xff]
      %v3546 = vld [vmem:[%s259 + $0x270] sm:$0xff]
      %v3547 = vld [vmem:[%s259 + $0x278] sm:$0xff]
      %v3548 = vld [vmem:[%s259 + $0x280] sm:$0xff]
      %v3549 = vld [vmem:[%s259 + $0x288] sm:$0xff]
      %v3550 = vld [vmem:[%s259 + $0x290] sm:$0xff]
      %v3551 = vld [vmem:[%s259 + $0x298] sm:$0xff]
      %v3552 = vld [vmem:[%s259 + $0x2a0] sm:$0xff]
      %v3553 = vld [vmem:[%s259 + $0x2a8] sm:$0xff]
      %v3554 = vld [vmem:[%s259 + $0x2b0] sm:$0xff]
      %v3555 = vld [vmem:[%s259 + $0x2b8] sm:$0xff]
      %v3556 = vld [vmem:[%s259 + $0x2c0] sm:$0xff]
      %v3557 = vld [vmem:[%s259 + $0x2c8] sm:$0xff]
      %v3558 = vld [vmem:[%s259 + $0x2d0] sm:$0xff]
      %v3559 = vld [vmem:[%s259 + $0x2d8] sm:$0xff]
      %v3560 = vld [vmem:[%s259 + $0x2e0] sm:$0xff]
      %v3561 = vld [vmem:[%s259 + $0x2e8] sm:$0xff]
      %v3562 = vld [vmem:[%s259 + $0x2f0] sm:$0xff]
      %v3563 = vld [vmem:[%s259 + $0x2f8] sm:$0xff]
      %v3564 = vld [vmem:[%s259 + $0x300] sm:$0xff]
      %v3565 = vld [vmem:[%s259 + $0x308] sm:$0xff]
      %v3566 = vld [vmem:[%s259 + $0x310] sm:$0xff]
      %v3567 = vld [vmem:[%s259 + $0x318] sm:$0xff]
      %v3568 = vld [vmem:[%s259 + $0x320] sm:$0xff]
      %v3569 = vld [vmem:[%s259 + $0x328] sm:$0xff]
      %v3570 = vld [vmem:[%s259 + $0x330] sm:$0xff]
      %v3571 = vld [vmem:[%s259 + $0x338] sm:$0xff]
      %v3572 = vld [vmem:[%s259 + $0x340] sm:$0xff]
      %v3573 = vld [vmem:[%s259 + $0x348] sm:$0xff]
      %v3574 = vld [vmem:[%s259 + $0x350] sm:$0xff]
      %v3575 = vld [vmem:[%s259 + $0x358] sm:$0xff]
      %v3576 = vld [vmem:[%s259 + $0x360] sm:$0xff]
      %v3577 = vld [vmem:[%s259 + $0x368] sm:$0xff]
      %v3578 = vld [vmem:[%s259 + $0x370] sm:$0xff]
      %v3579 = vld [vmem:[%s259 + $0x378] sm:$0xff]
      %v3580 = vld [vmem:[%s259 + $0x380] sm:$0xff]
      %v3581 = vld [vmem:[%s259 + $0x388] sm:$0xff]
      %v3582 = vld [vmem:[%s259 + $0x390] sm:$0xff]
      %v3583 = vld [vmem:[%s259 + $0x398] sm:$0xff]
      %v3584 = vld [vmem:[%s259 + $0x3a0] sm:$0xff]
      %v3585 = vld [vmem:[%s259 + $0x3a8] sm:$0xff]
      %v3586 = vld [vmem:[%s259 + $0x3b0] sm:$0xff]
      %v3587 = vld [vmem:[%s259 + $0x3b8] sm:$0xff]
      %v3588 = vld [vmem:[%s259 + $0x3c0] sm:$0xff]
      %v3589 = vld [vmem:[%s259 + $0x3c8] sm:$0xff]
      %v3590 = vld [vmem:[%s259 + $0x3d0] sm:$0xff]
      %v3591 = vld [vmem:[%s259 + $0x3d8] sm:$0xff]
      %v3592 = vld [vmem:[%s259 + $0x3e0] sm:$0xff]
      %v3593 = vld [vmem:[%s259 + $0x3e8] sm:$0xff]
      %v3594 = vld [vmem:[%s259 + $0x3f0] sm:$0xff]
      %v3595 = vld [vmem:[%s259 + $0x3f8] sm:$0xff]
      %v3596 = vmul.f32 %v1292, %v3340
      %v3597 = vmul.f32 %v1293, %v3341
      %v3598 = vmul.f32 %v1294, %v3342
      %v3599 = vmul.f32 %v1295, %v3343
      %v3600 = vmul.f32 %v1296, %v3344
      %v3601 = vmul.f32 %v1297, %v3345
      %v3602 = vmul.f32 %v1298, %v3346
      %v3603 = vmul.f32 %v1299, %v3347
      %v3604 = vmul.f32 %v1300, %v3348
      %v3605 = vmul.f32 %v1301, %v3349
      %v3606 = vmul.f32 %v1302, %v3350
      %v3607 = vmul.f32 %v1303, %v3351
      %v3608 = vmul.f32 %v1304, %v3352
      %v3609 = vmul.f32 %v1305, %v3353
      %v3610 = vmul.f32 %v1306, %v3354
      %v3611 = vmul.f32 %v1307, %v3355
      %v3612 = vmul.f32 %v1308, %v3356
      %v3613 = vmul.f32 %v1309, %v3357
      %v3614 = vmul.f32 %v1310, %v3358
      %v3615 = vmul.f32 %v1311, %v3359
      %v3616 = vmul.f32 %v1312, %v3360
      %v3617 = vmul.f32 %v1313, %v3361
      %v3618 = vmul.f32 %v1314, %v3362
      %v3619 = vmul.f32 %v1315, %v3363
      %v3620 = vmul.f32 %v1316, %v3364
      %v3621 = vmul.f32 %v1317, %v3365
      %v3622 = vmul.f32 %v1318, %v3366
      %v3623 = vmul.f32 %v1319, %v3367
      %v3624 = vmul.f32 %v1320, %v3368
      %v3625 = vmul.f32 %v1321, %v3369
      %v3626 = vmul.f32 %v1322, %v3370
      %v3627 = vmul.f32 %v1323, %v3371
      %v3628 = vmul.f32 %v1324, %v3372
      %v3629 = vmul.f32 %v1325, %v3373
      %v3630 = vmul.f32 %v1326, %v3374
      %v3631 = vmul.f32 %v1327, %v3375
      %v3632 = vmul.f32 %v1328, %v3376
      %v3633 = vmul.f32 %v1329, %v3377
      %v3634 = vmul.f32 %v1330, %v3378
      %v3635 = vmul.f32 %v1331, %v3379
      %v3636 = vmul.f32 %v1332, %v3380
      %v3637 = vmul.f32 %v1333, %v3381
      %v3638 = vmul.f32 %v1334, %v3382
      %v3639 = vmul.f32 %v1335, %v3383
      %v3640 = vmul.f32 %v1336, %v3384
      %v3641 = vmul.f32 %v1337, %v3385
      %v3642 = vmul.f32 %v1338, %v3386
      %v3643 = vmul.f32 %v1339, %v3387
      %v3644 = vmul.f32 %v1340, %v3388
      %v3645 = vmul.f32 %v1341, %v3389
      %v3646 = vmul.f32 %v1342, %v3390
      %v3647 = vmul.f32 %v1343, %v3391
      %v3648 = vmul.f32 %v1344, %v3392
      %v3649 = vmul.f32 %v1345, %v3393
      %v3650 = vmul.f32 %v1346, %v3394
      %v3651 = vmul.f32 %v1347, %v3395
      %v3652 = vmul.f32 %v1348, %v3396
      %v3653 = vmul.f32 %v1349, %v3397
      %v3654 = vmul.f32 %v1350, %v3398
      %v3655 = vmul.f32 %v1351, %v3399
      %v3656 = vmul.f32 %v1352, %v3400
      %v3657 = vmul.f32 %v1353, %v3401
      %v3658 = vmul.f32 %v1354, %v3402
      %v3659 = vmul.f32 %v1355, %v3403
      %v3660 = vmul.f32 %v1356, %v3404
      %v3661 = vmul.f32 %v1357, %v3405
      %v3662 = vmul.f32 %v1358, %v3406
      %v3663 = vmul.f32 %v1359, %v3407
      %v3664 = vmul.f32 %v1360, %v3408
      %v3665 = vmul.f32 %v1361, %v3409
      %v3666 = vmul.f32 %v1362, %v3410
      %v3667 = vmul.f32 %v1363, %v3411
      %v3668 = vmul.f32 %v1364, %v3412
      %v3669 = vmul.f32 %v1365, %v3413
      %v3670 = vmul.f32 %v1366, %v3414
      %v3671 = vmul.f32 %v1367, %v3415
      %v3672 = vmul.f32 %v1368, %v3416
      %v3673 = vmul.f32 %v1369, %v3417
      %v3674 = vmul.f32 %v1370, %v3418
      %v3675 = vmul.f32 %v1371, %v3419
      %v3676 = vmul.f32 %v1372, %v3420
      %v3677 = vmul.f32 %v1373, %v3421
      %v3678 = vmul.f32 %v1374, %v3422
      %v3679 = vmul.f32 %v1375, %v3423
      %v3680 = vmul.f32 %v1376, %v3424
      %v3681 = vmul.f32 %v1377, %v3425
      %v3682 = vmul.f32 %v1378, %v3426
      %v3683 = vmul.f32 %v1379, %v3427
      %v3684 = vmul.f32 %v1380, %v3428
      %v3685 = vmul.f32 %v1381, %v3429
      %v3686 = vmul.f32 %v1382, %v3430
      %v3687 = vmul.f32 %v1383, %v3431
      %v3688 = vmul.f32 %v1384, %v3432
      %v3689 = vmul.f32 %v1385, %v3433
      %v3690 = vmul.f32 %v1386, %v3434
      %v3691 = vmul.f32 %v1387, %v3435
      %v3692 = vmul.f32 %v1388, %v3436
      %v3693 = vmul.f32 %v1389, %v3437
      %v3694 = vmul.f32 %v1390, %v3438
      %v3695 = vmul.f32 %v1391, %v3439
      %v3696 = vmul.f32 %v1392, %v3440
      %v3697 = vmul.f32 %v1393, %v3441
      %v3698 = vmul.f32 %v1394, %v3442
      %v3699 = vmul.f32 %v1395, %v3443
      %v3700 = vmul.f32 %v1396, %v3444
      %v3701 = vmul.f32 %v1397, %v3445
      %v3702 = vmul.f32 %v1398, %v3446
      %v3703 = vmul.f32 %v1399, %v3447
      %v3704 = vmul.f32 %v1400, %v3448
      %v3705 = vmul.f32 %v1401, %v3449
      %v3706 = vmul.f32 %v1402, %v3450
      %v3707 = vmul.f32 %v1403, %v3451
      %v3708 = vmul.f32 %v1404, %v3452
      %v3709 = vmul.f32 %v1405, %v3453
      %v3710 = vmul.f32 %v1406, %v3454
      %v3711 = vmul.f32 %v1407, %v3455
      %v3712 = vmul.f32 %v1408, %v3456
      %v3713 = vmul.f32 %v1409, %v3457
      %v3714 = vmul.f32 %v1410, %v3458
      %v3715 = vmul.f32 %v1411, %v3459
      %v3716 = vmul.f32 %v1412, %v3460
      %v3717 = vmul.f32 %v1413, %v3461
      %v3718 = vmul.f32 %v1414, %v3462
      %v3719 = vmul.f32 %v1415, %v3463
      %v3720 = vmul.f32 %v1416, %v3464
      %v3721 = vmul.f32 %v1417, %v3465
      %v3722 = vmul.f32 %v1418, %v3466
      %v3723 = vmul.f32 %v1419, %v3467
      %v3724 = vsub.f32 %v3468, %v3596
      %v3725 = vsub.f32 %v3469, %v3597
      %v3726 = vsub.f32 %v3470, %v3598
      %v3727 = vsub.f32 %v3471, %v3599
      %v3728 = vsub.f32 %v3472, %v3600
      %v3729 = vsub.f32 %v3473, %v3601
      %v3730 = vsub.f32 %v3474, %v3602
      %v3731 = vsub.f32 %v3475, %v3603
      %v3732 = vsub.f32 %v3476, %v3604
      %v3733 = vsub.f32 %v3477, %v3605
      %v3734 = vsub.f32 %v3478, %v3606
      %v3735 = vsub.f32 %v3479, %v3607
      %v3736 = vsub.f32 %v3480, %v3608
      %v3737 = vsub.f32 %v3481, %v3609
      %v3738 = vsub.f32 %v3482, %v3610
      %v3739 = vsub.f32 %v3483, %v3611
      %v3740 = vsub.f32 %v3484, %v3612
      %v3741 = vsub.f32 %v3485, %v3613
      %v3742 = vsub.f32 %v3486, %v3614
      %v3743 = vsub.f32 %v3487, %v3615
      %v3744 = vsub.f32 %v3488, %v3616
      %v3745 = vsub.f32 %v3489, %v3617
      %v3746 = vsub.f32 %v3490, %v3618
      %v3747 = vsub.f32 %v3491, %v3619
      %v3748 = vsub.f32 %v3492, %v3620
      %v3749 = vsub.f32 %v3493, %v3621
      %v3750 = vsub.f32 %v3494, %v3622
      %v3751 = vsub.f32 %v3495, %v3623
      %v3752 = vsub.f32 %v3496, %v3624
      %v3753 = vsub.f32 %v3497, %v3625
      %v3754 = vsub.f32 %v3498, %v3626
      %v3755 = vsub.f32 %v3499, %v3627
      %v3756 = vsub.f32 %v3500, %v3628
      %v3757 = vsub.f32 %v3501, %v3629
      %v3758 = vsub.f32 %v3502, %v3630
      %v3759 = vsub.f32 %v3503, %v3631
      %v3760 = vsub.f32 %v3504, %v3632
      %v3761 = vsub.f32 %v3505, %v3633
      %v3762 = vsub.f32 %v3506, %v3634
      %v3763 = vsub.f32 %v3507, %v3635
      %v3764 = vsub.f32 %v3508, %v3636
      %v3765 = vsub.f32 %v3509, %v3637
      %v3766 = vsub.f32 %v3510, %v3638
      %v3767 = vsub.f32 %v3511, %v3639
      %v3768 = vsub.f32 %v3512, %v3640
      %v3769 = vsub.f32 %v3513, %v3641
      %v3770 = vsub.f32 %v3514, %v3642
      %v3771 = vsub.f32 %v3515, %v3643
      %v3772 = vsub.f32 %v3516, %v3644
      %v3773 = vsub.f32 %v3517, %v3645
      %v3774 = vsub.f32 %v3518, %v3646
      %v3775 = vsub.f32 %v3519, %v3647
      %v3776 = vsub.f32 %v3520, %v3648
      %v3777 = vsub.f32 %v3521, %v3649
      %v3778 = vsub.f32 %v3522, %v3650
      %v3779 = vsub.f32 %v3523, %v3651
      %v3780 = vsub.f32 %v3524, %v3652
      %v3781 = vsub.f32 %v3525, %v3653
      %v3782 = vsub.f32 %v3526, %v3654
      %v3783 = vsub.f32 %v3527, %v3655
      %v3784 = vsub.f32 %v3528, %v3656
      %v3785 = vsub.f32 %v3529, %v3657
      %v3786 = vsub.f32 %v3530, %v3658
      %v3787 = vsub.f32 %v3531, %v3659
      %v3788 = vsub.f32 %v3532, %v3660
      %v3789 = vsub.f32 %v3533, %v3661
      %v3790 = vsub.f32 %v3534, %v3662
      %v3791 = vsub.f32 %v3535, %v3663
      %v3792 = vsub.f32 %v3536, %v3664
      %v3793 = vsub.f32 %v3537, %v3665
      %v3794 = vsub.f32 %v3538, %v3666
      %v3795 = vsub.f32 %v3539, %v3667
      %v3796 = vsub.f32 %v3540, %v3668
      %v3797 = vsub.f32 %v3541, %v3669
      %v3798 = vsub.f32 %v3542, %v3670
      %v3799 = vsub.f32 %v3543, %v3671
      %v3800 = vsub.f32 %v3544, %v3672
      %v3801 = vsub.f32 %v3545, %v3673
      %v3802 = vsub.f32 %v3546, %v3674
      %v3803 = vsub.f32 %v3547, %v3675
      %v3804 = vsub.f32 %v3548, %v3676
      %v3805 = vsub.f32 %v3549, %v3677
      %v3806 = vsub.f32 %v3550, %v3678
      %v3807 = vsub.f32 %v3551, %v3679
      %v3808 = vsub.f32 %v3552, %v3680
      %v3809 = vsub.f32 %v3553, %v3681
      %v3810 = vsub.f32 %v3554, %v3682
      %v3811 = vsub.f32 %v3555, %v3683
      %v3812 = vsub.f32 %v3556, %v3684
      %v3813 = vsub.f32 %v3557, %v3685
      %v3814 = vsub.f32 %v3558, %v3686
      %v3815 = vsub.f32 %v3559, %v3687
      %v3816 = vsub.f32 %v3560, %v3688
      %v3817 = vsub.f32 %v3561, %v3689
      %v3818 = vsub.f32 %v3562, %v3690
      %v3819 = vsub.f32 %v3563, %v3691
      %v3820 = vsub.f32 %v3564, %v3692
      %v3821 = vsub.f32 %v3565, %v3693
      %v3822 = vsub.f32 %v3566, %v3694
      %v3823 = vsub.f32 %v3567, %v3695
      %v3824 = vsub.f32 %v3568, %v3696
      %v3825 = vsub.f32 %v3569, %v3697
      %v3826 = vsub.f32 %v3570, %v3698
      %v3827 = vsub.f32 %v3571, %v3699
      %v3828 = vsub.f32 %v3572, %v3700
      %v3829 = vsub.f32 %v3573, %v3701
      %v3830 = vsub.f32 %v3574, %v3702
      %v3831 = vsub.f32 %v3575, %v3703
      %v3832 = vsub.f32 %v3576, %v3704
      %v3833 = vsub.f32 %v3577, %v3705
      %v3834 = vsub.f32 %v3578, %v3706
      %v3835 = vsub.f32 %v3579, %v3707
      %v3836 = vsub.f32 %v3580, %v3708
      %v3837 = vsub.f32 %v3581, %v3709
      %v3838 = vsub.f32 %v3582, %v3710
      %v3839 = vsub.f32 %v3583, %v3711
      %v3840 = vsub.f32 %v3584, %v3712
      %v3841 = vsub.f32 %v3585, %v3713
      %v3842 = vsub.f32 %v3586, %v3714
      %v3843 = vsub.f32 %v3587, %v3715
      %v3844 = vsub.f32 %v3588, %v3716
      %v3845 = vsub.f32 %v3589, %v3717
      %v3846 = vsub.f32 %v3590, %v3718
      %v3847 = vsub.f32 %v3591, %v3719
      %v3848 = vsub.f32 %v3592, %v3720
      %v3849 = vsub.f32 %v3593, %v3721
      %v3850 = vsub.f32 %v3594, %v3722
      %v3851 = vsub.f32 %v3595, %v3723
      %v3852 = vld [vmem:[%s247] sm:$0xff]
      %v3853 = vld [vmem:[%s247 + $0x8] sm:$0xff]
      %v3854 = vld [vmem:[%s247 + $0x10] sm:$0xff]
      %v3855 = vld [vmem:[%s247 + $0x18] sm:$0xff]
      %v3856 = vld [vmem:[%s247 + $0x20] sm:$0xff]
      %v3857 = vld [vmem:[%s247 + $0x28] sm:$0xff]
      %v3858 = vld [vmem:[%s247 + $0x30] sm:$0xff]
      %v3859 = vld [vmem:[%s247 + $0x38] sm:$0xff]
      %v3860 = vld [vmem:[%s247 + $0x40] sm:$0xff]
      %v3861 = vld [vmem:[%s247 + $0x48] sm:$0xff]
      %v3862 = vld [vmem:[%s247 + $0x50] sm:$0xff]
      %v3863 = vld [vmem:[%s247 + $0x58] sm:$0xff]
      %v3864 = vld [vmem:[%s247 + $0x60] sm:$0xff]
      %v3865 = vld [vmem:[%s247 + $0x68] sm:$0xff]
      %v3866 = vld [vmem:[%s247 + $0x70] sm:$0xff]
      %v3867 = vld [vmem:[%s247 + $0x78] sm:$0xff]
      %v3868 = vld [vmem:[%s247 + $0x80] sm:$0xff]
      %v3869 = vld [vmem:[%s247 + $0x88] sm:$0xff]
      %v3870 = vld [vmem:[%s247 + $0x90] sm:$0xff]
      %v3871 = vld [vmem:[%s247 + $0x98] sm:$0xff]
      %v3872 = vld [vmem:[%s247 + $0xa0] sm:$0xff]
      %v3873 = vld [vmem:[%s247 + $0xa8] sm:$0xff]
      %v3874 = vld [vmem:[%s247 + $0xb0] sm:$0xff]
      %v3875 = vld [vmem:[%s247 + $0xb8] sm:$0xff]
      %v3876 = vld [vmem:[%s247 + $0xc0] sm:$0xff]
      %v3877 = vld [vmem:[%s247 + $0xc8] sm:$0xff]
      %v3878 = vld [vmem:[%s247 + $0xd0] sm:$0xff]
      %v3879 = vld [vmem:[%s247 + $0xd8] sm:$0xff]
      %v3880 = vld [vmem:[%s247 + $0xe0] sm:$0xff]
      %v3881 = vld [vmem:[%s247 + $0xe8] sm:$0xff]
      %v3882 = vld [vmem:[%s247 + $0xf0] sm:$0xff]
      %v3883 = vld [vmem:[%s247 + $0xf8] sm:$0xff]
      %v3884 = vld [vmem:[%s247 + $0x100] sm:$0xff]
      %v3885 = vld [vmem:[%s247 + $0x108] sm:$0xff]
      %v3886 = vld [vmem:[%s247 + $0x110] sm:$0xff]
      %v3887 = vld [vmem:[%s247 + $0x118] sm:$0xff]
      %v3888 = vld [vmem:[%s247 + $0x120] sm:$0xff]
      %v3889 = vld [vmem:[%s247 + $0x128] sm:$0xff]
      %v3890 = vld [vmem:[%s247 + $0x130] sm:$0xff]
      %v3891 = vld [vmem:[%s247 + $0x138] sm:$0xff]
      %v3892 = vld [vmem:[%s247 + $0x140] sm:$0xff]
      %v3893 = vld [vmem:[%s247 + $0x148] sm:$0xff]
      %v3894 = vld [vmem:[%s247 + $0x150] sm:$0xff]
      %v3895 = vld [vmem:[%s247 + $0x158] sm:$0xff]
      %v3896 = vld [vmem:[%s247 + $0x160] sm:$0xff]
      %v3897 = vld [vmem:[%s247 + $0x168] sm:$0xff]
      %v3898 = vld [vmem:[%s247 + $0x170] sm:$0xff]
      %v3899 = vld [vmem:[%s247 + $0x178] sm:$0xff]
      %v3900 = vld [vmem:[%s247 + $0x180] sm:$0xff]
      %v3901 = vld [vmem:[%s247 + $0x188] sm:$0xff]
      %v3902 = vld [vmem:[%s247 + $0x190] sm:$0xff]
      %v3903 = vld [vmem:[%s247 + $0x198] sm:$0xff]
      %v3904 = vld [vmem:[%s247 + $0x1a0] sm:$0xff]
      %v3905 = vld [vmem:[%s247 + $0x1a8] sm:$0xff]
      %v3906 = vld [vmem:[%s247 + $0x1b0] sm:$0xff]
      %v3907 = vld [vmem:[%s247 + $0x1b8] sm:$0xff]
      %v3908 = vld [vmem:[%s247 + $0x1c0] sm:$0xff]
      %v3909 = vld [vmem:[%s247 + $0x1c8] sm:$0xff]
      %v3910 = vld [vmem:[%s247 + $0x1d0] sm:$0xff]
      %v3911 = vld [vmem:[%s247 + $0x1d8] sm:$0xff]
      %v3912 = vld [vmem:[%s247 + $0x1e0] sm:$0xff]
      %v3913 = vld [vmem:[%s247 + $0x1e8] sm:$0xff]
      %v3914 = vld [vmem:[%s247 + $0x1f0] sm:$0xff]
      %v3915 = vld [vmem:[%s247 + $0x1f8] sm:$0xff]
      %v3916 = vld [vmem:[%s247 + $0x200] sm:$0xff]
      %v3917 = vld [vmem:[%s247 + $0x208] sm:$0xff]
      %v3918 = vld [vmem:[%s247 + $0x210] sm:$0xff]
      %v3919 = vld [vmem:[%s247 + $0x218] sm:$0xff]
      %v3920 = vld [vmem:[%s247 + $0x220] sm:$0xff]
      %v3921 = vld [vmem:[%s247 + $0x228] sm:$0xff]
      %v3922 = vld [vmem:[%s247 + $0x230] sm:$0xff]
      %v3923 = vld [vmem:[%s247 + $0x238] sm:$0xff]
      %v3924 = vld [vmem:[%s247 + $0x240] sm:$0xff]
      %v3925 = vld [vmem:[%s247 + $0x248] sm:$0xff]
      %v3926 = vld [vmem:[%s247 + $0x250] sm:$0xff]
      %v3927 = vld [vmem:[%s247 + $0x258] sm:$0xff]
      %v3928 = vld [vmem:[%s247 + $0x260] sm:$0xff]
      %v3929 = vld [vmem:[%s247 + $0x268] sm:$0xff]
      %v3930 = vld [vmem:[%s247 + $0x270] sm:$0xff]
      %v3931 = vld [vmem:[%s247 + $0x278] sm:$0xff]
      %v3932 = vld [vmem:[%s247 + $0x280] sm:$0xff]
      %v3933 = vld [vmem:[%s247 + $0x288] sm:$0xff]
      %v3934 = vld [vmem:[%s247 + $0x290] sm:$0xff]
      %v3935 = vld [vmem:[%s247 + $0x298] sm:$0xff]
      %v3936 = vld [vmem:[%s247 + $0x2a0] sm:$0xff]
      %v3937 = vld [vmem:[%s247 + $0x2a8] sm:$0xff]
      %v3938 = vld [vmem:[%s247 + $0x2b0] sm:$0xff]
      %v3939 = vld [vmem:[%s247 + $0x2b8] sm:$0xff]
      %v3940 = vld [vmem:[%s247 + $0x2c0] sm:$0xff]
      %v3941 = vld [vmem:[%s247 + $0x2c8] sm:$0xff]
      %v3942 = vld [vmem:[%s247 + $0x2d0] sm:$0xff]
      %v3943 = vld [vmem:[%s247 + $0x2d8] sm:$0xff]
      %v3944 = vld [vmem:[%s247 + $0x2e0] sm:$0xff]
      %v3945 = vld [vmem:[%s247 + $0x2e8] sm:$0xff]
      %v3946 = vld [vmem:[%s247 + $0x2f0] sm:$0xff]
      %v3947 = vld [vmem:[%s247 + $0x2f8] sm:$0xff]
      %v3948 = vld [vmem:[%s247 + $0x300] sm:$0xff]
      %v3949 = vld [vmem:[%s247 + $0x308] sm:$0xff]
      %v3950 = vld [vmem:[%s247 + $0x310] sm:$0xff]
      %v3951 = vld [vmem:[%s247 + $0x318] sm:$0xff]
      %v3952 = vld [vmem:[%s247 + $0x320] sm:$0xff]
      %v3953 = vld [vmem:[%s247 + $0x328] sm:$0xff]
      %v3954 = vld [vmem:[%s247 + $0x330] sm:$0xff]
      %v3955 = vld [vmem:[%s247 + $0x338] sm:$0xff]
      %v3956 = vld [vmem:[%s247 + $0x340] sm:$0xff]
      %v3957 = vld [vmem:[%s247 + $0x348] sm:$0xff]
      %v3958 = vld [vmem:[%s247 + $0x350] sm:$0xff]
      %v3959 = vld [vmem:[%s247 + $0x358] sm:$0xff]
      %v3960 = vld [vmem:[%s247 + $0x360] sm:$0xff]
      %v3961 = vld [vmem:[%s247 + $0x368] sm:$0xff]
      %v3962 = vld [vmem:[%s247 + $0x370] sm:$0xff]
      %v3963 = vld [vmem:[%s247 + $0x378] sm:$0xff]
      %v3964 = vld [vmem:[%s247 + $0x380] sm:$0xff]
      %v3965 = vld [vmem:[%s247 + $0x388] sm:$0xff]
      %v3966 = vld [vmem:[%s247 + $0x390] sm:$0xff]
      %v3967 = vld [vmem:[%s247 + $0x398] sm:$0xff]
      %v3968 = vld [vmem:[%s247 + $0x3a0] sm:$0xff]
      %v3969 = vld [vmem:[%s247 + $0x3a8] sm:$0xff]
      %v3970 = vld [vmem:[%s247 + $0x3b0] sm:$0xff]
      %v3971 = vld [vmem:[%s247 + $0x3b8] sm:$0xff]
      %v3972 = vld [vmem:[%s247 + $0x3c0] sm:$0xff]
      %v3973 = vld [vmem:[%s247 + $0x3c8] sm:$0xff]
      %v3974 = vld [vmem:[%s247 + $0x3d0] sm:$0xff]
      %v3975 = vld [vmem:[%s247 + $0x3d8] sm:$0xff]
      %v3976 = vld [vmem:[%s247 + $0x3e0] sm:$0xff]
      %v3977 = vld [vmem:[%s247 + $0x3e8] sm:$0xff]
      %v3978 = vld [vmem:[%s247 + $0x3f0] sm:$0xff]
      %v3979 = vld [vmem:[%s247 + $0x3f8] sm:$0xff]
      %3981 = vset.pattern.permute.xlu0 0
      %3982 = vperm.xlu0 %3981, %v3340
      %v3983 = vpop.permute.xlu0 %3982
      %3986 = vset.pattern.permute.xlu0 0
      %3987 = vperm.xlu0 %3986, %v3341
      %v3988 = vpop.permute.xlu0 %3987
      %3991 = vset.pattern.permute.xlu0 0
      %3992 = vperm.xlu0 %3991, %v3342
      %v3993 = vpop.permute.xlu0 %3992
      %3996 = vset.pattern.permute.xlu0 0
      %3997 = vperm.xlu0 %3996, %v3343
      %v3998 = vpop.permute.xlu0 %3997
      %4001 = vset.pattern.permute.xlu0 0
      %4002 = vperm.xlu0 %4001, %v3344
      %v4003 = vpop.permute.xlu0 %4002
      %4006 = vset.pattern.permute.xlu0 0
      %4007 = vperm.xlu0 %4006, %v3345
      %v4008 = vpop.permute.xlu0 %4007
      %4011 = vset.pattern.permute.xlu0 0
      %4012 = vperm.xlu0 %4011, %v3346
      %v4013 = vpop.permute.xlu0 %4012
      %4016 = vset.pattern.permute.xlu0 0
      %4017 = vperm.xlu0 %4016, %v3347
      %v4018 = vpop.permute.xlu0 %4017
      %4021 = vset.pattern.permute.xlu0 0
      %4022 = vperm.xlu0 %4021, %v3348
      %v4023 = vpop.permute.xlu0 %4022
      %4026 = vset.pattern.permute.xlu0 0
      %4027 = vperm.xlu0 %4026, %v3349
      %v4028 = vpop.permute.xlu0 %4027
      %4031 = vset.pattern.permute.xlu0 0
      %4032 = vperm.xlu0 %4031, %v3350
      %v4033 = vpop.permute.xlu0 %4032
      %4036 = vset.pattern.permute.xlu0 0
      %4037 = vperm.xlu0 %4036, %v3351
      %v4038 = vpop.permute.xlu0 %4037
      %4041 = vset.pattern.permute.xlu0 0
      %4042 = vperm.xlu0 %4041, %v3352
      %v4043 = vpop.permute.xlu0 %4042
      %4046 = vset.pattern.permute.xlu0 0
      %4047 = vperm.xlu0 %4046, %v3353
      %v4048 = vpop.permute.xlu0 %4047
      %4051 = vset.pattern.permute.xlu0 0
      %4052 = vperm.xlu0 %4051, %v3354
      %v4053 = vpop.permute.xlu0 %4052
      %4056 = vset.pattern.permute.xlu0 0
      %4057 = vperm.xlu0 %4056, %v3355
      %v4058 = vpop.permute.xlu0 %4057
      %4061 = vset.pattern.permute.xlu0 0
      %4062 = vperm.xlu0 %4061, %v3356
      %v4063 = vpop.permute.xlu0 %4062
      %4066 = vset.pattern.permute.xlu0 0
      %4067 = vperm.xlu0 %4066, %v3357
      %v4068 = vpop.permute.xlu0 %4067
      %4071 = vset.pattern.permute.xlu0 0
      %4072 = vperm.xlu0 %4071, %v3358
      %v4073 = vpop.permute.xlu0 %4072
      %4076 = vset.pattern.permute.xlu0 0
      %4077 = vperm.xlu0 %4076, %v3359
      %v4078 = vpop.permute.xlu0 %4077
      %4081 = vset.pattern.permute.xlu0 0
      %4082 = vperm.xlu0 %4081, %v3360
      %v4083 = vpop.permute.xlu0 %4082
      %4086 = vset.pattern.permute.xlu0 0
      %4087 = vperm.xlu0 %4086, %v3361
      %v4088 = vpop.permute.xlu0 %4087
      %4091 = vset.pattern.permute.xlu0 0
      %4092 = vperm.xlu0 %4091, %v3362
      %v4093 = vpop.permute.xlu0 %4092
      %4096 = vset.pattern.permute.xlu0 0
      %4097 = vperm.xlu0 %4096, %v3363
      %v4098 = vpop.permute.xlu0 %4097
      %4101 = vset.pattern.permute.xlu0 0
      %4102 = vperm.xlu0 %4101, %v3364
      %v4103 = vpop.permute.xlu0 %4102
      %4106 = vset.pattern.permute.xlu0 0
      %4107 = vperm.xlu0 %4106, %v3365
      %v4108 = vpop.permute.xlu0 %4107
      %4111 = vset.pattern.permute.xlu0 0
      %4112 = vperm.xlu0 %4111, %v3366
      %v4113 = vpop.permute.xlu0 %4112
      %4116 = vset.pattern.permute.xlu0 0
      %4117 = vperm.xlu0 %4116, %v3367
      %v4118 = vpop.permute.xlu0 %4117
      %4121 = vset.pattern.permute.xlu0 0
      %4122 = vperm.xlu0 %4121, %v3368
      %v4123 = vpop.permute.xlu0 %4122
      %4126 = vset.pattern.permute.xlu0 0
      %4127 = vperm.xlu0 %4126, %v3369
      %v4128 = vpop.permute.xlu0 %4127
      %4131 = vset.pattern.permute.xlu0 0
      %4132 = vperm.xlu0 %4131, %v3370
      %v4133 = vpop.permute.xlu0 %4132
      %4136 = vset.pattern.permute.xlu0 0
      %4137 = vperm.xlu0 %4136, %v3371
      %v4138 = vpop.permute.xlu0 %4137
      %4141 = vset.pattern.permute.xlu0 0
      %4142 = vperm.xlu0 %4141, %v3372
      %v4143 = vpop.permute.xlu0 %4142
      %4146 = vset.pattern.permute.xlu0 0
      %4147 = vperm.xlu0 %4146, %v3373
      %v4148 = vpop.permute.xlu0 %4147
      %4151 = vset.pattern.permute.xlu0 0
      %4152 = vperm.xlu0 %4151, %v3374
      %v4153 = vpop.permute.xlu0 %4152
      %4156 = vset.pattern.permute.xlu0 0
      %4157 = vperm.xlu0 %4156, %v3375
      %v4158 = vpop.permute.xlu0 %4157
      %4161 = vset.pattern.permute.xlu0 0
      %4162 = vperm.xlu0 %4161, %v3376
      %v4163 = vpop.permute.xlu0 %4162
      %4166 = vset.pattern.permute.xlu0 0
      %4167 = vperm.xlu0 %4166, %v3377
      %v4168 = vpop.permute.xlu0 %4167
      %4171 = vset.pattern.permute.xlu0 0
      %4172 = vperm.xlu0 %4171, %v3378
      %v4173 = vpop.permute.xlu0 %4172
      %4176 = vset.pattern.permute.xlu0 0
      %4177 = vperm.xlu0 %4176, %v3379
      %v4178 = vpop.permute.xlu0 %4177
      %4181 = vset.pattern.permute.xlu0 0
      %4182 = vperm.xlu0 %4181, %v3380
      %v4183 = vpop.permute.xlu0 %4182
      %4186 = vset.pattern.permute.xlu0 0
      %4187 = vperm.xlu0 %4186, %v3381
      %v4188 = vpop.permute.xlu0 %4187
      %4191 = vset.pattern.permute.xlu0 0
      %4192 = vperm.xlu0 %4191, %v3382
      %v4193 = vpop.permute.xlu0 %4192
      %4196 = vset.pattern.permute.xlu0 0
      %4197 = vperm.xlu0 %4196, %v3383
      %v4198 = vpop.permute.xlu0 %4197
      %4201 = vset.pattern.permute.xlu0 0
      %4202 = vperm.xlu0 %4201, %v3384
      %v4203 = vpop.permute.xlu0 %4202
      %4206 = vset.pattern.permute.xlu0 0
      %4207 = vperm.xlu0 %4206, %v3385
      %v4208 = vpop.permute.xlu0 %4207
      %4211 = vset.pattern.permute.xlu0 0
      %4212 = vperm.xlu0 %4211, %v3386
      %v4213 = vpop.permute.xlu0 %4212
      %4216 = vset.pattern.permute.xlu0 0
      %4217 = vperm.xlu0 %4216, %v3387
      %v4218 = vpop.permute.xlu0 %4217
      %4221 = vset.pattern.permute.xlu0 0
      %4222 = vperm.xlu0 %4221, %v3388
      %v4223 = vpop.permute.xlu0 %4222
      %4226 = vset.pattern.permute.xlu0 0
      %4227 = vperm.xlu0 %4226, %v3389
      %v4228 = vpop.permute.xlu0 %4227
      %4231 = vset.pattern.permute.xlu0 0
      %4232 = vperm.xlu0 %4231, %v3390
      %v4233 = vpop.permute.xlu0 %4232
      %4236 = vset.pattern.permute.xlu0 0
      %4237 = vperm.xlu0 %4236, %v3391
      %v4238 = vpop.permute.xlu0 %4237
      %4241 = vset.pattern.permute.xlu0 0
      %4242 = vperm.xlu0 %4241, %v3392
      %v4243 = vpop.permute.xlu0 %4242
      %4246 = vset.pattern.permute.xlu0 0
      %4247 = vperm.xlu0 %4246, %v3393
      %v4248 = vpop.permute.xlu0 %4247
      %4251 = vset.pattern.permute.xlu0 0
      %4252 = vperm.xlu0 %4251, %v3394
      %v4253 = vpop.permute.xlu0 %4252
      %4256 = vset.pattern.permute.xlu0 0
      %4257 = vperm.xlu0 %4256, %v3395
      %v4258 = vpop.permute.xlu0 %4257
      %4261 = vset.pattern.permute.xlu0 0
      %4262 = vperm.xlu0 %4261, %v3396
      %v4263 = vpop.permute.xlu0 %4262
      %4266 = vset.pattern.permute.xlu0 0
      %4267 = vperm.xlu0 %4266, %v3397
      %v4268 = vpop.permute.xlu0 %4267
      %4271 = vset.pattern.permute.xlu0 0
      %4272 = vperm.xlu0 %4271, %v3398
      %v4273 = vpop.permute.xlu0 %4272
      %4276 = vset.pattern.permute.xlu0 0
      %4277 = vperm.xlu0 %4276, %v3399
      %v4278 = vpop.permute.xlu0 %4277
      %4281 = vset.pattern.permute.xlu0 0
      %4282 = vperm.xlu0 %4281, %v3400
      %v4283 = vpop.permute.xlu0 %4282
      %4286 = vset.pattern.permute.xlu0 0
      %4287 = vperm.xlu0 %4286, %v3401
      %v4288 = vpop.permute.xlu0 %4287
      %4291 = vset.pattern.permute.xlu0 0
      %4292 = vperm.xlu0 %4291, %v3402
      %v4293 = vpop.permute.xlu0 %4292
      %4296 = vset.pattern.permute.xlu0 0
      %4297 = vperm.xlu0 %4296, %v3403
      %v4298 = vpop.permute.xlu0 %4297
      %4301 = vset.pattern.permute.xlu0 0
      %4302 = vperm.xlu0 %4301, %v3404
      %v4303 = vpop.permute.xlu0 %4302
      %4306 = vset.pattern.permute.xlu0 0
      %4307 = vperm.xlu0 %4306, %v3405
      %v4308 = vpop.permute.xlu0 %4307
      %4311 = vset.pattern.permute.xlu0 0
      %4312 = vperm.xlu0 %4311, %v3406
      %v4313 = vpop.permute.xlu0 %4312
      %4316 = vset.pattern.permute.xlu0 0
      %4317 = vperm.xlu0 %4316, %v3407
      %v4318 = vpop.permute.xlu0 %4317
      %4321 = vset.pattern.permute.xlu0 0
      %4322 = vperm.xlu0 %4321, %v3408
      %v4323 = vpop.permute.xlu0 %4322
      %4326 = vset.pattern.permute.xlu0 0
      %4327 = vperm.xlu0 %4326, %v3409
      %v4328 = vpop.permute.xlu0 %4327
      %4331 = vset.pattern.permute.xlu0 0
      %4332 = vperm.xlu0 %4331, %v3410
      %v4333 = vpop.permute.xlu0 %4332
      %4336 = vset.pattern.permute.xlu0 0
      %4337 = vperm.xlu0 %4336, %v3411
      %v4338 = vpop.permute.xlu0 %4337
      %4341 = vset.pattern.permute.xlu0 0
      %4342 = vperm.xlu0 %4341, %v3412
      %v4343 = vpop.permute.xlu0 %4342
      %4346 = vset.pattern.permute.xlu0 0
      %4347 = vperm.xlu0 %4346, %v3413
      %v4348 = vpop.permute.xlu0 %4347
      %4351 = vset.pattern.permute.xlu0 0
      %4352 = vperm.xlu0 %4351, %v3414
      %v4353 = vpop.permute.xlu0 %4352
      %4356 = vset.pattern.permute.xlu0 0
      %4357 = vperm.xlu0 %4356, %v3415
      %v4358 = vpop.permute.xlu0 %4357
      %4361 = vset.pattern.permute.xlu0 0
      %4362 = vperm.xlu0 %4361, %v3416
      %v4363 = vpop.permute.xlu0 %4362
      %4366 = vset.pattern.permute.xlu0 0
      %4367 = vperm.xlu0 %4366, %v3417
      %v4368 = vpop.permute.xlu0 %4367
      %4371 = vset.pattern.permute.xlu0 0
      %4372 = vperm.xlu0 %4371, %v3418
      %v4373 = vpop.permute.xlu0 %4372
      %4376 = vset.pattern.permute.xlu0 0
      %4377 = vperm.xlu0 %4376, %v3419
      %v4378 = vpop.permute.xlu0 %4377
      %4381 = vset.pattern.permute.xlu0 0
      %4382 = vperm.xlu0 %4381, %v3420
      %v4383 = vpop.permute.xlu0 %4382
      %4386 = vset.pattern.permute.xlu0 0
      %4387 = vperm.xlu0 %4386, %v3421
      %v4388 = vpop.permute.xlu0 %4387
      %4391 = vset.pattern.permute.xlu0 0
      %4392 = vperm.xlu0 %4391, %v3422
      %v4393 = vpop.permute.xlu0 %4392
      %4396 = vset.pattern.permute.xlu0 0
      %4397 = vperm.xlu0 %4396, %v3423
      %v4398 = vpop.permute.xlu0 %4397
      %4401 = vset.pattern.permute.xlu0 0
      %4402 = vperm.xlu0 %4401, %v3424
      %v4403 = vpop.permute.xlu0 %4402
      %4406 = vset.pattern.permute.xlu0 0
      %4407 = vperm.xlu0 %4406, %v3425
      %v4408 = vpop.permute.xlu0 %4407
      %4411 = vset.pattern.permute.xlu0 0
      %4412 = vperm.xlu0 %4411, %v3426
      %v4413 = vpop.permute.xlu0 %4412
      %4416 = vset.pattern.permute.xlu0 0
      %4417 = vperm.xlu0 %4416, %v3427
      %v4418 = vpop.permute.xlu0 %4417
      %4421 = vset.pattern.permute.xlu0 0
      %4422 = vperm.xlu0 %4421, %v3428
      %v4423 = vpop.permute.xlu0 %4422
      %4426 = vset.pattern.permute.xlu0 0
      %4427 = vperm.xlu0 %4426, %v3429
      %v4428 = vpop.permute.xlu0 %4427
      %4431 = vset.pattern.permute.xlu0 0
      %4432 = vperm.xlu0 %4431, %v3430
      %v4433 = vpop.permute.xlu0 %4432
      %4436 = vset.pattern.permute.xlu0 0
      %4437 = vperm.xlu0 %4436, %v3431
      %v4438 = vpop.permute.xlu0 %4437
      %4441 = vset.pattern.permute.xlu0 0
      %4442 = vperm.xlu0 %4441, %v3432
      %v4443 = vpop.permute.xlu0 %4442
      %4446 = vset.pattern.permute.xlu0 0
      %4447 = vperm.xlu0 %4446, %v3433
      %v4448 = vpop.permute.xlu0 %4447
      %4451 = vset.pattern.permute.xlu0 0
      %4452 = vperm.xlu0 %4451, %v3434
      %v4453 = vpop.permute.xlu0 %4452
      %4456 = vset.pattern.permute.xlu0 0
      %4457 = vperm.xlu0 %4456, %v3435
      %v4458 = vpop.permute.xlu0 %4457
      %4461 = vset.pattern.permute.xlu0 0
      %4462 = vperm.xlu0 %4461, %v3436
      %v4463 = vpop.permute.xlu0 %4462
      %4466 = vset.pattern.permute.xlu0 0
      %4467 = vperm.xlu0 %4466, %v3437
      %v4468 = vpop.permute.xlu0 %4467
      %4471 = vset.pattern.permute.xlu0 0
      %4472 = vperm.xlu0 %4471, %v3438
      %v4473 = vpop.permute.xlu0 %4472
      %4476 = vset.pattern.permute.xlu0 0
      %4477 = vperm.xlu0 %4476, %v3439
      %v4478 = vpop.permute.xlu0 %4477
      %4481 = vset.pattern.permute.xlu0 0
      %4482 = vperm.xlu0 %4481, %v3440
      %v4483 = vpop.permute.xlu0 %4482
      %4486 = vset.pattern.permute.xlu0 0
      %4487 = vperm.xlu0 %4486, %v3441
      %v4488 = vpop.permute.xlu0 %4487
      %4491 = vset.pattern.permute.xlu0 0
      %4492 = vperm.xlu0 %4491, %v3442
      %v4493 = vpop.permute.xlu0 %4492
      %4496 = vset.pattern.permute.xlu0 0
      %4497 = vperm.xlu0 %4496, %v3443
      %v4498 = vpop.permute.xlu0 %4497
      %4501 = vset.pattern.permute.xlu0 0
      %4502 = vperm.xlu0 %4501, %v3444
      %v4503 = vpop.permute.xlu0 %4502
      %4506 = vset.pattern.permute.xlu0 0
      %4507 = vperm.xlu0 %4506, %v3445
      %v4508 = vpop.permute.xlu0 %4507
      %4511 = vset.pattern.permute.xlu0 0
      %4512 = vperm.xlu0 %4511, %v3446
      %v4513 = vpop.permute.xlu0 %4512
      %4516 = vset.pattern.permute.xlu0 0
      %4517 = vperm.xlu0 %4516, %v3447
      %v4518 = vpop.permute.xlu0 %4517
      %4521 = vset.pattern.permute.xlu0 0
      %4522 = vperm.xlu0 %4521, %v3448
      %v4523 = vpop.permute.xlu0 %4522
      %4526 = vset.pattern.permute.xlu0 0
      %4527 = vperm.xlu0 %4526, %v3449
      %v4528 = vpop.permute.xlu0 %4527
      %4531 = vset.pattern.permute.xlu0 0
      %4532 = vperm.xlu0 %4531, %v3450
      %v4533 = vpop.permute.xlu0 %4532
      %4536 = vset.pattern.permute.xlu0 0
      %4537 = vperm.xlu0 %4536, %v3451
      %v4538 = vpop.permute.xlu0 %4537
      %4541 = vset.pattern.permute.xlu0 0
      %4542 = vperm.xlu0 %4541, %v3452
      %v4543 = vpop.permute.xlu0 %4542
      %4546 = vset.pattern.permute.xlu0 0
      %4547 = vperm.xlu0 %4546, %v3453
      %v4548 = vpop.permute.xlu0 %4547
      %4551 = vset.pattern.permute.xlu0 0
      %4552 = vperm.xlu0 %4551, %v3454
      %v4553 = vpop.permute.xlu0 %4552
      %4556 = vset.pattern.permute.xlu0 0
      %4557 = vperm.xlu0 %4556, %v3455
      %v4558 = vpop.permute.xlu0 %4557
      %4561 = vset.pattern.permute.xlu0 0
      %4562 = vperm.xlu0 %4561, %v3456
      %v4563 = vpop.permute.xlu0 %4562
      %4566 = vset.pattern.permute.xlu0 0
      %4567 = vperm.xlu0 %4566, %v3457
      %v4568 = vpop.permute.xlu0 %4567
      %4571 = vset.pattern.permute.xlu0 0
      %4572 = vperm.xlu0 %4571, %v3458
      %v4573 = vpop.permute.xlu0 %4572
      %4576 = vset.pattern.permute.xlu0 0
      %4577 = vperm.xlu0 %4576, %v3459
      %v4578 = vpop.permute.xlu0 %4577
      %4581 = vset.pattern.permute.xlu0 0
      %4582 = vperm.xlu0 %4581, %v3460
      %v4583 = vpop.permute.xlu0 %4582
      %4586 = vset.pattern.permute.xlu0 0
      %4587 = vperm.xlu0 %4586, %v3461
      %v4588 = vpop.permute.xlu0 %4587
      %4591 = vset.pattern.permute.xlu0 0
      %4592 = vperm.xlu0 %4591, %v3462
      %v4593 = vpop.permute.xlu0 %4592
      %4596 = vset.pattern.permute.xlu0 0
      %4597 = vperm.xlu0 %4596, %v3463
      %v4598 = vpop.permute.xlu0 %4597
      %4601 = vset.pattern.permute.xlu0 0
      %4602 = vperm.xlu0 %4601, %v3464
      %v4603 = vpop.permute.xlu0 %4602
      %4606 = vset.pattern.permute.xlu0 0
      %4607 = vperm.xlu0 %4606, %v3465
      %v4608 = vpop.permute.xlu0 %4607
      %4611 = vset.pattern.permute.xlu0 0
      %4612 = vperm.xlu0 %4611, %v3466
      %v4613 = vpop.permute.xlu0 %4612
      %4616 = vset.pattern.permute.xlu0 0
      %4617 = vperm.xlu0 %4616, %v3467
      %v4618 = vpop.permute.xlu0 %4617
      %v4620 = vmul.f32 %v267, %v3983
      %v4621 = vmul.f32 %v268, %v3988
      %v4622 = vmul.f32 %v269, %v3993
      %v4623 = vmul.f32 %v270, %v3998
      %v4624 = vmul.f32 %v271, %v4003
      %v4625 = vmul.f32 %v272, %v4008
      %v4626 = vmul.f32 %v273, %v4013
      %v4627 = vmul.f32 %v274, %v4018
      %v4628 = vmul.f32 %v275, %v4023
      %v4629 = vmul.f32 %v276, %v4028
      %v4630 = vmul.f32 %v277, %v4033
      %v4631 = vmul.f32 %v278, %v4038
      %v4632 = vmul.f32 %v279, %v4043
      %v4633 = vmul.f32 %v280, %v4048
      %v4634 = vmul.f32 %v281, %v4053
      %v4635 = vmul.f32 %v282, %v4058
      %v4636 = vmul.f32 %v283, %v4063
      %v4637 = vmul.f32 %v284, %v4068
      %v4638 = vmul.f32 %v285, %v4073
      %v4639 = vmul.f32 %v286, %v4078
      %v4640 = vmul.f32 %v287, %v4083
      %v4641 = vmul.f32 %v288, %v4088
      %v4642 = vmul.f32 %v289, %v4093
      %v4643 = vmul.f32 %v290, %v4098
      %v4644 = vmul.f32 %v291, %v4103
      %v4645 = vmul.f32 %v292, %v4108
      %v4646 = vmul.f32 %v293, %v4113
      %v4647 = vmul.f32 %v294, %v4118
      %v4648 = vmul.f32 %v295, %v4123
      %v4649 = vmul.f32 %v296, %v4128
      %v4650 = vmul.f32 %v297, %v4133
      %v4651 = vmul.f32 %v298, %v4138
      %v4652 = vmul.f32 %v299, %v4143
      %v4653 = vmul.f32 %v300, %v4148
      %v4654 = vmul.f32 %v301, %v4153
      %v4655 = vmul.f32 %v302, %v4158
      %v4656 = vmul.f32 %v303, %v4163
      %v4657 = vmul.f32 %v304, %v4168
      %v4658 = vmul.f32 %v305, %v4173
      %v4659 = vmul.f32 %v306, %v4178
      %v4660 = vmul.f32 %v307, %v4183
      %v4661 = vmul.f32 %v308, %v4188
      %v4662 = vmul.f32 %v309, %v4193
      %v4663 = vmul.f32 %v310, %v4198
      %v4664 = vmul.f32 %v311, %v4203
      %v4665 = vmul.f32 %v312, %v4208
      %v4666 = vmul.f32 %v313, %v4213
      %v4667 = vmul.f32 %v314, %v4218
      %v4668 = vmul.f32 %v315, %v4223
      %v4669 = vmul.f32 %v316, %v4228
      %v4670 = vmul.f32 %v317, %v4233
      %v4671 = vmul.f32 %v318, %v4238
      %v4672 = vmul.f32 %v319, %v4243
      %v4673 = vmul.f32 %v320, %v4248
      %v4674 = vmul.f32 %v321, %v4253
      %v4675 = vmul.f32 %v322, %v4258
      %v4676 = vmul.f32 %v323, %v4263
      %v4677 = vmul.f32 %v324, %v4268
      %v4678 = vmul.f32 %v325, %v4273
      %v4679 = vmul.f32 %v326, %v4278
      %v4680 = vmul.f32 %v327, %v4283
      %v4681 = vmul.f32 %v328, %v4288
      %v4682 = vmul.f32 %v329, %v4293
      %v4683 = vmul.f32 %v330, %v4298
      %v4684 = vmul.f32 %v331, %v4303
      %v4685 = vmul.f32 %v332, %v4308
      %v4686 = vmul.f32 %v333, %v4313
      %v4687 = vmul.f32 %v334, %v4318
      %v4688 = vmul.f32 %v335, %v4323
      %v4689 = vmul.f32 %v336, %v4328
      %v4690 = vmul.f32 %v337, %v4333
      %v4691 = vmul.f32 %v338, %v4338
      %v4692 = vmul.f32 %v339, %v4343
      %v4693 = vmul.f32 %v340, %v4348
      %v4694 = vmul.f32 %v341, %v4353
      %v4695 = vmul.f32 %v342, %v4358
      %v4696 = vmul.f32 %v343, %v4363
      %v4697 = vmul.f32 %v344, %v4368
      %v4698 = vmul.f32 %v345, %v4373
      %v4699 = vmul.f32 %v346, %v4378
      %v4700 = vmul.f32 %v347, %v4383
      %v4701 = vmul.f32 %v348, %v4388
      %v4702 = vmul.f32 %v349, %v4393
      %v4703 = vmul.f32 %v350, %v4398
      %v4704 = vmul.f32 %v351, %v4403
      %v4705 = vmul.f32 %v352, %v4408
      %v4706 = vmul.f32 %v353, %v4413
      %v4707 = vmul.f32 %v354, %v4418
      %v4708 = vmul.f32 %v355, %v4423
      %v4709 = vmul.f32 %v356, %v4428
      %v4710 = vmul.f32 %v357, %v4433
      %v4711 = vmul.f32 %v358, %v4438
      %v4712 = vmul.f32 %v359, %v4443
      %v4713 = vmul.f32 %v360, %v4448
      %v4714 = vmul.f32 %v361, %v4453
      %v4715 = vmul.f32 %v362, %v4458
      %v4716 = vmul.f32 %v363, %v4463
      %v4717 = vmul.f32 %v364, %v4468
      %v4718 = vmul.f32 %v365, %v4473
      %v4719 = vmul.f32 %v366, %v4478
      %v4720 = vmul.f32 %v367, %v4483
      %v4721 = vmul.f32 %v368, %v4488
      %v4722 = vmul.f32 %v369, %v4493
      %v4723 = vmul.f32 %v370, %v4498
      %v4724 = vmul.f32 %v371, %v4503
      %v4725 = vmul.f32 %v372, %v4508
      %v4726 = vmul.f32 %v373, %v4513
      %v4727 = vmul.f32 %v374, %v4518
      %v4728 = vmul.f32 %v375, %v4523
      %v4729 = vmul.f32 %v376, %v4528
      %v4730 = vmul.f32 %v377, %v4533
      %v4731 = vmul.f32 %v378, %v4538
      %v4732 = vmul.f32 %v379, %v4543
      %v4733 = vmul.f32 %v380, %v4548
      %v4734 = vmul.f32 %v381, %v4553
      %v4735 = vmul.f32 %v382, %v4558
      %v4736 = vmul.f32 %v383, %v4563
      %v4737 = vmul.f32 %v384, %v4568
      %v4738 = vmul.f32 %v385, %v4573
      %v4739 = vmul.f32 %v386, %v4578
      %v4740 = vmul.f32 %v387, %v4583
      %v4741 = vmul.f32 %v388, %v4588
      %v4742 = vmul.f32 %v389, %v4593
      %v4743 = vmul.f32 %v390, %v4598
      %v4744 = vmul.f32 %v391, %v4603
      %v4745 = vmul.f32 %v392, %v4608
      %v4746 = vmul.f32 %v393, %v4613
      %v4747 = vmul.f32 %v394, %v4618
      %v4748 = vadd.f32 %v3852, %v4620
      %v4749 = vadd.f32 %v3853, %v4621
      %v4750 = vadd.f32 %v3854, %v4622
      %v4751 = vadd.f32 %v3855, %v4623
      %v4752 = vadd.f32 %v3856, %v4624
      %v4753 = vadd.f32 %v3857, %v4625
      %v4754 = vadd.f32 %v3858, %v4626
      %v4755 = vadd.f32 %v3859, %v4627
      %v4756 = vadd.f32 %v3860, %v4628
      %v4757 = vadd.f32 %v3861, %v4629
      %v4758 = vadd.f32 %v3862, %v4630
      %v4759 = vadd.f32 %v3863, %v4631
      %v4760 = vadd.f32 %v3864, %v4632
      %v4761 = vadd.f32 %v3865, %v4633
      %v4762 = vadd.f32 %v3866, %v4634
      %v4763 = vadd.f32 %v3867, %v4635
      %v4764 = vadd.f32 %v3868, %v4636
      %v4765 = vadd.f32 %v3869, %v4637
      %v4766 = vadd.f32 %v3870, %v4638
      %v4767 = vadd.f32 %v3871, %v4639
      %v4768 = vadd.f32 %v3872, %v4640
      %v4769 = vadd.f32 %v3873, %v4641
      %v4770 = vadd.f32 %v3874, %v4642
      %v4771 = vadd.f32 %v3875, %v4643
      %v4772 = vadd.f32 %v3876, %v4644
      %v4773 = vadd.f32 %v3877, %v4645
      %v4774 = vadd.f32 %v3878, %v4646
      %v4775 = vadd.f32 %v3879, %v4647
      %v4776 = vadd.f32 %v3880, %v4648
      %v4777 = vadd.f32 %v3881, %v4649
      %v4778 = vadd.f32 %v3882, %v4650
      %v4779 = vadd.f32 %v3883, %v4651
      %v4780 = vadd.f32 %v3884, %v4652
      %v4781 = vadd.f32 %v3885, %v4653
      %v4782 = vadd.f32 %v3886, %v4654
      %v4783 = vadd.f32 %v3887, %v4655
      %v4784 = vadd.f32 %v3888, %v4656
      %v4785 = vadd.f32 %v3889, %v4657
      %v4786 = vadd.f32 %v3890, %v4658
      %v4787 = vadd.f32 %v3891, %v4659
      %v4788 = vadd.f32 %v3892, %v4660
      %v4789 = vadd.f32 %v3893, %v4661
      %v4790 = vadd.f32 %v3894, %v4662
      %v4791 = vadd.f32 %v3895, %v4663
      %v4792 = vadd.f32 %v3896, %v4664
      %v4793 = vadd.f32 %v3897, %v4665
      %v4794 = vadd.f32 %v3898, %v4666
      %v4795 = vadd.f32 %v3899, %v4667
      %v4796 = vadd.f32 %v3900, %v4668
      %v4797 = vadd.f32 %v3901, %v4669
      %v4798 = vadd.f32 %v3902, %v4670
      %v4799 = vadd.f32 %v3903, %v4671
      %v4800 = vadd.f32 %v3904, %v4672
      %v4801 = vadd.f32 %v3905, %v4673
      %v4802 = vadd.f32 %v3906, %v4674
      %v4803 = vadd.f32 %v3907, %v4675
      %v4804 = vadd.f32 %v3908, %v4676
      %v4805 = vadd.f32 %v3909, %v4677
      %v4806 = vadd.f32 %v3910, %v4678
      %v4807 = vadd.f32 %v3911, %v4679
      %v4808 = vadd.f32 %v3912, %v4680
      %v4809 = vadd.f32 %v3913, %v4681
      %v4810 = vadd.f32 %v3914, %v4682
      %v4811 = vadd.f32 %v3915, %v4683
      %v4812 = vadd.f32 %v3916, %v4684
      %v4813 = vadd.f32 %v3917, %v4685
      %v4814 = vadd.f32 %v3918, %v4686
      %v4815 = vadd.f32 %v3919, %v4687
      %v4816 = vadd.f32 %v3920, %v4688
      %v4817 = vadd.f32 %v3921, %v4689
      %v4818 = vadd.f32 %v3922, %v4690
      %v4819 = vadd.f32 %v3923, %v4691
      %v4820 = vadd.f32 %v3924, %v4692
      %v4821 = vadd.f32 %v3925, %v4693
      %v4822 = vadd.f32 %v3926, %v4694
      %v4823 = vadd.f32 %v3927, %v4695
      %v4824 = vadd.f32 %v3928, %v4696
      %v4825 = vadd.f32 %v3929, %v4697
      %v4826 = vadd.f32 %v3930, %v4698
      %v4827 = vadd.f32 %v3931, %v4699
      %v4828 = vadd.f32 %v3932, %v4700
      %v4829 = vadd.f32 %v3933, %v4701
      %v4830 = vadd.f32 %v3934, %v4702
      %v4831 = vadd.f32 %v3935, %v4703
      %v4832 = vadd.f32 %v3936, %v4704
      %v4833 = vadd.f32 %v3937, %v4705
      %v4834 = vadd.f32 %v3938, %v4706
      %v4835 = vadd.f32 %v3939, %v4707
      %v4836 = vadd.f32 %v3940, %v4708
      %v4837 = vadd.f32 %v3941, %v4709
      %v4838 = vadd.f32 %v3942, %v4710
      %v4839 = vadd.f32 %v3943, %v4711
      %v4840 = vadd.f32 %v3944, %v4712
      %v4841 = vadd.f32 %v3945, %v4713
      %v4842 = vadd.f32 %v3946, %v4714
      %v4843 = vadd.f32 %v3947, %v4715
      %v4844 = vadd.f32 %v3948, %v4716
      %v4845 = vadd.f32 %v3949, %v4717
      %v4846 = vadd.f32 %v3950, %v4718
      %v4847 = vadd.f32 %v3951, %v4719
      %v4848 = vadd.f32 %v3952, %v4720
      %v4849 = vadd.f32 %v3953, %v4721
      %v4850 = vadd.f32 %v3954, %v4722
      %v4851 = vadd.f32 %v3955, %v4723
      %v4852 = vadd.f32 %v3956, %v4724
      %v4853 = vadd.f32 %v3957, %v4725
      %v4854 = vadd.f32 %v3958, %v4726
      %v4855 = vadd.f32 %v3959, %v4727
      %v4856 = vadd.f32 %v3960, %v4728
      %v4857 = vadd.f32 %v3961, %v4729
      %v4858 = vadd.f32 %v3962, %v4730
      %v4859 = vadd.f32 %v3963, %v4731
      %v4860 = vadd.f32 %v3964, %v4732
      %v4861 = vadd.f32 %v3965, %v4733
      %v4862 = vadd.f32 %v3966, %v4734
      %v4863 = vadd.f32 %v3967, %v4735
      %v4864 = vadd.f32 %v3968, %v4736
      %v4865 = vadd.f32 %v3969, %v4737
      %v4866 = vadd.f32 %v3970, %v4738
      %v4867 = vadd.f32 %v3971, %v4739
      %v4868 = vadd.f32 %v3972, %v4740
      %v4869 = vadd.f32 %v3973, %v4741
      %v4870 = vadd.f32 %v3974, %v4742
      %v4871 = vadd.f32 %v3975, %v4743
      %v4872 = vadd.f32 %v3976, %v4744
      %v4873 = vadd.f32 %v3977, %v4745
      %v4874 = vadd.f32 %v3978, %v4746
      %v4875 = vadd.f32 %v3979, %v4747
      %4877 = vset.pattern.permute.xlu0 0
      %4878 = vperm.xlu0 %4877, %v3724
      %v4879 = vpop.permute.xlu0 %4878
      %4882 = vset.pattern.permute.xlu0 0
      %4883 = vperm.xlu0 %4882, %v3725
      %v4884 = vpop.permute.xlu0 %4883
      %4887 = vset.pattern.permute.xlu0 0
      %4888 = vperm.xlu0 %4887, %v3726
      %v4889 = vpop.permute.xlu0 %4888
      %4892 = vset.pattern.permute.xlu0 0
      %4893 = vperm.xlu0 %4892, %v3727
      %v4894 = vpop.permute.xlu0 %4893
      %4897 = vset.pattern.permute.xlu0 0
      %4898 = vperm.xlu0 %4897, %v3728
      %v4899 = vpop.permute.xlu0 %4898
      %4902 = vset.pattern.permute.xlu0 0
      %4903 = vperm.xlu0 %4902, %v3729
      %v4904 = vpop.permute.xlu0 %4903
      %4907 = vset.pattern.permute.xlu0 0
      %4908 = vperm.xlu0 %4907, %v3730
      %v4909 = vpop.permute.xlu0 %4908
      %4912 = vset.pattern.permute.xlu0 0
      %4913 = vperm.xlu0 %4912, %v3731
      %v4914 = vpop.permute.xlu0 %4913
      %4917 = vset.pattern.permute.xlu0 0
      %4918 = vperm.xlu0 %4917, %v3732
      %v4919 = vpop.permute.xlu0 %4918
      %4922 = vset.pattern.permute.xlu0 0
      %4923 = vperm.xlu0 %4922, %v3733
      %v4924 = vpop.permute.xlu0 %4923
      %4927 = vset.pattern.permute.xlu0 0
      %4928 = vperm.xlu0 %4927, %v3734
      %v4929 = vpop.permute.xlu0 %4928
      %4932 = vset.pattern.permute.xlu0 0
      %4933 = vperm.xlu0 %4932, %v3735
      %v4934 = vpop.permute.xlu0 %4933
      %4937 = vset.pattern.permute.xlu0 0
      %4938 = vperm.xlu0 %4937, %v3736
      %v4939 = vpop.permute.xlu0 %4938
      %4942 = vset.pattern.permute.xlu0 0
      %4943 = vperm.xlu0 %4942, %v3737
      %v4944 = vpop.permute.xlu0 %4943
      %4947 = vset.pattern.permute.xlu0 0
      %4948 = vperm.xlu0 %4947, %v3738
      %v4949 = vpop.permute.xlu0 %4948
      %4952 = vset.pattern.permute.xlu0 0
      %4953 = vperm.xlu0 %4952, %v3739
      %v4954 = vpop.permute.xlu0 %4953
      %4957 = vset.pattern.permute.xlu0 0
      %4958 = vperm.xlu0 %4957, %v3740
      %v4959 = vpop.permute.xlu0 %4958
      %4962 = vset.pattern.permute.xlu0 0
      %4963 = vperm.xlu0 %4962, %v3741
      %v4964 = vpop.permute.xlu0 %4963
      %4967 = vset.pattern.permute.xlu0 0
      %4968 = vperm.xlu0 %4967, %v3742
      %v4969 = vpop.permute.xlu0 %4968
      %4972 = vset.pattern.permute.xlu0 0
      %4973 = vperm.xlu0 %4972, %v3743
      %v4974 = vpop.permute.xlu0 %4973
      %4977 = vset.pattern.permute.xlu0 0
      %4978 = vperm.xlu0 %4977, %v3744
      %v4979 = vpop.permute.xlu0 %4978
      %4982 = vset.pattern.permute.xlu0 0
      %4983 = vperm.xlu0 %4982, %v3745
      %v4984 = vpop.permute.xlu0 %4983
      %4987 = vset.pattern.permute.xlu0 0
      %4988 = vperm.xlu0 %4987, %v3746
      %v4989 = vpop.permute.xlu0 %4988
      %4992 = vset.pattern.permute.xlu0 0
      %4993 = vperm.xlu0 %4992, %v3747
      %v4994 = vpop.permute.xlu0 %4993
      %4997 = vset.pattern.permute.xlu0 0
      %4998 = vperm.xlu0 %4997, %v3748
      %v4999 = vpop.permute.xlu0 %4998
      %5002 = vset.pattern.permute.xlu0 0
      %5003 = vperm.xlu0 %5002, %v3749
      %v5004 = vpop.permute.xlu0 %5003
      %5007 = vset.pattern.permute.xlu0 0
      %5008 = vperm.xlu0 %5007, %v3750
      %v5009 = vpop.permute.xlu0 %5008
      %5012 = vset.pattern.permute.xlu0 0
      %5013 = vperm.xlu0 %5012, %v3751
      %v5014 = vpop.permute.xlu0 %5013
      %5017 = vset.pattern.permute.xlu0 0
      %5018 = vperm.xlu0 %5017, %v3752
      %v5019 = vpop.permute.xlu0 %5018
      %5022 = vset.pattern.permute.xlu0 0
      %5023 = vperm.xlu0 %5022, %v3753
      %v5024 = vpop.permute.xlu0 %5023
      %5027 = vset.pattern.permute.xlu0 0
      %5028 = vperm.xlu0 %5027, %v3754
      %v5029 = vpop.permute.xlu0 %5028
      %5032 = vset.pattern.permute.xlu0 0
      %5033 = vperm.xlu0 %5032, %v3755
      %v5034 = vpop.permute.xlu0 %5033
      %5037 = vset.pattern.permute.xlu0 0
      %5038 = vperm.xlu0 %5037, %v3756
      %v5039 = vpop.permute.xlu0 %5038
      %5042 = vset.pattern.permute.xlu0 0
      %5043 = vperm.xlu0 %5042, %v3757
      %v5044 = vpop.permute.xlu0 %5043
      %5047 = vset.pattern.permute.xlu0 0
      %5048 = vperm.xlu0 %5047, %v3758
      %v5049 = vpop.permute.xlu0 %5048
      %5052 = vset.pattern.permute.xlu0 0
      %5053 = vperm.xlu0 %5052, %v3759
      %v5054 = vpop.permute.xlu0 %5053
      %5057 = vset.pattern.permute.xlu0 0
      %5058 = vperm.xlu0 %5057, %v3760
      %v5059 = vpop.permute.xlu0 %5058
      %5062 = vset.pattern.permute.xlu0 0
      %5063 = vperm.xlu0 %5062, %v3761
      %v5064 = vpop.permute.xlu0 %5063
      %5067 = vset.pattern.permute.xlu0 0
      %5068 = vperm.xlu0 %5067, %v3762
      %v5069 = vpop.permute.xlu0 %5068
      %5072 = vset.pattern.permute.xlu0 0
      %5073 = vperm.xlu0 %5072, %v3763
      %v5074 = vpop.permute.xlu0 %5073
      %5077 = vset.pattern.permute.xlu0 0
      %5078 = vperm.xlu0 %5077, %v3764
      %v5079 = vpop.permute.xlu0 %5078
      %5082 = vset.pattern.permute.xlu0 0
      %5083 = vperm.xlu0 %5082, %v3765
      %v5084 = vpop.permute.xlu0 %5083
      %5087 = vset.pattern.permute.xlu0 0
      %5088 = vperm.xlu0 %5087, %v3766
      %v5089 = vpop.permute.xlu0 %5088
      %5092 = vset.pattern.permute.xlu0 0
      %5093 = vperm.xlu0 %5092, %v3767
      %v5094 = vpop.permute.xlu0 %5093
      %5097 = vset.pattern.permute.xlu0 0
      %5098 = vperm.xlu0 %5097, %v3768
      %v5099 = vpop.permute.xlu0 %5098
      %5102 = vset.pattern.permute.xlu0 0
      %5103 = vperm.xlu0 %5102, %v3769
      %v5104 = vpop.permute.xlu0 %5103
      %5107 = vset.pattern.permute.xlu0 0
      %5108 = vperm.xlu0 %5107, %v3770
      %v5109 = vpop.permute.xlu0 %5108
      %5112 = vset.pattern.permute.xlu0 0
      %5113 = vperm.xlu0 %5112, %v3771
      %v5114 = vpop.permute.xlu0 %5113
      %5117 = vset.pattern.permute.xlu0 0
      %5118 = vperm.xlu0 %5117, %v3772
      %v5119 = vpop.permute.xlu0 %5118
      %5122 = vset.pattern.permute.xlu0 0
      %5123 = vperm.xlu0 %5122, %v3773
      %v5124 = vpop.permute.xlu0 %5123
      %5127 = vset.pattern.permute.xlu0 0
      %5128 = vperm.xlu0 %5127, %v3774
      %v5129 = vpop.permute.xlu0 %5128
      %5132 = vset.pattern.permute.xlu0 0
      %5133 = vperm.xlu0 %5132, %v3775
      %v5134 = vpop.permute.xlu0 %5133
      %5137 = vset.pattern.permute.xlu0 0
      %5138 = vperm.xlu0 %5137, %v3776
      %v5139 = vpop.permute.xlu0 %5138
      %5142 = vset.pattern.permute.xlu0 0
      %5143 = vperm.xlu0 %5142, %v3777
      %v5144 = vpop.permute.xlu0 %5143
      %5147 = vset.pattern.permute.xlu0 0
      %5148 = vperm.xlu0 %5147, %v3778
      %v5149 = vpop.permute.xlu0 %5148
      %5152 = vset.pattern.permute.xlu0 0
      %5153 = vperm.xlu0 %5152, %v3779
      %v5154 = vpop.permute.xlu0 %5153
      %5157 = vset.pattern.permute.xlu0 0
      %5158 = vperm.xlu0 %5157, %v3780
      %v5159 = vpop.permute.xlu0 %5158
      %5162 = vset.pattern.permute.xlu0 0
      %5163 = vperm.xlu0 %5162, %v3781
      %v5164 = vpop.permute.xlu0 %5163
      %5167 = vset.pattern.permute.xlu0 0
      %5168 = vperm.xlu0 %5167, %v3782
      %v5169 = vpop.permute.xlu0 %5168
      %5172 = vset.pattern.permute.xlu0 0
      %5173 = vperm.xlu0 %5172, %v3783
      %v5174 = vpop.permute.xlu0 %5173
      %5177 = vset.pattern.permute.xlu0 0
      %5178 = vperm.xlu0 %5177, %v3784
      %v5179 = vpop.permute.xlu0 %5178
      %5182 = vset.pattern.permute.xlu0 0
      %5183 = vperm.xlu0 %5182, %v3785
      %v5184 = vpop.permute.xlu0 %5183
      %5187 = vset.pattern.permute.xlu0 0
      %5188 = vperm.xlu0 %5187, %v3786
      %v5189 = vpop.permute.xlu0 %5188
      %5192 = vset.pattern.permute.xlu0 0
      %5193 = vperm.xlu0 %5192, %v3787
      %v5194 = vpop.permute.xlu0 %5193
      %5197 = vset.pattern.permute.xlu0 0
      %5198 = vperm.xlu0 %5197, %v3788
      %v5199 = vpop.permute.xlu0 %5198
      %5202 = vset.pattern.permute.xlu0 0
      %5203 = vperm.xlu0 %5202, %v3789
      %v5204 = vpop.permute.xlu0 %5203
      %5207 = vset.pattern.permute.xlu0 0
      %5208 = vperm.xlu0 %5207, %v3790
      %v5209 = vpop.permute.xlu0 %5208
      %5212 = vset.pattern.permute.xlu0 0
      %5213 = vperm.xlu0 %5212, %v3791
      %v5214 = vpop.permute.xlu0 %5213
      %5217 = vset.pattern.permute.xlu0 0
      %5218 = vperm.xlu0 %5217, %v3792
      %v5219 = vpop.permute.xlu0 %5218
      %5222 = vset.pattern.permute.xlu0 0
      %5223 = vperm.xlu0 %5222, %v3793
      %v5224 = vpop.permute.xlu0 %5223
      %5227 = vset.pattern.permute.xlu0 0
      %5228 = vperm.xlu0 %5227, %v3794
      %v5229 = vpop.permute.xlu0 %5228
      %5232 = vset.pattern.permute.xlu0 0
      %5233 = vperm.xlu0 %5232, %v3795
      %v5234 = vpop.permute.xlu0 %5233
      %5237 = vset.pattern.permute.xlu0 0
      %5238 = vperm.xlu0 %5237, %v3796
      %v5239 = vpop.permute.xlu0 %5238
      %5242 = vset.pattern.permute.xlu0 0
      %5243 = vperm.xlu0 %5242, %v3797
      %v5244 = vpop.permute.xlu0 %5243
      %5247 = vset.pattern.permute.xlu0 0
      %5248 = vperm.xlu0 %5247, %v3798
      %v5249 = vpop.permute.xlu0 %5248
      %5252 = vset.pattern.permute.xlu0 0
      %5253 = vperm.xlu0 %5252, %v3799
      %v5254 = vpop.permute.xlu0 %5253
      %5257 = vset.pattern.permute.xlu0 0
      %5258 = vperm.xlu0 %5257, %v3800
      %v5259 = vpop.permute.xlu0 %5258
      %5262 = vset.pattern.permute.xlu0 0
      %5263 = vperm.xlu0 %5262, %v3801
      %v5264 = vpop.permute.xlu0 %5263
      %5267 = vset.pattern.permute.xlu0 0
      %5268 = vperm.xlu0 %5267, %v3802
      %v5269 = vpop.permute.xlu0 %5268
      %5272 = vset.pattern.permute.xlu0 0
      %5273 = vperm.xlu0 %5272, %v3803
      %v5274 = vpop.permute.xlu0 %5273
      %5277 = vset.pattern.permute.xlu0 0
      %5278 = vperm.xlu0 %5277, %v3804
      %v5279 = vpop.permute.xlu0 %5278
      %5282 = vset.pattern.permute.xlu0 0
      %5283 = vperm.xlu0 %5282, %v3805
      %v5284 = vpop.permute.xlu0 %5283
      %5287 = vset.pattern.permute.xlu0 0
      %5288 = vperm.xlu0 %5287, %v3806
      %v5289 = vpop.permute.xlu0 %5288
      %5292 = vset.pattern.permute.xlu0 0
      %5293 = vperm.xlu0 %5292, %v3807
      %v5294 = vpop.permute.xlu0 %5293
      %5297 = vset.pattern.permute.xlu0 0
      %5298 = vperm.xlu0 %5297, %v3808
      %v5299 = vpop.permute.xlu0 %5298
      %5302 = vset.pattern.permute.xlu0 0
      %5303 = vperm.xlu0 %5302, %v3809
      %v5304 = vpop.permute.xlu0 %5303
      %5307 = vset.pattern.permute.xlu0 0
      %5308 = vperm.xlu0 %5307, %v3810
      %v5309 = vpop.permute.xlu0 %5308
      %5312 = vset.pattern.permute.xlu0 0
      %5313 = vperm.xlu0 %5312, %v3811
      %v5314 = vpop.permute.xlu0 %5313
      %5317 = vset.pattern.permute.xlu0 0
      %5318 = vperm.xlu0 %5317, %v3812
      %v5319 = vpop.permute.xlu0 %5318
      %5322 = vset.pattern.permute.xlu0 0
      %5323 = vperm.xlu0 %5322, %v3813
      %v5324 = vpop.permute.xlu0 %5323
      %5327 = vset.pattern.permute.xlu0 0
      %5328 = vperm.xlu0 %5327, %v3814
      %v5329 = vpop.permute.xlu0 %5328
      %5332 = vset.pattern.permute.xlu0 0
      %5333 = vperm.xlu0 %5332, %v3815
      %v5334 = vpop.permute.xlu0 %5333
      %5337 = vset.pattern.permute.xlu0 0
      %5338 = vperm.xlu0 %5337, %v3816
      %v5339 = vpop.permute.xlu0 %5338
      %5342 = vset.pattern.permute.xlu0 0
      %5343 = vperm.xlu0 %5342, %v3817
      %v5344 = vpop.permute.xlu0 %5343
      %5347 = vset.pattern.permute.xlu0 0
      %5348 = vperm.xlu0 %5347, %v3818
      %v5349 = vpop.permute.xlu0 %5348
      %5352 = vset.pattern.permute.xlu0 0
      %5353 = vperm.xlu0 %5352, %v3819
      %v5354 = vpop.permute.xlu0 %5353
      %5357 = vset.pattern.permute.xlu0 0
      %5358 = vperm.xlu0 %5357, %v3820
      %v5359 = vpop.permute.xlu0 %5358
      %5362 = vset.pattern.permute.xlu0 0
      %5363 = vperm.xlu0 %5362, %v3821
      %v5364 = vpop.permute.xlu0 %5363
      %5367 = vset.pattern.permute.xlu0 0
      %5368 = vperm.xlu0 %5367, %v3822
      %v5369 = vpop.permute.xlu0 %5368
      %5372 = vset.pattern.permute.xlu0 0
      %5373 = vperm.xlu0 %5372, %v3823
      %v5374 = vpop.permute.xlu0 %5373
      %5377 = vset.pattern.permute.xlu0 0
      %5378 = vperm.xlu0 %5377, %v3824
      %v5379 = vpop.permute.xlu0 %5378
      %5382 = vset.pattern.permute.xlu0 0
      %5383 = vperm.xlu0 %5382, %v3825
      %v5384 = vpop.permute.xlu0 %5383
      %5387 = vset.pattern.permute.xlu0 0
      %5388 = vperm.xlu0 %5387, %v3826
      %v5389 = vpop.permute.xlu0 %5388
      %5392 = vset.pattern.permute.xlu0 0
      %5393 = vperm.xlu0 %5392, %v3827
      %v5394 = vpop.permute.xlu0 %5393
      %5397 = vset.pattern.permute.xlu0 0
      %5398 = vperm.xlu0 %5397, %v3828
      %v5399 = vpop.permute.xlu0 %5398
      %5402 = vset.pattern.permute.xlu0 0
      %5403 = vperm.xlu0 %5402, %v3829
      %v5404 = vpop.permute.xlu0 %5403
      %5407 = vset.pattern.permute.xlu0 0
      %5408 = vperm.xlu0 %5407, %v3830
      %v5409 = vpop.permute.xlu0 %5408
      %5412 = vset.pattern.permute.xlu0 0
      %5413 = vperm.xlu0 %5412, %v3831
      %v5414 = vpop.permute.xlu0 %5413
      %5417 = vset.pattern.permute.xlu0 0
      %5418 = vperm.xlu0 %5417, %v3832
      %v5419 = vpop.permute.xlu0 %5418
      %5422 = vset.pattern.permute.xlu0 0
      %5423 = vperm.xlu0 %5422, %v3833
      %v5424 = vpop.permute.xlu0 %5423
      %5427 = vset.pattern.permute.xlu0 0
      %5428 = vperm.xlu0 %5427, %v3834
      %v5429 = vpop.permute.xlu0 %5428
      %5432 = vset.pattern.permute.xlu0 0
      %5433 = vperm.xlu0 %5432, %v3835
      %v5434 = vpop.permute.xlu0 %5433
      %5437 = vset.pattern.permute.xlu0 0
      %5438 = vperm.xlu0 %5437, %v3836
      %v5439 = vpop.permute.xlu0 %5438
      %5442 = vset.pattern.permute.xlu0 0
      %5443 = vperm.xlu0 %5442, %v3837
      %v5444 = vpop.permute.xlu0 %5443
      %5447 = vset.pattern.permute.xlu0 0
      %5448 = vperm.xlu0 %5447, %v3838
      %v5449 = vpop.permute.xlu0 %5448
      %5452 = vset.pattern.permute.xlu0 0
      %5453 = vperm.xlu0 %5452, %v3839
      %v5454 = vpop.permute.xlu0 %5453
      %5457 = vset.pattern.permute.xlu0 0
      %5458 = vperm.xlu0 %5457, %v3840
      %v5459 = vpop.permute.xlu0 %5458
      %5462 = vset.pattern.permute.xlu0 0
      %5463 = vperm.xlu0 %5462, %v3841
      %v5464 = vpop.permute.xlu0 %5463
      %5467 = vset.pattern.permute.xlu0 0
      %5468 = vperm.xlu0 %5467, %v3842
      %v5469 = vpop.permute.xlu0 %5468
      %5472 = vset.pattern.permute.xlu0 0
      %5473 = vperm.xlu0 %5472, %v3843
      %v5474 = vpop.permute.xlu0 %5473
      %5477 = vset.pattern.permute.xlu0 0
      %5478 = vperm.xlu0 %5477, %v3844
      %v5479 = vpop.permute.xlu0 %5478
      %5482 = vset.pattern.permute.xlu0 0
      %5483 = vperm.xlu0 %5482, %v3845
      %v5484 = vpop.permute.xlu0 %5483
      %5487 = vset.pattern.permute.xlu0 0
      %5488 = vperm.xlu0 %5487, %v3846
      %v5489 = vpop.permute.xlu0 %5488
      %5492 = vset.pattern.permute.xlu0 0
      %5493 = vperm.xlu0 %5492, %v3847
      %v5494 = vpop.permute.xlu0 %5493
      %5497 = vset.pattern.permute.xlu0 0
      %5498 = vperm.xlu0 %5497, %v3848
      %v5499 = vpop.permute.xlu0 %5498
      %5502 = vset.pattern.permute.xlu0 0
      %5503 = vperm.xlu0 %5502, %v3849
      %v5504 = vpop.permute.xlu0 %5503
      %5507 = vset.pattern.permute.xlu0 0
      %5508 = vperm.xlu0 %5507, %v3850
      %v5509 = vpop.permute.xlu0 %5508
      %5512 = vset.pattern.permute.xlu0 0
      %5513 = vperm.xlu0 %5512, %v3851
      %v5514 = vpop.permute.xlu0 %5513
      %v5516 = vadd.f32 %v4748, %v4879
      %v5517 = vadd.f32 %v4749, %v4884
      %v5518 = vadd.f32 %v4750, %v4889
      %v5519 = vadd.f32 %v4751, %v4894
      %v5520 = vadd.f32 %v4752, %v4899
      %v5521 = vadd.f32 %v4753, %v4904
      %v5522 = vadd.f32 %v4754, %v4909
      %v5523 = vadd.f32 %v4755, %v4914
      %v5524 = vadd.f32 %v4756, %v4919
      %v5525 = vadd.f32 %v4757, %v4924
      %v5526 = vadd.f32 %v4758, %v4929
      %v5527 = vadd.f32 %v4759, %v4934
      %v5528 = vadd.f32 %v4760, %v4939
      %v5529 = vadd.f32 %v4761, %v4944
      %v5530 = vadd.f32 %v4762, %v4949
      %v5531 = vadd.f32 %v4763, %v4954
      %v5532 = vadd.f32 %v4764, %v4959
      %v5533 = vadd.f32 %v4765, %v4964
      %v5534 = vadd.f32 %v4766, %v4969
      %v5535 = vadd.f32 %v4767, %v4974
      %v5536 = vadd.f32 %v4768, %v4979
      %v5537 = vadd.f32 %v4769, %v4984
      %v5538 = vadd.f32 %v4770, %v4989
      %v5539 = vadd.f32 %v4771, %v4994
      %v5540 = vadd.f32 %v4772, %v4999
      %v5541 = vadd.f32 %v4773, %v5004
      %v5542 = vadd.f32 %v4774, %v5009
      %v5543 = vadd.f32 %v4775, %v5014
      %v5544 = vadd.f32 %v4776, %v5019
      %v5545 = vadd.f32 %v4777, %v5024
      %v5546 = vadd.f32 %v4778, %v5029
      %v5547 = vadd.f32 %v4779, %v5034
      %v5548 = vadd.f32 %v4780, %v5039
      %v5549 = vadd.f32 %v4781, %v5044
      %v5550 = vadd.f32 %v4782, %v5049
      %v5551 = vadd.f32 %v4783, %v5054
      %v5552 = vadd.f32 %v4784, %v5059
      %v5553 = vadd.f32 %v4785, %v5064
      %v5554 = vadd.f32 %v4786, %v5069
      %v5555 = vadd.f32 %v4787, %v5074
      %v5556 = vadd.f32 %v4788, %v5079
      %v5557 = vadd.f32 %v4789, %v5084
      %v5558 = vadd.f32 %v4790, %v5089
      %v5559 = vadd.f32 %v4791, %v5094
      %v5560 = vadd.f32 %v4792, %v5099
      %v5561 = vadd.f32 %v4793, %v5104
      %v5562 = vadd.f32 %v4794, %v5109
      %v5563 = vadd.f32 %v4795, %v5114
      %v5564 = vadd.f32 %v4796, %v5119
      %v5565 = vadd.f32 %v4797, %v5124
      %v5566 = vadd.f32 %v4798, %v5129
      %v5567 = vadd.f32 %v4799, %v5134
      %v5568 = vadd.f32 %v4800, %v5139
      %v5569 = vadd.f32 %v4801, %v5144
      %v5570 = vadd.f32 %v4802, %v5149
      %v5571 = vadd.f32 %v4803, %v5154
      %v5572 = vadd.f32 %v4804, %v5159
      %v5573 = vadd.f32 %v4805, %v5164
      %v5574 = vadd.f32 %v4806, %v5169
      %v5575 = vadd.f32 %v4807, %v5174
      %v5576 = vadd.f32 %v4808, %v5179
      %v5577 = vadd.f32 %v4809, %v5184
      %v5578 = vadd.f32 %v4810, %v5189
      %v5579 = vadd.f32 %v4811, %v5194
      %v5580 = vadd.f32 %v4812, %v5199
      %v5581 = vadd.f32 %v4813, %v5204
      %v5582 = vadd.f32 %v4814, %v5209
      %v5583 = vadd.f32 %v4815, %v5214
      %v5584 = vadd.f32 %v4816, %v5219
      %v5585 = vadd.f32 %v4817, %v5224
      %v5586 = vadd.f32 %v4818, %v5229
      %v5587 = vadd.f32 %v4819, %v5234
      %v5588 = vadd.f32 %v4820, %v5239
      %v5589 = vadd.f32 %v4821, %v5244
      %v5590 = vadd.f32 %v4822, %v5249
      %v5591 = vadd.f32 %v4823, %v5254
      %v5592 = vadd.f32 %v4824, %v5259
      %v5593 = vadd.f32 %v4825, %v5264
      %v5594 = vadd.f32 %v4826, %v5269
      %v5595 = vadd.f32 %v4827, %v5274
      %v5596 = vadd.f32 %v4828, %v5279
      %v5597 = vadd.f32 %v4829, %v5284
      %v5598 = vadd.f32 %v4830, %v5289
      %v5599 = vadd.f32 %v4831, %v5294
      %v5600 = vadd.f32 %v4832, %v5299
      %v5601 = vadd.f32 %v4833, %v5304
      %v5602 = vadd.f32 %v4834, %v5309
      %v5603 = vadd.f32 %v4835, %v5314
      %v5604 = vadd.f32 %v4836, %v5319
      %v5605 = vadd.f32 %v4837, %v5324
      %v5606 = vadd.f32 %v4838, %v5329
      %v5607 = vadd.f32 %v4839, %v5334
      %v5608 = vadd.f32 %v4840, %v5339
      %v5609 = vadd.f32 %v4841, %v5344
      %v5610 = vadd.f32 %v4842, %v5349
      %v5611 = vadd.f32 %v4843, %v5354
      %v5612 = vadd.f32 %v4844, %v5359
      %v5613 = vadd.f32 %v4845, %v5364
      %v5614 = vadd.f32 %v4846, %v5369
      %v5615 = vadd.f32 %v4847, %v5374
      %v5616 = vadd.f32 %v4848, %v5379
      %v5617 = vadd.f32 %v4849, %v5384
      %v5618 = vadd.f32 %v4850, %v5389
      %v5619 = vadd.f32 %v4851, %v5394
      %v5620 = vadd.f32 %v4852, %v5399
      %v5621 = vadd.f32 %v4853, %v5404
      %v5622 = vadd.f32 %v4854, %v5409
      %v5623 = vadd.f32 %v4855, %v5414
      %v5624 = vadd.f32 %v4856, %v5419
      %v5625 = vadd.f32 %v4857, %v5424
      %v5626 = vadd.f32 %v4858, %v5429
      %v5627 = vadd.f32 %v4859, %v5434
      %v5628 = vadd.f32 %v4860, %v5439
      %v5629 = vadd.f32 %v4861, %v5444
      %v5630 = vadd.f32 %v4862, %v5449
      %v5631 = vadd.f32 %v4863, %v5454
      %v5632 = vadd.f32 %v4864, %v5459
      %v5633 = vadd.f32 %v4865, %v5464
      %v5634 = vadd.f32 %v4866, %v5469
      %v5635 = vadd.f32 %v4867, %v5474
      %v5636 = vadd.f32 %v4868, %v5479
      %v5637 = vadd.f32 %v4869, %v5484
      %v5638 = vadd.f32 %v4870, %v5489
      %v5639 = vadd.f32 %v4871, %v5494
      %v5640 = vadd.f32 %v4872, %v5499
      %v5641 = vadd.f32 %v4873, %v5504
      %v5642 = vadd.f32 %v4874, %v5509
      %v5643 = vadd.f32 %v4875, %v5514
      %5644 = vst.msk [vmem:[%s265] sm:$0xff] %vm395, %v5516
      %5645 = vst.msk [vmem:[%s265 + $0x8] sm:$0xff] %vm395, %v5517
      %5646 = vst.msk [vmem:[%s265 + $0x10] sm:$0xff] %vm395, %v5518
      %5647 = vst.msk [vmem:[%s265 + $0x18] sm:$0xff] %vm395, %v5519
      %5648 = vst.msk [vmem:[%s265 + $0x20] sm:$0xff] %vm395, %v5520
      %5649 = vst.msk [vmem:[%s265 + $0x28] sm:$0xff] %vm395, %v5521
      %5650 = vst.msk [vmem:[%s265 + $0x30] sm:$0xff] %vm395, %v5522
      %5651 = vst.msk [vmem:[%s265 + $0x38] sm:$0xff] %vm395, %v5523
      %5652 = vst.msk [vmem:[%s265 + $0x40] sm:$0xff] %vm395, %v5524
      %5653 = vst.msk [vmem:[%s265 + $0x48] sm:$0xff] %vm395, %v5525
      %5654 = vst.msk [vmem:[%s265 + $0x50] sm:$0xff] %vm395, %v5526
      %5655 = vst.msk [vmem:[%s265 + $0x58] sm:$0xff] %vm395, %v5527
      %5656 = vst.msk [vmem:[%s265 + $0x60] sm:$0xff] %vm395, %v5528
      %5657 = vst.msk [vmem:[%s265 + $0x68] sm:$0xff] %vm395, %v5529
      %5658 = vst.msk [vmem:[%s265 + $0x70] sm:$0xff] %vm395, %v5530
      %5659 = vst.msk [vmem:[%s265 + $0x78] sm:$0xff] %vm395, %v5531
      %5660 = vst.msk [vmem:[%s265 + $0x80] sm:$0xff] %vm395, %v5532
      %5661 = vst.msk [vmem:[%s265 + $0x88] sm:$0xff] %vm395, %v5533
      %5662 = vst.msk [vmem:[%s265 + $0x90] sm:$0xff] %vm395, %v5534
      %5663 = vst.msk [vmem:[%s265 + $0x98] sm:$0xff] %vm395, %v5535
      %5664 = vst.msk [vmem:[%s265 + $0xa0] sm:$0xff] %vm395, %v5536
      %5665 = vst.msk [vmem:[%s265 + $0xa8] sm:$0xff] %vm395, %v5537
      %5666 = vst.msk [vmem:[%s265 + $0xb0] sm:$0xff] %vm395, %v5538
      %5667 = vst.msk [vmem:[%s265 + $0xb8] sm:$0xff] %vm395, %v5539
      %5668 = vst.msk [vmem:[%s265 + $0xc0] sm:$0xff] %vm395, %v5540
      %5669 = vst.msk [vmem:[%s265 + $0xc8] sm:$0xff] %vm395, %v5541
      %5670 = vst.msk [vmem:[%s265 + $0xd0] sm:$0xff] %vm395, %v5542
      %5671 = vst.msk [vmem:[%s265 + $0xd8] sm:$0xff] %vm395, %v5543
      %5672 = vst.msk [vmem:[%s265 + $0xe0] sm:$0xff] %vm395, %v5544
      %5673 = vst.msk [vmem:[%s265 + $0xe8] sm:$0xff] %vm395, %v5545
      %5674 = vst.msk [vmem:[%s265 + $0xf0] sm:$0xff] %vm395, %v5546
      %5675 = vst.msk [vmem:[%s265 + $0xf8] sm:$0xff] %vm395, %v5547
      %5676 = vst.msk [vmem:[%s265 + $0x100] sm:$0xff] %vm395, %v5548
      %5677 = vst.msk [vmem:[%s265 + $0x108] sm:$0xff] %vm395, %v5549
      %5678 = vst.msk [vmem:[%s265 + $0x110] sm:$0xff] %vm395, %v5550
      %5679 = vst.msk [vmem:[%s265 + $0x118] sm:$0xff] %vm395, %v5551
      %5680 = vst.msk [vmem:[%s265 + $0x120] sm:$0xff] %vm395, %v5552
      %5681 = vst.msk [vmem:[%s265 + $0x128] sm:$0xff] %vm395, %v5553
      %5682 = vst.msk [vmem:[%s265 + $0x130] sm:$0xff] %vm395, %v5554
      %5683 = vst.msk [vmem:[%s265 + $0x138] sm:$0xff] %vm395, %v5555
      %5684 = vst.msk [vmem:[%s265 + $0x140] sm:$0xff] %vm395, %v5556
      %5685 = vst.msk [vmem:[%s265 + $0x148] sm:$0xff] %vm395, %v5557
      %5686 = vst.msk [vmem:[%s265 + $0x150] sm:$0xff] %vm395, %v5558
      %5687 = vst.msk [vmem:[%s265 + $0x158] sm:$0xff] %vm395, %v5559
      %5688 = vst.msk [vmem:[%s265 + $0x160] sm:$0xff] %vm395, %v5560
      %5689 = vst.msk [vmem:[%s265 + $0x168] sm:$0xff] %vm395, %v5561
      %5690 = vst.msk [vmem:[%s265 + $0x170] sm:$0xff] %vm395, %v5562
      %5691 = vst.msk [vmem:[%s265 + $0x178] sm:$0xff] %vm395, %v5563
      %5692 = vst.msk [vmem:[%s265 + $0x180] sm:$0xff] %vm395, %v5564
      %5693 = vst.msk [vmem:[%s265 + $0x188] sm:$0xff] %vm395, %v5565
      %5694 = vst.msk [vmem:[%s265 + $0x190] sm:$0xff] %vm395, %v5566
      %5695 = vst.msk [vmem:[%s265 + $0x198] sm:$0xff] %vm395, %v5567
      %5696 = vst.msk [vmem:[%s265 + $0x1a0] sm:$0xff] %vm395, %v5568
      %5697 = vst.msk [vmem:[%s265 + $0x1a8] sm:$0xff] %vm395, %v5569
      %5698 = vst.msk [vmem:[%s265 + $0x1b0] sm:$0xff] %vm395, %v5570
      %5699 = vst.msk [vmem:[%s265 + $0x1b8] sm:$0xff] %vm395, %v5571
      %5700 = vst.msk [vmem:[%s265 + $0x1c0] sm:$0xff] %vm395, %v5572
      %5701 = vst.msk [vmem:[%s265 + $0x1c8] sm:$0xff] %vm395, %v5573
      %5702 = vst.msk [vmem:[%s265 + $0x1d0] sm:$0xff] %vm395, %v5574
      %5703 = vst.msk [vmem:[%s265 + $0x1d8] sm:$0xff] %vm395, %v5575
      %5704 = vst.msk [vmem:[%s265 + $0x1e0] sm:$0xff] %vm395, %v5576
      %5705 = vst.msk [vmem:[%s265 + $0x1e8] sm:$0xff] %vm395, %v5577
      %5706 = vst.msk [vmem:[%s265 + $0x1f0] sm:$0xff] %vm395, %v5578
      %5707 = vst.msk [vmem:[%s265 + $0x1f8] sm:$0xff] %vm395, %v5579
      %5708 = vst.msk [vmem:[%s265 + $0x200] sm:$0xff] %vm395, %v5580
      %5709 = vst.msk [vmem:[%s265 + $0x208] sm:$0xff] %vm395, %v5581
      %5710 = vst.msk [vmem:[%s265 + $0x210] sm:$0xff] %vm395, %v5582
      %5711 = vst.msk [vmem:[%s265 + $0x218] sm:$0xff] %vm395, %v5583
      %5712 = vst.msk [vmem:[%s265 + $0x220] sm:$0xff] %vm395, %v5584
      %5713 = vst.msk [vmem:[%s265 + $0x228] sm:$0xff] %vm395, %v5585
      %5714 = vst.msk [vmem:[%s265 + $0x230] sm:$0xff] %vm395, %v5586
      %5715 = vst.msk [vmem:[%s265 + $0x238] sm:$0xff] %vm395, %v5587
      %5716 = vst.msk [vmem:[%s265 + $0x240] sm:$0xff] %vm395, %v5588
      %5717 = vst.msk [vmem:[%s265 + $0x248] sm:$0xff] %vm395, %v5589
      %5718 = vst.msk [vmem:[%s265 + $0x250] sm:$0xff] %vm395, %v5590
      %5719 = vst.msk [vmem:[%s265 + $0x258] sm:$0xff] %vm395, %v5591
      %5720 = vst.msk [vmem:[%s265 + $0x260] sm:$0xff] %vm395, %v5592
      %5721 = vst.msk [vmem:[%s265 + $0x268] sm:$0xff] %vm395, %v5593
      %5722 = vst.msk [vmem:[%s265 + $0x270] sm:$0xff] %vm395, %v5594
      %5723 = vst.msk [vmem:[%s265 + $0x278] sm:$0xff] %vm395, %v5595
      %5724 = vst.msk [vmem:[%s265 + $0x280] sm:$0xff] %vm395, %v5596
      %5725 = vst.msk [vmem:[%s265 + $0x288] sm:$0xff] %vm395, %v5597
      %5726 = vst.msk [vmem:[%s265 + $0x290] sm:$0xff] %vm395, %v5598
      %5727 = vst.msk [vmem:[%s265 + $0x298] sm:$0xff] %vm395, %v5599
      %5728 = vst.msk [vmem:[%s265 + $0x2a0] sm:$0xff] %vm395, %v5600
      %5729 = vst.msk [vmem:[%s265 + $0x2a8] sm:$0xff] %vm395, %v5601
      %5730 = vst.msk [vmem:[%s265 + $0x2b0] sm:$0xff] %vm395, %v5602
      %5731 = vst.msk [vmem:[%s265 + $0x2b8] sm:$0xff] %vm395, %v5603
      %5732 = vst.msk [vmem:[%s265 + $0x2c0] sm:$0xff] %vm395, %v5604
      %5733 = vst.msk [vmem:[%s265 + $0x2c8] sm:$0xff] %vm395, %v5605
      %5734 = vst.msk [vmem:[%s265 + $0x2d0] sm:$0xff] %vm395, %v5606
      %5735 = vst.msk [vmem:[%s265 + $0x2d8] sm:$0xff] %vm395, %v5607
      %5736 = vst.msk [vmem:[%s265 + $0x2e0] sm:$0xff] %vm395, %v5608
      %5737 = vst.msk [vmem:[%s265 + $0x2e8] sm:$0xff] %vm395, %v5609
      %5738 = vst.msk [vmem:[%s265 + $0x2f0] sm:$0xff] %vm395, %v5610
      %5739 = vst.msk [vmem:[%s265 + $0x2f8] sm:$0xff] %vm395, %v5611
      %5740 = vst.msk [vmem:[%s265 + $0x300] sm:$0xff] %vm395, %v5612
      %5741 = vst.msk [vmem:[%s265 + $0x308] sm:$0xff] %vm395, %v5613
      %5742 = vst.msk [vmem:[%s265 + $0x310] sm:$0xff] %vm395, %v5614
      %5743 = vst.msk [vmem:[%s265 + $0x318] sm:$0xff] %vm395, %v5615
      %5744 = vst.msk [vmem:[%s265 + $0x320] sm:$0xff] %vm395, %v5616
      %5745 = vst.msk [vmem:[%s265 + $0x328] sm:$0xff] %vm395, %v5617
      %5746 = vst.msk [vmem:[%s265 + $0x330] sm:$0xff] %vm395, %v5618
      %5747 = vst.msk [vmem:[%s265 + $0x338] sm:$0xff] %vm395, %v5619
      %5748 = vst.msk [vmem:[%s265 + $0x340] sm:$0xff] %vm395, %v5620
      %5749 = vst.msk [vmem:[%s265 + $0x348] sm:$0xff] %vm395, %v5621
      %5750 = vst.msk [vmem:[%s265 + $0x350] sm:$0xff] %vm395, %v5622
      %5751 = vst.msk [vmem:[%s265 + $0x358] sm:$0xff] %vm395, %v5623
      %5752 = vst.msk [vmem:[%s265 + $0x360] sm:$0xff] %vm395, %v5624
      %5753 = vst.msk [vmem:[%s265 + $0x368] sm:$0xff] %vm395, %v5625
      %5754 = vst.msk [vmem:[%s265 + $0x370] sm:$0xff] %vm395, %v5626
      %5755 = vst.msk [vmem:[%s265 + $0x378] sm:$0xff] %vm395, %v5627
      %5756 = vst.msk [vmem:[%s265 + $0x380] sm:$0xff] %vm395, %v5628
      %5757 = vst.msk [vmem:[%s265 + $0x388] sm:$0xff] %vm395, %v5629
      %5758 = vst.msk [vmem:[%s265 + $0x390] sm:$0xff] %vm395, %v5630
      %5759 = vst.msk [vmem:[%s265 + $0x398] sm:$0xff] %vm395, %v5631
      %5760 = vst.msk [vmem:[%s265 + $0x3a0] sm:$0xff] %vm395, %v5632
      %5761 = vst.msk [vmem:[%s265 + $0x3a8] sm:$0xff] %vm395, %v5633
      %5762 = vst.msk [vmem:[%s265 + $0x3b0] sm:$0xff] %vm395, %v5634
      %5763 = vst.msk [vmem:[%s265 + $0x3b8] sm:$0xff] %vm395, %v5635
      %5764 = vst.msk [vmem:[%s265 + $0x3c0] sm:$0xff] %vm395, %v5636
      %5765 = vst.msk [vmem:[%s265 + $0x3c8] sm:$0xff] %vm395, %v5637
      %5766 = vst.msk [vmem:[%s265 + $0x3d0] sm:$0xff] %vm395, %v5638
      %5767 = vst.msk [vmem:[%s265 + $0x3d8] sm:$0xff] %vm395, %v5639
      %5768 = vst.msk [vmem:[%s265 + $0x3e0] sm:$0xff] %vm395, %v5640
      %5769 = vst.msk [vmem:[%s265 + $0x3e8] sm:$0xff] %vm395, %v5641
      %5770 = vst.msk [vmem:[%s265 + $0x3f0] sm:$0xff] %vm395, %v5642
      %5771 = vst.msk [vmem:[%s265 + $0x3f8] sm:$0xff] %vm395, %v5643
      %s5772 = smul.u32 128, %s15
      %p5773 = scmp.lt.s32.totalorder %s5772, 255
      %s5774 = scalar_select %p5773, %s5772, 255
      %s5775 = smul.addr %s5774, 8
      %s5776 = scalar_lea.vmem %s4, %s5775
      // Predicated region
      $region37: #{tpu_custom_call.1} parent=35 // pred_check
        %p5777 = pneg %p137
      $region38: #{tpu_custom_call.1} parent=35 // pred_check_branch
        %5779 = sbr.rel (%p5777) target = $region40
      $region39: #{tpu_custom_call.1} parent=35 // pred_region
        %s5780 = smul.u32 128, %s15
      $region40: #{tpu_custom_call.1} parent=35 // pred_fallthru
        _
    $region36: #{tpu_custom_call.1} parent=5 // pred_fallthru
      _
    %p5781 = scmp.le.s32.totalorder 2, %s10
    // Predicated region
    $region41: #{tpu_custom_call.1} parent=5 // pred_check
      %p5782 = pneg %p5781
    $region42: #{tpu_custom_call.1} parent=5 // pred_check_branch
      %5784 = sbr.rel (%p5782) target = $region44
    $region43: #{tpu_custom_call.1} parent=5 // pred_region
      %s5785 = ssub.s32 %s10, 2
      // Predicated region
      $region45: #{tpu_custom_call.1} parent=43 // pred_check
        %p5786 = pneg %p143
      $region46: #{tpu_custom_call.1} parent=43 // pred_check_branch
        %5788 = sbr.rel (%p5786) target = $region48
      $region47: #{tpu_custom_call.1} parent=43 // pred_region
        %s5789 = smul.u32 128, %s16
        %p5790 = scmp.lt.s32.totalorder %s5789, 255
        %s5791 = scalar_select %p5790, %s5789, 255
        %s5792 = smul.addr %s5791, 8
        %s5793 = scalar_lea.vmem %s4, %s5792
      $region48: #{tpu_custom_call.1} parent=43 // pred_fallthru
        _
    $region44: #{tpu_custom_call.1} parent=5 // pred_fallthru
      _
  $region6: #{tpu_custom_call.1} parent=0 // loop_footer
    %s14 = sadd.s32 1, %s10
  $region7: #{tpu_custom_call.1} parent=0 // loop_footer_branch
    %9 = sbr.rel target = $region3
  $region8: #{tpu_custom_call.1} parent=0 // loop_exit
    _

</llo_original>
